<compile_context>
chip_gen: v7x
topology: tpu7x:2x2x1
jax: 0.10.0
libtpu: 0.0.40
codegen_flags: <defaults>
</compile_context>

<pallas_src>
import functools

import jax
import jax.numpy as jnp
from jax import lax
from jax.experimental import pallas as pl
from jax.experimental.pallas import tpu as pltpu

# ----------------------------- model config (small stand-ins) ---------------
VOCAB = 512          # stand-in for input_size == num_classes == 598984
EMBED = 128          # embedding_dim
HIDDEN = 128         # stand-in for hidden_size=300 (real: pad PER GATE to 384)
NUM_CLASSES = VOCAB
BATCH = 2
SEQ = 8
SUBLANE = 8          # f32 sublane count; batch padded to a multiple of this.
                     # (For larger serving batches, pad toward the MXU height
                     #  instead: 128 on v5e, 256 on v6e/v7x - extra rows are
                     #  nearly free in the latency-bound recurrence.)
FC_TILE_N = 256      # class tile for the streamed FC.  Real sizes: ~8-16K on
                     # v7x (64 MiB VMEM), ~32K on v5e/v6e (128 MiB VMEM).


# ----------------------------- kernel 1: embeddings -> h2_last --------------
def _lstm_kernel(x2d_ref,            # (T*Bp, E)   bf16  time-major embeddings
                 wih1_ref,           # (E, 4H)     bf16  layer-0 input weights
                 whh1_ref,           # (H, 4H)     bf16  layer-0 recurrent weights
                 b1_ref,             # (1, 4H)     f32   b_ih + b_hh (layer 0)
                 w2i_ref,            # (H, 4H)     bf16  layer-1 input weights
                 w2h_ref,            # (H, 4H)     bf16  layer-1 recurrent weights
                 b2_ref,             # (1, 4H)     f32   b_ih + b_hh (layer 1)
                 h2_ref,             # (Bp, H)     bf16  out: last-step top hidden
                 xg_ref,             # (T*Bp, 4H)  f32   scratch: layer-0 x-proj
                 *, seq_len, batch_p, hidden):
    T, Bp, H = seq_len, batch_p, hidden

    # Hoisted, time-independent layer-0 input projection: one batched matmul
    # replaces T tiny matmuls and removes one matmul from the serial chain.
    xg_ref[...] = (
        jnp.dot(x2d_ref[...], wih1_ref[...], preferred_element_type=jnp.float32)
        + b1_ref[...])

    # Hoist the bias broadcast out of the (unrolled) time loop.
    b2 = jnp.broadcast_to(b2_ref[...], (Bp, 4 * H))

    def gates_to_hc(gates, c_prev):
        # PyTorch nn.LSTM gate order: i, f, g, o  (elementwise math in f32).
        # TODO(synk): for hidden_size=300, pad each gate block independently to
        # 384 (4H_pad=1536) with zeroed weight rows/cols + biases so these
        # slices stay lane-aligned and padded h/c columns remain exactly zero.
        i = jax.nn.sigmoid(gates[:, 0 * H:1 * H])
        f = jax.nn.sigmoid(gates[:, 1 * H:2 * H])
        g = jnp.tanh(gates[:, 2 * H:3 * H])
        o = jax.nn.sigmoid(gates[:, 3 * H:4 * H])
        c_new = f * c_prev + i * g
        h_new = o * jnp.tanh(c_new)
        return h_new, c_new

    def step(t, carry):
        h1, c1, h2, c2 = carry
        off = pl.multiple_of(t * Bp, SUBLANE)

        # layer 0: input projection precomputed -> only the recurrent matmul.
        g1 = xg_ref[pl.ds(off, Bp), :] + jnp.dot(
            h1.astype(jnp.bfloat16), whh1_ref[...],
            preferred_element_type=jnp.float32)
        h1n, c1n = gates_to_hc(g1, c1)

        # layer 1: two K=H dots (the per-step concatenate+cast relayout was
        # removed from the critical path).
        # TODO(synk): for larger batches on v6e/v7x, write the two bf16 halves
        # into a persistent (Bp, 2H) VMEM scratch to keep a fused K=2H dot.
        g2 = (jnp.dot(h1n.astype(jnp.bfloat16), w2i_ref[...],
                      preferred_element_type=jnp.float32)
              + jnp.dot(h2.astype(jnp.bfloat16), w2h_ref[...],
                        preferred_element_type=jnp.float32)
              + b2)
        h2n, c2n = gates_to_hc(g2, c2)
        return (h1n, c1n, h2n, c2n)

    z = jnp.zeros((Bp, H), jnp.float32)
    # Cap the unroll (real model: H padded to 384 + long T would blow the
    # 64-vreg file under a full unroll).
    _, _, h2_last, _ = lax.fori_loop(0, T, step, (z, z, z, z),
                                     unroll=min(T, 8))

    h2_ref[...] = h2_last.astype(h2_ref.dtype)


# ----------------------------- kernel 2: class-tiled FC ---------------------
def _fc_kernel(h2_ref,               # (Bp, H)  bf16  last-step top hidden
               wfc_ref,              # (H, TN)  bf16  fc weight tile
               bfc_ref,              # (1, TN)  f32   fc bias tile
               out_ref):             # (Bp, TN) bf16  logits tile
    out_ref[...] = (
        jnp.dot(h2_ref[...], wfc_ref[...], preferred_element_type=jnp.float32)
        + bfc_ref[...]).astype(out_ref.dtype)


# ----------------------------- wrapper ---------------------------------------
def rnn_forward(x_ids, params):
    """Forward pass matching the PyTorch RNN module (zero initial h/c)."""
    B, T = x_ids.shape
    E, H, C = EMBED, HIDDEN, NUM_CLASSES
    Bp = ((B + SUBLANE - 1) // SUBLANE) * SUBLANE   # pad batch

    # Gather directly time-major from the bf16 table (no (B,T,E) transpose),
    # pad batch, flatten to a lane-dense 2-D slab.
    embeds = params["emb_bf16"][x_ids.T]                         # (T, B, E)
    embeds = jnp.pad(embeds, ((0, 0), (0, Bp - B), (0, 0)))      # (T, Bp, E)
    x2d = embeds.reshape(T * Bp, E)                              # (T*Bp, E)

    vmem = lambda: pl.BlockSpec(memory_space=pltpu.MemorySpace.VMEM)

    # ---- stage 1: recurrence (single invocation, everything in VMEM) -------
    h2_last = pl.pallas_call(
        functools.partial(_lstm_kernel, seq_len=T, batch_p=Bp, hidden=H),
        out_shape=jax.ShapeDtypeStruct((Bp, H), jnp.bfloat16),
        in_specs=[vmem() for _ in range(7)],
        out_specs=vmem(),
        scratch_shapes=[pltpu.VMEM((T * Bp, 4 * H), jnp.float32)],
    )(x2d,
      params["wih1_t"], params["whh1_t"], params["b1"],
      params["w2i_t"], params["w2h_t"], params["b2"])

    # ---- stage 2: class-tiled FC (streams wfc tile-by-tile from HBM) -------
    TN = min(FC_TILE_N, C)
    assert C % TN == 0  # TODO(synk): real C=598984 -> pad C to a TN multiple.
    cost = pl.CostEstimate(
        flops=2 * Bp * H * C,
        transcendentals=0,
        bytes_accessed=H * C * 2 + Bp * C * 2 + C * 4 + Bp * H * 2)

    out = pl.pallas_call(
        _fc_kernel,
        out_shape=jax.ShapeDtypeStruct((Bp, C), jnp.bfloat16),
        grid=(C // TN,),
        in_specs=[pl.BlockSpec((Bp, H), lambda j: (0, 0)),
                  pl.BlockSpec((H, TN), lambda j: (0, j)),
                  pl.BlockSpec((1, TN), lambda j: (0, j))],
        out_specs=pl.BlockSpec((Bp, TN), lambda j: (0, j)),
        compiler_params=pltpu.CompilerParams(
            # "parallel" lets v7x shard class tiles across its 2 TensorCores;
            # correct because h2_last is an input, not a pid==0-guarded scratch.
            dimension_semantics=("parallel",),
            # Safe on all generations at these sizes; real sizes: raise to
            # ~56-64 MiB on v5e/v6e (TN~32K), keep ~24-32 MiB on v7x (TN~8-16K).
            vmem_limit_bytes=32 * 1024 * 1024),
        cost_estimate=cost,
    )(h2_last, params["wfc_t"], params["bfc"])

    return out[:B]   # drop batch padding; bf16 logits


# ----------------------------- params & reference ---------------------------
def make_params(key):
    """Deterministic synthetic parameters with the module's (small) shapes."""
    ks = jax.random.split(key, 11)
    s = 0.05
    H, E, C, V = HIDDEN, EMBED, NUM_CLASSES, VOCAB
    # PyTorch shapes: W_ih_l0 (4H,E), W_hh_l* (4H,H), b_* (4H,), fc.weight (C,H)
    wih1 = jax.random.normal(ks[0], (4 * H, E), jnp.float32) * s
    whh1 = jax.random.normal(ks[1], (4 * H, H), jnp.float32) * s
    bih1 = jax.random.normal(ks[2], (4 * H,), jnp.float32) * s
    bhh1 = jax.random.normal(ks[3], (4 * H,), jnp.float32) * s
    wih2 = jax.random.normal(ks[4], (4 * H, H), jnp.float32) * s
    whh2 = jax.random.normal(ks[5], (4 * H, H), jnp.float32) * s
    bih2 = jax.random.normal(ks[6], (4 * H,), jnp.float32) * s
    bhh2 = jax.random.normal(ks[7], (4 * H,), jnp.float32) * s
    wfc = jax.random.normal(ks[8], (C, H), jnp.float32) * s
    bfc = jax.random.normal(ks[9], (C,), jnp.float32) * s
    emb = jax.random.normal(ks[10], (V, E), jnp.float32)
    return {
        "emb": emb,
        "emb_bf16": emb.astype(jnp.bfloat16),
        # MXU operands stored in bf16 (f32 accumulation inside the kernels);
        # biases stay f32 and are folded (b_ih + b_hh) at prep time.
        # TODO(synk): on v7x the FC weight could be streamed as fp8 (int8 on
        # v5e/v6e) with a per-tile scale to halve the dominant HBM stream.
        "wih1_t": wih1.T.astype(jnp.bfloat16),                   # (E, 4H)
        "whh1_t": whh1.T.astype(jnp.bfloat16),                   # (H, 4H)
        "b1": (bih1 + bhh1)[None, :],                            # (1, 4H)
        "w2i_t": wih2.T.astype(jnp.bfloat16),                    # (H, 4H)
        "w2h_t": whh2.T.astype(jnp.bfloat16),                    # (H, 4H)
        "b2": (bih2 + bhh2)[None, :],                            # (1, 4H)
        "wfc_t": wfc.T.astype(jnp.bfloat16),                     # (H, C)
        "bfc": bfc[None, :],                                     # (1, C)
        # keep f32 originals for the pure-JAX reference
        "_raw": (wih1, whh1, bih1, bhh1, wih2, whh2, bih2, bhh2, wfc, bfc),
    }


def rnn_reference(x_ids, params):
    """Pure-JAX f32 reference (lax.scan) with PyTorch LSTM semantics."""
    wih1, whh1, bih1, bhh1, wih2, whh2, bih2, bhh2, wfc, bfc = params["_raw"]
    emb = params["emb"]
    embeds = emb[x_ids]                       # (B, T, E)
    B = embeds.shape[0]
    H = HIDDEN

    def cell(x_in, h, c, wih, whh, bih, bhh):
        gates = x_in @ wih.T + bih + h @ whh.T + bhh
        i = jax.nn.sigmoid(gates[:, 0 * H:1 * H])
        f = jax.nn.sigmoid(gates[:, 1 * H:2 * H])
        g = jnp.tanh(gates[:, 2 * H:3 * H])
        o = jax.nn.sigmoid(gates[:, 3 * H:4 * H])
        c_new = f * c + i * g
        h_new = o * jnp.tanh(c_new)
        return h_new, c_new

    def step(carry, x_t):
        h1, c1, h2, c2 = carry
        h1, c1 = cell(x_t, h1, c1, wih1, whh1, bih1, bhh1)
        h2, c2 = cell(h1, h2, c2, wih2, whh2, bih2, bhh2)
        return (h1, c1, h2, c2), None

    zeros = jnp.zeros((B, H), jnp.float32)
    (h1, c1, h2, c2), _ = jax.lax.scan(
        step, (zeros, zeros, zeros, zeros), jnp.transpose(embeds, (1, 0, 2)))
    return h2 @ wfc.T + bfc


if __name__ == "__main__":
    key = jax.random.PRNGKey(0)
    pkey, xkey = jax.random.split(key)
    params = make_params(pkey)
    x = jax.random.randint(xkey, (BATCH, SEQ), 0, VOCAB, dtype=jnp.int32)

    out = rnn_forward(x, params)
    out = jax.block_until_ready(out)
    assert out.shape == (BATCH, NUM_CLASSES), out.shape

    ref = jax.block_until_ready(rnn_reference(x, params))
    err = float(jnp.max(jnp.abs(out.astype(jnp.float32) - ref)))
    assert jnp.allclose(out.astype(jnp.float32), ref, rtol=2e-2, atol=2e-2), err

    print("KERNEL_OK")
</pallas_src>

<mosaic_0001>
module attributes {stable_mosaic.version = 11 : i64} {
  func.func @_lstm_kernel(%arg0: memref<64x128xbf16, #tpu.memory_space<vmem>>, %arg1: memref<128x512xbf16, #tpu.memory_space<vmem>>, %arg2: memref<128x512xbf16, #tpu.memory_space<vmem>>, %arg3: memref<1x512xf32, #tpu.memory_space<vmem>>, %arg4: memref<128x512xbf16, #tpu.memory_space<vmem>>, %arg5: memref<128x512xbf16, #tpu.memory_space<vmem>>, %arg6: memref<1x512xf32, #tpu.memory_space<vmem>>, %arg7: memref<8x128xbf16, #tpu.memory_space<vmem>>, %arg8: memref<64x512xf32, #tpu.memory_space<vmem>>) attributes {dimension_semantics = [], scalar_prefetch = 0 : i64, scratch_operands = 1 : i64, tpu.core_type = #tpu.core_type<tc>} {
    %c0 = arith.constant 0 : index
    %c0_0 = arith.constant 0 : index
    %0 = vector.load %arg0[%c0, %c0_0] : memref<64x128xbf16, #tpu.memory_space<vmem>>, vector<64x128xbf16>
    %c0_1 = arith.constant 0 : index
    %c0_2 = arith.constant 0 : index
    %1 = vector.load %arg1[%c0_1, %c0_2] : memref<128x512xbf16, #tpu.memory_space<vmem>>, vector<128x512xbf16>
    %cst = arith.constant dense<0.000000e+00> : vector<64x512xf32>
    %2 = tpu.matmul %0, %1, %cst {dimension_numbers = #tpu.dot_dimension_numbers<[1], [0], [0], [1], [0, 0, 1, 1], [], []>} : vector<64x128xbf16>, vector<128x512xbf16>, vector<64x512xf32> -> vector<64x512xf32>
    %c0_3 = arith.constant 0 : index
    %c0_4 = arith.constant 0 : index
    %3 = vector.load %arg3[%c0_3, %c0_4] : memref<1x512xf32, #tpu.memory_space<vmem>>, vector<1x512xf32>
    %4 = vector.broadcast %3 : vector<1x512xf32> to vector<64x512xf32>
    %5 = arith.addf %2, %4 : vector<64x512xf32>
    %c0_5 = arith.constant 0 : index
    %c0_6 = arith.constant 0 : index
    %6 = vector.load %arg8[%c0_5, %c0_6] : memref<64x512xf32, #tpu.memory_space<vmem>>, vector<64x512xf32>
    tpu.vector_store %arg8[%c0_5, %c0_6], %5 {strides = array<i32>} : memref<64x512xf32, #tpu.memory_space<vmem>>, vector<64x512xf32>,
    %c0_7 = arith.constant 0 : index
    %c0_8 = arith.constant 0 : index
    %7 = vector.load %arg6[%c0_7, %c0_8] : memref<1x512xf32, #tpu.memory_space<vmem>>, vector<1x512xf32>
    %8 = vector.shape_cast %7 : vector<1x512xf32> to vector<1x512xf32>
    %9 = vector.broadcast %8 : vector<1x512xf32> to vector<8x512xf32>
    %cst_9 = arith.constant 0.000000e+00 : f32
    %10 = vector.broadcast %cst_9 : f32 to vector<8x128xf32>
    %c0_i32 = arith.constant 0 : i32
    %c8_i32 = arith.constant 8 : i32
    %11 = arith.muli %c0_i32, %c8_i32 : i32
    %12 = tpu.assume_multiple %11, 8 : i32
    %13 = arith.index_cast %12 : i32 to index
    %c0_10 = arith.constant 0 : index
    %14 = vector.load %arg8[%13, %c0_10] : memref<64x512xf32, #tpu.memory_space<vmem>>, vector<8x512xf32>
    %15 = arith.truncf %10 : vector<8x128xf32> to vector<8x128xbf16>
    %c0_11 = arith.constant 0 : index
    %c0_12 = arith.constant 0 : index
    %16 = vector.load %arg2[%c0_11, %c0_12] : memref<128x512xbf16, #tpu.memory_space<vmem>>, vector<128x512xbf16>
    %cst_13 = arith.constant dense<0.000000e+00> : vector<8x512xf32>
    %17 = tpu.matmul %15, %16, %cst_13 {dimension_numbers = #tpu.dot_dimension_numbers<[1], [0], [0], [1], [0, 0, 1, 1], [], []>} : vector<8x128xbf16>, vector<128x512xbf16>, vector<8x512xf32> -> vector<8x512xf32>
    %18 = arith.addf %14, %17 : vector<8x512xf32>
    %19 = vector.extract_strided_slice %18 {offsets = [0, 0], sizes = [8, 128], strides = [1, 1]} : vector<8x512xf32> to vector<8x128xf32>
    %20 = arith.negf %19 : vector<8x128xf32>
    %21 = math.exp %20 : vector<8x128xf32>
    %cst_14 = arith.constant 1.000000e+00 : f32
    %22 = vector.broadcast %cst_14 : f32 to vector<8x128xf32>
    %23 = arith.addf %22, %21 : vector<8x128xf32>
    %24 = arith.divf %22, %23 : vector<8x128xf32>
    %25 = vector.extract_strided_slice %18 {offsets = [0, 128], sizes = [8, 128], strides = [1, 1]} : vector<8x512xf32> to vector<8x128xf32>
    %26 = arith.negf %25 : vector<8x128xf32>
    %27 = math.exp %26 : vector<8x128xf32>
    %cst_15 = arith.constant 1.000000e+00 : f32
    %28 = vector.broadcast %cst_15 : f32 to vector<8x128xf32>
    %29 = arith.addf %28, %27 : vector<8x128xf32>
    %30 = arith.divf %28, %29 : vector<8x128xf32>
    %31 = vector.extract_strided_slice %18 {offsets = [0, 256], sizes = [8, 128], strides = [1, 1]} : vector<8x512xf32> to vector<8x128xf32>
    %32 = math.tanh %31 : vector<8x128xf32>
    %33 = vector.extract_strided_slice %18 {offsets = [0, 384], sizes = [8, 128], strides = [1, 1]} : vector<8x512xf32> to vector<8x128xf32>
    %34 = arith.negf %33 : vector<8x128xf32>
    %35 = math.exp %34 : vector<8x128xf32>
    %cst_16 = arith.constant 1.000000e+00 : f32
    %36 = vector.broadcast %cst_16 : f32 to vector<8x128xf32>
    %37 = arith.addf %36, %35 : vector<8x128xf32>
    %38 = arith.divf %36, %37 : vector<8x128xf32>
    %39 = arith.mulf %30, %10 : vector<8x128xf32>
    %40 = arith.mulf %24, %32 : vector<8x128xf32>
    %41 = arith.addf %39, %40 : vector<8x128xf32>
    %42 = math.tanh %41 : vector<8x128xf32>
    %43 = arith.mulf %38, %42 : vector<8x128xf32>
    %44 = arith.truncf %43 : vector<8x128xf32> to vector<8x128xbf16>
    %c0_17 = arith.constant 0 : index
    %c0_18 = arith.constant 0 : index
    %45 = vector.load %arg4[%c0_17, %c0_18] : memref<128x512xbf16, #tpu.memory_space<vmem>>, vector<128x512xbf16>
    %cst_19 = arith.constant dense<0.000000e+00> : vector<8x512xf32>
    %46 = tpu.matmul %44, %45, %cst_19 {dimension_numbers = #tpu.dot_dimension_numbers<[1], [0], [0], [1], [0, 0, 1, 1], [], []>} : vector<8x128xbf16>, vector<128x512xbf16>, vector<8x512xf32> -> vector<8x512xf32>
    %47 = arith.truncf %10 : vector<8x128xf32> to vector<8x128xbf16>
    %c0_20 = arith.constant 0 : index
    %c0_21 = arith.constant 0 : index
    %48 = vector.load %arg5[%c0_20, %c0_21] : memref<128x512xbf16, #tpu.memory_space<vmem>>, vector<128x512xbf16>
    %cst_22 = arith.constant dense<0.000000e+00> : vector<8x512xf32>
    %49 = tpu.matmul %47, %48, %cst_22 {dimension_numbers = #tpu.dot_dimension_numbers<[1], [0], [0], [1], [0, 0, 1, 1], [], []>} : vector<8x128xbf16>, vector<128x512xbf16>, vector<8x512xf32> -> vector<8x512xf32>
    %50 = arith.addf %46, %49 : vector<8x512xf32>
    %51 = arith.addf %50, %9 : vector<8x512xf32>
    %52 = vector.extract_strided_slice %51 {offsets = [0, 0], sizes = [8, 128], strides = [1, 1]} : vector<8x512xf32> to vector<8x128xf32>
    %53 = arith.negf %52 : vector<8x128xf32>
    %54 = math.exp %53 : vector<8x128xf32>
    %cst_23 = arith.constant 1.000000e+00 : f32
    %55 = vector.broadcast %cst_23 : f32 to vector<8x128xf32>
    %56 = arith.addf %55, %54 : vector<8x128xf32>
    %57 = arith.divf %55, %56 : vector<8x128xf32>
    %58 = vector.extract_strided_slice %51 {offsets = [0, 128], sizes = [8, 128], strides = [1, 1]} : vector<8x512xf32> to vector<8x128xf32>
    %59 = arith.negf %58 : vector<8x128xf32>
    %60 = math.exp %59 : vector<8x128xf32>
    %cst_24 = arith.constant 1.000000e+00 : f32
    %61 = vector.broadcast %cst_24 : f32 to vector<8x128xf32>
    %62 = arith.addf %61, %60 : vector<8x128xf32>
    %63 = arith.divf %61, %62 : vector<8x128xf32>
    %64 = vector.extract_strided_slice %51 {offsets = [0, 256], sizes = [8, 128], strides = [1, 1]} : vector<8x512xf32> to vector<8x128xf32>
    %65 = math.tanh %64 : vector<8x128xf32>
    %66 = vector.extract_strided_slice %51 {offsets = [0, 384], sizes = [8, 128], strides = [1, 1]} : vector<8x512xf32> to vector<8x128xf32>
    %67 = arith.negf %66 : vector<8x128xf32>
    %68 = math.exp %67 : vector<8x128xf32>
    %cst_25 = arith.constant 1.000000e+00 : f32
    %69 = vector.broadcast %cst_25 : f32 to vector<8x128xf32>
    %70 = arith.addf %69, %68 : vector<8x128xf32>
    %71 = arith.divf %69, %70 : vector<8x128xf32>
    %72 = arith.mulf %63, %10 : vector<8x128xf32>
    %73 = arith.mulf %57, %65 : vector<8x128xf32>
    %74 = arith.addf %72, %73 : vector<8x128xf32>
    %75 = math.tanh %74 : vector<8x128xf32>
    %76 = arith.mulf %71, %75 : vector<8x128xf32>
    %c1_i32 = arith.constant 1 : i32
    %c8_i32_26 = arith.constant 8 : i32
    %77 = arith.muli %c1_i32, %c8_i32_26 : i32
    %78 = tpu.assume_multiple %77, 8 : i32
    %79 = arith.index_cast %78 : i32 to index
    %c0_27 = arith.constant 0 : index
    %80 = vector.load %arg8[%79, %c0_27] : memref<64x512xf32, #tpu.memory_space<vmem>>, vector<8x512xf32>
    %81 = arith.truncf %43 : vector<8x128xf32> to vector<8x128xbf16>
    %c0_28 = arith.constant 0 : index
    %c0_29 = arith.constant 0 : index
    %82 = vector.load %arg2[%c0_28, %c0_29] : memref<128x512xbf16, #tpu.memory_space<vmem>>, vector<128x512xbf16>
    %cst_30 = arith.constant dense<0.000000e+00> : vector<8x512xf32>
    %83 = tpu.matmul %81, %82, %cst_30 {dimension_numbers = #tpu.dot_dimension_numbers<[1], [0], [0], [1], [0, 0, 1, 1], [], []>} : vector<8x128xbf16>, vector<128x512xbf16>, vector<8x512xf32> -> vector<8x512xf32>
    %84 = arith.addf %80, %83 : vector<8x512xf32>
    %85 = vector.extract_strided_slice %84 {offsets = [0, 0], sizes = [8, 128], strides = [1, 1]} : vector<8x512xf32> to vector<8x128xf32>
    %86 = arith.negf %85 : vector<8x128xf32>
    %87 = math.exp %86 : vector<8x128xf32>
    %cst_31 = arith.constant 1.000000e+00 : f32
    %88 = vector.broadcast %cst_31 : f32 to vector<8x128xf32>
    %89 = arith.addf %88, %87 : vector<8x128xf32>
    %90 = arith.divf %88, %89 : vector<8x128xf32>
    %91 = vector.extract_strided_slice %84 {offsets = [0, 128], sizes = [8, 128], strides = [1, 1]} : vector<8x512xf32> to vector<8x128xf32>
    %92 = arith.negf %91 : vector<8x128xf32>
    %93 = math.exp %92 : vector<8x128xf32>
    %cst_32 = arith.constant 1.000000e+00 : f32
    %94 = vector.broadcast %cst_32 : f32 to vector<8x128xf32>
    %95 = arith.addf %94, %93 : vector<8x128xf32>
    %96 = arith.divf %94, %95 : vector<8x128xf32>
    %97 = vector.extract_strided_slice %84 {offsets = [0, 256], sizes = [8, 128], strides = [1, 1]} : vector<8x512xf32> to vector<8x128xf32>
    %98 = math.tanh %97 : vector<8x128xf32>
    %99 = vector.extract_strided_slice %84 {offsets = [0, 384], sizes = [8, 128], strides = [1, 1]} : vector<8x512xf32> to vector<8x128xf32>
    %100 = arith.negf %99 : vector<8x128xf32>
    %101 = math.exp %100 : vector<8x128xf32>
    %cst_33 = arith.constant 1.000000e+00 : f32
    %102 = vector.broadcast %cst_33 : f32 to vector<8x128xf32>
    %103 = arith.addf %102, %101 : vector<8x128xf32>
    %104 = arith.divf %102, %103 : vector<8x128xf32>
    %105 = arith.mulf %96, %41 : vector<8x128xf32>
    %106 = arith.mulf %90, %98 : vector<8x128xf32>
    %107 = arith.addf %105, %106 : vector<8x128xf32>
    %108 = math.tanh %107 : vector<8x128xf32>
    %109 = arith.mulf %104, %108 : vector<8x128xf32>
    %110 = arith.truncf %109 : vector<8x128xf32> to vector<8x128xbf16>
    %c0_34 = arith.constant 0 : index
    %c0_35 = arith.constant 0 : index
    %111 = vector.load %arg4[%c0_34, %c0_35] : memref<128x512xbf16, #tpu.memory_space<vmem>>, vector<128x512xbf16>
    %cst_36 = arith.constant dense<0.000000e+00> : vector<8x512xf32>
    %112 = tpu.matmul %110, %111, %cst_36 {dimension_numbers = #tpu.dot_dimension_numbers<[1], [0], [0], [1], [0, 0, 1, 1], [], []>} : vector<8x128xbf16>, vector<128x512xbf16>, vector<8x512xf32> -> vector<8x512xf32>
    %113 = arith.truncf %76 : vector<8x128xf32> to vector<8x128xbf16>
    %c0_37 = arith.constant 0 : index
    %c0_38 = arith.constant 0 : index
    %114 = vector.load %arg5[%c0_37, %c0_38] : memref<128x512xbf16, #tpu.memory_space<vmem>>, vector<128x512xbf16>
    %cst_39 = arith.constant dense<0.000000e+00> : vector<8x512xf32>
    %115 = tpu.matmul %113, %114, %cst_39 {dimension_numbers = #tpu.dot_dimension_numbers<[1], [0], [0], [1], [0, 0, 1, 1], [], []>} : vector<8x128xbf16>, vector<128x512xbf16>, vector<8x512xf32> -> vector<8x512xf32>
    %116 = arith.addf %112, %115 : vector<8x512xf32>
    %117 = arith.addf %116, %9 : vector<8x512xf32>
    %118 = vector.extract_strided_slice %117 {offsets = [0, 0], sizes = [8, 128], strides = [1, 1]} : vector<8x512xf32> to vector<8x128xf32>
    %119 = arith.negf %118 : vector<8x128xf32>
    %120 = math.exp %119 : vector<8x128xf32>
    %cst_40 = arith.constant 1.000000e+00 : f32
    %121 = vector.broadcast %cst_40 : f32 to vector<8x128xf32>
    %122 = arith.addf %121, %120 : vector<8x128xf32>
    %123 = arith.divf %121, %122 : vector<8x128xf32>
    %124 = vector.extract_strided_slice %117 {offsets = [0, 128], sizes = [8, 128], strides = [1, 1]} : vector<8x512xf32> to vector<8x128xf32>
    %125 = arith.negf %124 : vector<8x128xf32>
    %126 = math.exp %125 : vector<8x128xf32>
    %cst_41 = arith.constant 1.000000e+00 : f32
    %127 = vector.broadcast %cst_41 : f32 to vector<8x128xf32>
    %128 = arith.addf %127, %126 : vector<8x128xf32>
    %129 = arith.divf %127, %128 : vector<8x128xf32>
    %130 = vector.extract_strided_slice %117 {offsets = [0, 256], sizes = [8, 128], strides = [1, 1]} : vector<8x512xf32> to vector<8x128xf32>
    %131 = math.tanh %130 : vector<8x128xf32>
    %132 = vector.extract_strided_slice %117 {offsets = [0, 384], sizes = [8, 128], strides = [1, 1]} : vector<8x512xf32> to vector<8x128xf32>
    %133 = arith.negf %132 : vector<8x128xf32>
    %134 = math.exp %133 : vector<8x128xf32>
    %cst_42 = arith.constant 1.000000e+00 : f32
    %135 = vector.broadcast %cst_42 : f32 to vector<8x128xf32>
    %136 = arith.addf %135, %134 : vector<8x128xf32>
    %137 = arith.divf %135, %136 : vector<8x128xf32>
    %138 = arith.mulf %129, %74 : vector<8x128xf32>
    %139 = arith.mulf %123, %131 : vector<8x128xf32>
    %140 = arith.addf %138, %139 : vector<8x128xf32>
    %141 = math.tanh %140 : vector<8x128xf32>
    %142 = arith.mulf %137, %141 : vector<8x128xf32>
    %c2_i32 = arith.constant 2 : i32
    %c8_i32_43 = arith.constant 8 : i32
    %143 = arith.muli %c2_i32, %c8_i32_43 : i32
    %144 = tpu.assume_multiple %143, 8 : i32
    %145 = arith.index_cast %144 : i32 to index
    %c0_44 = arith.constant 0 : index
    %146 = vector.load %arg8[%145, %c0_44] : memref<64x512xf32, #tpu.memory_space<vmem>>, vector<8x512xf32>
    %147 = arith.truncf %109 : vector<8x128xf32> to vector<8x128xbf16>
    %c0_45 = arith.constant 0 : index
    %c0_46 = arith.constant 0 : index
    %148 = vector.load %arg2[%c0_45, %c0_46] : memref<128x512xbf16, #tpu.memory_space<vmem>>, vector<128x512xbf16>
    %cst_47 = arith.constant dense<0.000000e+00> : vector<8x512xf32>
    %149 = tpu.matmul %147, %148, %cst_47 {dimension_numbers = #tpu.dot_dimension_numbers<[1], [0], [0], [1], [0, 0, 1, 1], [], []>} : vector<8x128xbf16>, vector<128x512xbf16>, vector<8x512xf32> -> vector<8x512xf32>
    %150 = arith.addf %146, %149 : vector<8x512xf32>
    %151 = vector.extract_strided_slice %150 {offsets = [0, 0], sizes = [8, 128], strides = [1, 1]} : vector<8x512xf32> to vector<8x128xf32>
    %152 = arith.negf %151 : vector<8x128xf32>
    %153 = math.exp %152 : vector<8x128xf32>
    %cst_48 = arith.constant 1.000000e+00 : f32
    %154 = vector.broadcast %cst_48 : f32 to vector<8x128xf32>
    %155 = arith.addf %154, %153 : vector<8x128xf32>
    %156 = arith.divf %154, %155 : vector<8x128xf32>
    %157 = vector.extract_strided_slice %150 {offsets = [0, 128], sizes = [8, 128], strides = [1, 1]} : vector<8x512xf32> to vector<8x128xf32>
    %158 = arith.negf %157 : vector<8x128xf32>
    %159 = math.exp %158 : vector<8x128xf32>
    %cst_49 = arith.constant 1.000000e+00 : f32
    %160 = vector.broadcast %cst_49 : f32 to vector<8x128xf32>
    %161 = arith.addf %160, %159 : vector<8x128xf32>
    %162 = arith.divf %160, %161 : vector<8x128xf32>
    %163 = vector.extract_strided_slice %150 {offsets = [0, 256], sizes = [8, 128], strides = [1, 1]} : vector<8x512xf32> to vector<8x128xf32>
    %164 = math.tanh %163 : vector<8x128xf32>
    %165 = vector.extract_strided_slice %150 {offsets = [0, 384], sizes = [8, 128], strides = [1, 1]} : vector<8x512xf32> to vector<8x128xf32>
    %166 = arith.negf %165 : vector<8x128xf32>
    %167 = math.exp %166 : vector<8x128xf32>
    %cst_50 = arith.constant 1.000000e+00 : f32
    %168 = vector.broadcast %cst_50 : f32 to vector<8x128xf32>
    %169 = arith.addf %168, %167 : vector<8x128xf32>
    %170 = arith.divf %168, %169 : vector<8x128xf32>
    %171 = arith.mulf %162, %107 : vector<8x128xf32>
    %172 = arith.mulf %156, %164 : vector<8x128xf32>
    %173 = arith.addf %171, %172 : vector<8x128xf32>
    %174 = math.tanh %173 : vector<8x128xf32>
    %175 = arith.mulf %170, %174 : vector<8x128xf32>
    %176 = arith.truncf %175 : vector<8x128xf32> to vector<8x128xbf16>
    %c0_51 = arith.constant 0 : index
    %c0_52 = arith.constant 0 : index
    %177 = vector.load %arg4[%c0_51, %c0_52] : memref<128x512xbf16, #tpu.memory_space<vmem>>, vector<128x512xbf16>
    %cst_53 = arith.constant dense<0.000000e+00> : vector<8x512xf32>
    %178 = tpu.matmul %176, %177, %cst_53 {dimension_numbers = #tpu.dot_dimension_numbers<[1], [0], [0], [1], [0, 0, 1, 1], [], []>} : vector<8x128xbf16>, vector<128x512xbf16>, vector<8x512xf32> -> vector<8x512xf32>
    %179 = arith.truncf %142 : vector<8x128xf32> to vector<8x128xbf16>
    %c0_54 = arith.constant 0 : index
    %c0_55 = arith.constant 0 : index
    %180 = vector.load %arg5[%c0_54, %c0_55] : memref<128x512xbf16, #tpu.memory_space<vmem>>, vector<128x512xbf16>
    %cst_56 = arith.constant dense<0.000000e+00> : vector<8x512xf32>
    %181 = tpu.matmul %179, %180, %cst_56 {dimension_numbers = #tpu.dot_dimension_numbers<[1], [0], [0], [1], [0, 0, 1, 1], [], []>} : vector<8x128xbf16>, vector<128x512xbf16>, vector<8x512xf32> -> vector<8x512xf32>
    %182 = arith.addf %178, %181 : vector<8x512xf32>
    %183 = arith.addf %182, %9 : vector<8x512xf32>
    %184 = vector.extract_strided_slice %183 {offsets = [0, 0], sizes = [8, 128], strides = [1, 1]} : vector<8x512xf32> to vector<8x128xf32>
    %185 = arith.negf %184 : vector<8x128xf32>
    %186 = math.exp %185 : vector<8x128xf32>
    %cst_57 = arith.constant 1.000000e+00 : f32
    %187 = vector.broadcast %cst_57 : f32 to vector<8x128xf32>
    %188 = arith.addf %187, %186 : vector<8x128xf32>
    %189 = arith.divf %187, %188 : vector<8x128xf32>
    %190 = vector.extract_strided_slice %183 {offsets = [0, 128], sizes = [8, 128], strides = [1, 1]} : vector<8x512xf32> to vector<8x128xf32>
    %191 = arith.negf %190 : vector<8x128xf32>
    %192 = math.exp %191 : vector<8x128xf32>
    %cst_58 = arith.constant 1.000000e+00 : f32
    %193 = vector.broadcast %cst_58 : f32 to vector<8x128xf32>
    %194 = arith.addf %193, %192 : vector<8x128xf32>
    %195 = arith.divf %193, %194 : vector<8x128xf32>
    %196 = vector.extract_strided_slice %183 {offsets = [0, 256], sizes = [8, 128], strides = [1, 1]} : vector<8x512xf32> to vector<8x128xf32>
    %197 = math.tanh %196 : vector<8x128xf32>
    %198 = vector.extract_strided_slice %183 {offsets = [0, 384], sizes = [8, 128], strides = [1, 1]} : vector<8x512xf32> to vector<8x128xf32>
    %199 = arith.negf %198 : vector<8x128xf32>
    %200 = math.exp %199 : vector<8x128xf32>
    %cst_59 = arith.constant 1.000000e+00 : f32
    %201 = vector.broadcast %cst_59 : f32 to vector<8x128xf32>
    %202 = arith.addf %201, %200 : vector<8x128xf32>
    %203 = arith.divf %201, %202 : vector<8x128xf32>
    %204 = arith.mulf %195, %140 : vector<8x128xf32>
    %205 = arith.mulf %189, %197 : vector<8x128xf32>
    %206 = arith.addf %204, %205 : vector<8x128xf32>
    %207 = math.tanh %206 : vector<8x128xf32>
    %208 = arith.mulf %203, %207 : vector<8x128xf32>
    %c3_i32 = arith.constant 3 : i32
    %c8_i32_60 = arith.constant 8 : i32
    %209 = arith.muli %c3_i32, %c8_i32_60 : i32
    %210 = tpu.assume_multiple %209, 8 : i32
    %211 = arith.index_cast %210 : i32 to index
    %c0_61 = arith.constant 0 : index
    %212 = vector.load %arg8[%211, %c0_61] : memref<64x512xf32, #tpu.memory_space<vmem>>, vector<8x512xf32>
    %213 = arith.truncf %175 : vector<8x128xf32> to vector<8x128xbf16>
    %c0_62 = arith.constant 0 : index
    %c0_63 = arith.constant 0 : index
    %214 = vector.load %arg2[%c0_62, %c0_63] : memref<128x512xbf16, #tpu.memory_space<vmem>>, vector<128x512xbf16>
    %cst_64 = arith.constant dense<0.000000e+00> : vector<8x512xf32>
    %215 = tpu.matmul %213, %214, %cst_64 {dimension_numbers = #tpu.dot_dimension_numbers<[1], [0], [0], [1], [0, 0, 1, 1], [], []>} : vector<8x128xbf16>, vector<128x512xbf16>, vector<8x512xf32> -> vector<8x512xf32>
    %216 = arith.addf %212, %215 : vector<8x512xf32>
    %217 = vector.extract_strided_slice %216 {offsets = [0, 0], sizes = [8, 128], strides = [1, 1]} : vector<8x512xf32> to vector<8x128xf32>
    %218 = arith.negf %217 : vector<8x128xf32>
    %219 = math.exp %218 : vector<8x128xf32>
    %cst_65 = arith.constant 1.000000e+00 : f32
    %220 = vector.broadcast %cst_65 : f32 to vector<8x128xf32>
    %221 = arith.addf %220, %219 : vector<8x128xf32>
    %222 = arith.divf %220, %221 : vector<8x128xf32>
    %223 = vector.extract_strided_slice %216 {offsets = [0, 128], sizes = [8, 128], strides = [1, 1]} : vector<8x512xf32> to vector<8x128xf32>
    %224 = arith.negf %223 : vector<8x128xf32>
    %225 = math.exp %224 : vector<8x128xf32>
    %cst_66 = arith.constant 1.000000e+00 : f32
    %226 = vector.broadcast %cst_66 : f32 to vector<8x128xf32>
    %227 = arith.addf %226, %225 : vector<8x128xf32>
    %228 = arith.divf %226, %227 : vector<8x128xf32>
    %229 = vector.extract_strided_slice %216 {offsets = [0, 256], sizes = [8, 128], strides = [1, 1]} : vector<8x512xf32> to vector<8x128xf32>
    %230 = math.tanh %229 : vector<8x128xf32>
    %231 = vector.extract_strided_slice %216 {offsets = [0, 384], sizes = [8, 128], strides = [1, 1]} : vector<8x512xf32> to vector<8x128xf32>
    %232 = arith.negf %231 : vector<8x128xf32>
    %233 = math.exp %232 : vector<8x128xf32>
    %cst_67 = arith.constant 1.000000e+00 : f32
    %234 = vector.broadcast %cst_67 : f32 to vector<8x128xf32>
    %235 = arith.addf %234, %233 : vector<8x128xf32>
    %236 = arith.divf %234, %235 : vector<8x128xf32>
    %237 = arith.mulf %228, %173 : vector<8x128xf32>
    %238 = arith.mulf %222, %230 : vector<8x128xf32>
    %239 = arith.addf %237, %238 : vector<8x128xf32>
    %240 = math.tanh %239 : vector<8x128xf32>
    %241 = arith.mulf %236, %240 : vector<8x128xf32>
    %242 = arith.truncf %241 : vector<8x128xf32> to vector<8x128xbf16>
    %c0_68 = arith.constant 0 : index
    %c0_69 = arith.constant 0 : index
    %243 = vector.load %arg4[%c0_68, %c0_69] : memref<128x512xbf16, #tpu.memory_space<vmem>>, vector<128x512xbf16>
    %cst_70 = arith.constant dense<0.000000e+00> : vector<8x512xf32>
    %244 = tpu.matmul %242, %243, %cst_70 {dimension_numbers = #tpu.dot_dimension_numbers<[1], [0], [0], [1], [0, 0, 1, 1], [], []>} : vector<8x128xbf16>, vector<128x512xbf16>, vector<8x512xf32> -> vector<8x512xf32>
    %245 = arith.truncf %208 : vector<8x128xf32> to vector<8x128xbf16>
    %c0_71 = arith.constant 0 : index
    %c0_72 = arith.constant 0 : index
    %246 = vector.load %arg5[%c0_71, %c0_72] : memref<128x512xbf16, #tpu.memory_space<vmem>>, vector<128x512xbf16>
    %cst_73 = arith.constant dense<0.000000e+00> : vector<8x512xf32>
    %247 = tpu.matmul %245, %246, %cst_73 {dimension_numbers = #tpu.dot_dimension_numbers<[1], [0], [0], [1], [0, 0, 1, 1], [], []>} : vector<8x128xbf16>, vector<128x512xbf16>, vector<8x512xf32> -> vector<8x512xf32>
    %248 = arith.addf %244, %247 : vector<8x512xf32>
    %249 = arith.addf %248, %9 : vector<8x512xf32>
    %250 = vector.extract_strided_slice %249 {offsets = [0, 0], sizes = [8, 128], strides = [1, 1]} : vector<8x512xf32> to vector<8x128xf32>
    %251 = arith.negf %250 : vector<8x128xf32>
    %252 = math.exp %251 : vector<8x128xf32>
    %cst_74 = arith.constant 1.000000e+00 : f32
    %253 = vector.broadcast %cst_74 : f32 to vector<8x128xf32>
    %254 = arith.addf %253, %252 : vector<8x128xf32>
    %255 = arith.divf %253, %254 : vector<8x128xf32>
    %256 = vector.extract_strided_slice %249 {offsets = [0, 128], sizes = [8, 128], strides = [1, 1]} : vector<8x512xf32> to vector<8x128xf32>
    %257 = arith.negf %256 : vector<8x128xf32>
    %258 = math.exp %257 : vector<8x128xf32>
    %cst_75 = arith.constant 1.000000e+00 : f32
    %259 = vector.broadcast %cst_75 : f32 to vector<8x128xf32>
    %260 = arith.addf %259, %258 : vector<8x128xf32>
    %261 = arith.divf %259, %260 : vector<8x128xf32>
    %262 = vector.extract_strided_slice %249 {offsets = [0, 256], sizes = [8, 128], strides = [1, 1]} : vector<8x512xf32> to vector<8x128xf32>
    %263 = math.tanh %262 : vector<8x128xf32>
    %264 = vector.extract_strided_slice %249 {offsets = [0, 384], sizes = [8, 128], strides = [1, 1]} : vector<8x512xf32> to vector<8x128xf32>
    %265 = arith.negf %264 : vector<8x128xf32>
    %266 = math.exp %265 : vector<8x128xf32>
    %cst_76 = arith.constant 1.000000e+00 : f32
    %267 = vector.broadcast %cst_76 : f32 to vector<8x128xf32>
    %268 = arith.addf %267, %266 : vector<8x128xf32>
    %269 = arith.divf %267, %268 : vector<8x128xf32>
    %270 = arith.mulf %261, %206 : vector<8x128xf32>
    %271 = arith.mulf %255, %263 : vector<8x128xf32>
    %272 = arith.addf %270, %271 : vector<8x128xf32>
    %273 = math.tanh %272 : vector<8x128xf32>
    %274 = arith.mulf %269, %273 : vector<8x128xf32>
    %c4_i32 = arith.constant 4 : i32
    %c8_i32_77 = arith.constant 8 : i32
    %275 = arith.muli %c4_i32, %c8_i32_77 : i32
    %276 = tpu.assume_multiple %275, 8 : i32
    %277 = arith.index_cast %276 : i32 to index
    %c0_78 = arith.constant 0 : index
    %278 = vector.load %arg8[%277, %c0_78] : memref<64x512xf32, #tpu.memory_space<vmem>>, vector<8x512xf32>
    %279 = arith.truncf %241 : vector<8x128xf32> to vector<8x128xbf16>
    %c0_79 = arith.constant 0 : index
    %c0_80 = arith.constant 0 : index
    %280 = vector.load %arg2[%c0_79, %c0_80] : memref<128x512xbf16, #tpu.memory_space<vmem>>, vector<128x512xbf16>
    %cst_81 = arith.constant dense<0.000000e+00> : vector<8x512xf32>
    %281 = tpu.matmul %279, %280, %cst_81 {dimension_numbers = #tpu.dot_dimension_numbers<[1], [0], [0], [1], [0, 0, 1, 1], [], []>} : vector<8x128xbf16>, vector<128x512xbf16>, vector<8x512xf32> -> vector<8x512xf32>
    %282 = arith.addf %278, %281 : vector<8x512xf32>
    %283 = vector.extract_strided_slice %282 {offsets = [0, 0], sizes = [8, 128], strides = [1, 1]} : vector<8x512xf32> to vector<8x128xf32>
    %284 = arith.negf %283 : vector<8x128xf32>
    %285 = math.exp %284 : vector<8x128xf32>
    %cst_82 = arith.constant 1.000000e+00 : f32
    %286 = vector.broadcast %cst_82 : f32 to vector<8x128xf32>
    %287 = arith.addf %286, %285 : vector<8x128xf32>
    %288 = arith.divf %286, %287 : vector<8x128xf32>
    %289 = vector.extract_strided_slice %282 {offsets = [0, 128], sizes = [8, 128], strides = [1, 1]} : vector<8x512xf32> to vector<8x128xf32>
    %290 = arith.negf %289 : vector<8x128xf32>
    %291 = math.exp %290 : vector<8x128xf32>
    %cst_83 = arith.constant 1.000000e+00 : f32
    %292 = vector.broadcast %cst_83 : f32 to vector<8x128xf32>
    %293 = arith.addf %292, %291 : vector<8x128xf32>
    %294 = arith.divf %292, %293 : vector<8x128xf32>
    %295 = vector.extract_strided_slice %282 {offsets = [0, 256], sizes = [8, 128], strides = [1, 1]} : vector<8x512xf32> to vector<8x128xf32>
    %296 = math.tanh %295 : vector<8x128xf32>
    %297 = vector.extract_strided_slice %282 {offsets = [0, 384], sizes = [8, 128], strides = [1, 1]} : vector<8x512xf32> to vector<8x128xf32>
    %298 = arith.negf %297 : vector<8x128xf32>
    %299 = math.exp %298 : vector<8x128xf32>
    %cst_84 = arith.constant 1.000000e+00 : f32
    %300 = vector.broadcast %cst_84 : f32 to vector<8x128xf32>
    %301 = arith.addf %300, %299 : vector<8x128xf32>
    %302 = arith.divf %300, %301 : vector<8x128xf32>
    %303 = arith.mulf %294, %239 : vector<8x128xf32>
    %304 = arith.mulf %288, %296 : vector<8x128xf32>
    %305 = arith.addf %303, %304 : vector<8x128xf32>
    %306 = math.tanh %305 : vector<8x128xf32>
    %307 = arith.mulf %302, %306 : vector<8x128xf32>
    %308 = arith.truncf %307 : vector<8x128xf32> to vector<8x128xbf16>
    %c0_85 = arith.constant 0 : index
    %c0_86 = arith.constant 0 : index
    %309 = vector.load %arg4[%c0_85, %c0_86] : memref<128x512xbf16, #tpu.memory_space<vmem>>, vector<128x512xbf16>
    %cst_87 = arith.constant dense<0.000000e+00> : vector<8x512xf32>
    %310 = tpu.matmul %308, %309, %cst_87 {dimension_numbers = #tpu.dot_dimension_numbers<[1], [0], [0], [1], [0, 0, 1, 1], [], []>} : vector<8x128xbf16>, vector<128x512xbf16>, vector<8x512xf32> -> vector<8x512xf32>
    %311 = arith.truncf %274 : vector<8x128xf32> to vector<8x128xbf16>
    %c0_88 = arith.constant 0 : index
    %c0_89 = arith.constant 0 : index
    %312 = vector.load %arg5[%c0_88, %c0_89] : memref<128x512xbf16, #tpu.memory_space<vmem>>, vector<128x512xbf16>
    %cst_90 = arith.constant dense<0.000000e+00> : vector<8x512xf32>
    %313 = tpu.matmul %311, %312, %cst_90 {dimension_numbers = #tpu.dot_dimension_numbers<[1], [0], [0], [1], [0, 0, 1, 1], [], []>} : vector<8x128xbf16>, vector<128x512xbf16>, vector<8x512xf32> -> vector<8x512xf32>
    %314 = arith.addf %310, %313 : vector<8x512xf32>
    %315 = arith.addf %314, %9 : vector<8x512xf32>
    %316 = vector.extract_strided_slice %315 {offsets = [0, 0], sizes = [8, 128], strides = [1, 1]} : vector<8x512xf32> to vector<8x128xf32>
    %317 = arith.negf %316 : vector<8x128xf32>
    %318 = math.exp %317 : vector<8x128xf32>
    %cst_91 = arith.constant 1.000000e+00 : f32
    %319 = vector.broadcast %cst_91 : f32 to vector<8x128xf32>
    %320 = arith.addf %319, %318 : vector<8x128xf32>
    %321 = arith.divf %319, %320 : vector<8x128xf32>
    %322 = vector.extract_strided_slice %315 {offsets = [0, 128], sizes = [8, 128], strides = [1, 1]} : vector<8x512xf32> to vector<8x128xf32>
    %323 = arith.negf %322 : vector<8x128xf32>
    %324 = math.exp %323 : vector<8x128xf32>
    %cst_92 = arith.constant 1.000000e+00 : f32
    %325 = vector.broadcast %cst_92 : f32 to vector<8x128xf32>
    %326 = arith.addf %325, %324 : vector<8x128xf32>
    %327 = arith.divf %325, %326 : vector<8x128xf32>
    %328 = vector.extract_strided_slice %315 {offsets = [0, 256], sizes = [8, 128], strides = [1, 1]} : vector<8x512xf32> to vector<8x128xf32>
    %329 = math.tanh %328 : vector<8x128xf32>
    %330 = vector.extract_strided_slice %315 {offsets = [0, 384], sizes = [8, 128], strides = [1, 1]} : vector<8x512xf32> to vector<8x128xf32>
    %331 = arith.negf %330 : vector<8x128xf32>
    %332 = math.exp %331 : vector<8x128xf32>
    %cst_93 = arith.constant 1.000000e+00 : f32
    %333 = vector.broadcast %cst_93 : f32 to vector<8x128xf32>
    %334 = arith.addf %333, %332 : vector<8x128xf32>
    %335 = arith.divf %333, %334 : vector<8x128xf32>
    %336 = arith.mulf %327, %272 : vector<8x128xf32>
    %337 = arith.mulf %321, %329 : vector<8x128xf32>
    %338 = arith.addf %336, %337 : vector<8x128xf32>
    %339 = math.tanh %338 : vector<8x128xf32>
    %340 = arith.mulf %335, %339 : vector<8x128xf32>
    %c5_i32 = arith.constant 5 : i32
    %c8_i32_94 = arith.constant 8 : i32
    %341 = arith.muli %c5_i32, %c8_i32_94 : i32
    %342 = tpu.assume_multiple %341, 8 : i32
    %343 = arith.index_cast %342 : i32 to index
    %c0_95 = arith.constant 0 : index
    %344 = vector.load %arg8[%343, %c0_95] : memref<64x512xf32, #tpu.memory_space<vmem>>, vector<8x512xf32>
    %345 = arith.truncf %307 : vector<8x128xf32> to vector<8x128xbf16>
    %c0_96 = arith.constant 0 : index
    %c0_97 = arith.constant 0 : index
    %346 = vector.load %arg2[%c0_96, %c0_97] : memref<128x512xbf16, #tpu.memory_space<vmem>>, vector<128x512xbf16>
    %cst_98 = arith.constant dense<0.000000e+00> : vector<8x512xf32>
    %347 = tpu.matmul %345, %346, %cst_98 {dimension_numbers = #tpu.dot_dimension_numbers<[1], [0], [0], [1], [0, 0, 1, 1], [], []>} : vector<8x128xbf16>, vector<128x512xbf16>, vector<8x512xf32> -> vector<8x512xf32>
    %348 = arith.addf %344, %347 : vector<8x512xf32>
    %349 = vector.extract_strided_slice %348 {offsets = [0, 0], sizes = [8, 128], strides = [1, 1]} : vector<8x512xf32> to vector<8x128xf32>
    %350 = arith.negf %349 : vector<8x128xf32>
    %351 = math.exp %350 : vector<8x128xf32>
    %cst_99 = arith.constant 1.000000e+00 : f32
    %352 = vector.broadcast %cst_99 : f32 to vector<8x128xf32>
    %353 = arith.addf %352, %351 : vector<8x128xf32>
    %354 = arith.divf %352, %353 : vector<8x128xf32>
    %355 = vector.extract_strided_slice %348 {offsets = [0, 128], sizes = [8, 128], strides = [1, 1]} : vector<8x512xf32> to vector<8x128xf32>
    %356 = arith.negf %355 : vector<8x128xf32>
    %357 = math.exp %356 : vector<8x128xf32>
    %cst_100 = arith.constant 1.000000e+00 : f32
    %358 = vector.broadcast %cst_100 : f32 to vector<8x128xf32>
    %359 = arith.addf %358, %357 : vector<8x128xf32>
    %360 = arith.divf %358, %359 : vector<8x128xf32>
    %361 = vector.extract_strided_slice %348 {offsets = [0, 256], sizes = [8, 128], strides = [1, 1]} : vector<8x512xf32> to vector<8x128xf32>
    %362 = math.tanh %361 : vector<8x128xf32>
    %363 = vector.extract_strided_slice %348 {offsets = [0, 384], sizes = [8, 128], strides = [1, 1]} : vector<8x512xf32> to vector<8x128xf32>
    %364 = arith.negf %363 : vector<8x128xf32>
    %365 = math.exp %364 : vector<8x128xf32>
    %cst_101 = arith.constant 1.000000e+00 : f32
    %366 = vector.broadcast %cst_101 : f32 to vector<8x128xf32>
    %367 = arith.addf %366, %365 : vector<8x128xf32>
    %368 = arith.divf %366, %367 : vector<8x128xf32>
    %369 = arith.mulf %360, %305 : vector<8x128xf32>
    %370 = arith.mulf %354, %362 : vector<8x128xf32>
    %371 = arith.addf %369, %370 : vector<8x128xf32>
    %372 = math.tanh %371 : vector<8x128xf32>
    %373 = arith.mulf %368, %372 : vector<8x128xf32>
    %374 = arith.truncf %373 : vector<8x128xf32> to vector<8x128xbf16>
    %c0_102 = arith.constant 0 : index
    %c0_103 = arith.constant 0 : index
    %375 = vector.load %arg4[%c0_102, %c0_103] : memref<128x512xbf16, #tpu.memory_space<vmem>>, vector<128x512xbf16>
    %cst_104 = arith.constant dense<0.000000e+00> : vector<8x512xf32>
    %376 = tpu.matmul %374, %375, %cst_104 {dimension_numbers = #tpu.dot_dimension_numbers<[1], [0], [0], [1], [0, 0, 1, 1], [], []>} : vector<8x128xbf16>, vector<128x512xbf16>, vector<8x512xf32> -> vector<8x512xf32>
    %377 = arith.truncf %340 : vector<8x128xf32> to vector<8x128xbf16>
    %c0_105 = arith.constant 0 : index
    %c0_106 = arith.constant 0 : index
    %378 = vector.load %arg5[%c0_105, %c0_106] : memref<128x512xbf16, #tpu.memory_space<vmem>>, vector<128x512xbf16>
    %cst_107 = arith.constant dense<0.000000e+00> : vector<8x512xf32>
    %379 = tpu.matmul %377, %378, %cst_107 {dimension_numbers = #tpu.dot_dimension_numbers<[1], [0], [0], [1], [0, 0, 1, 1], [], []>} : vector<8x128xbf16>, vector<128x512xbf16>, vector<8x512xf32> -> vector<8x512xf32>
    %380 = arith.addf %376, %379 : vector<8x512xf32>
    %381 = arith.addf %380, %9 : vector<8x512xf32>
    %382 = vector.extract_strided_slice %381 {offsets = [0, 0], sizes = [8, 128], strides = [1, 1]} : vector<8x512xf32> to vector<8x128xf32>
    %383 = arith.negf %382 : vector<8x128xf32>
    %384 = math.exp %383 : vector<8x128xf32>
    %cst_108 = arith.constant 1.000000e+00 : f32
    %385 = vector.broadcast %cst_108 : f32 to vector<8x128xf32>
    %386 = arith.addf %385, %384 : vector<8x128xf32>
    %387 = arith.divf %385, %386 : vector<8x128xf32>
    %388 = vector.extract_strided_slice %381 {offsets = [0, 128], sizes = [8, 128], strides = [1, 1]} : vector<8x512xf32> to vector<8x128xf32>
    %389 = arith.negf %388 : vector<8x128xf32>
    %390 = math.exp %389 : vector<8x128xf32>
    %cst_109 = arith.constant 1.000000e+00 : f32
    %391 = vector.broadcast %cst_109 : f32 to vector<8x128xf32>
    %392 = arith.addf %391, %390 : vector<8x128xf32>
    %393 = arith.divf %391, %392 : vector<8x128xf32>
    %394 = vector.extract_strided_slice %381 {offsets = [0, 256], sizes = [8, 128], strides = [1, 1]} : vector<8x512xf32> to vector<8x128xf32>
    %395 = math.tanh %394 : vector<8x128xf32>
    %396 = vector.extract_strided_slice %381 {offsets = [0, 384], sizes = [8, 128], strides = [1, 1]} : vector<8x512xf32> to vector<8x128xf32>
    %397 = arith.negf %396 : vector<8x128xf32>
    %398 = math.exp %397 : vector<8x128xf32>
    %cst_110 = arith.constant 1.000000e+00 : f32
    %399 = vector.broadcast %cst_110 : f32 to vector<8x128xf32>
    %400 = arith.addf %399, %398 : vector<8x128xf32>
    %401 = arith.divf %399, %400 : vector<8x128xf32>
    %402 = arith.mulf %393, %338 : vector<8x128xf32>
    %403 = arith.mulf %387, %395 : vector<8x128xf32>
    %404 = arith.addf %402, %403 : vector<8x128xf32>
    %405 = math.tanh %404 : vector<8x128xf32>
    %406 = arith.mulf %401, %405 : vector<8x128xf32>
    %c6_i32 = arith.constant 6 : i32
    %c8_i32_111 = arith.constant 8 : i32
    %407 = arith.muli %c6_i32, %c8_i32_111 : i32
    %408 = tpu.assume_multiple %407, 8 : i32
    %409 = arith.index_cast %408 : i32 to index
    %c0_112 = arith.constant 0 : index
    %410 = vector.load %arg8[%409, %c0_112] : memref<64x512xf32, #tpu.memory_space<vmem>>, vector<8x512xf32>
    %411 = arith.truncf %373 : vector<8x128xf32> to vector<8x128xbf16>
    %c0_113 = arith.constant 0 : index
    %c0_114 = arith.constant 0 : index
    %412 = vector.load %arg2[%c0_113, %c0_114] : memref<128x512xbf16, #tpu.memory_space<vmem>>, vector<128x512xbf16>
    %cst_115 = arith.constant dense<0.000000e+00> : vector<8x512xf32>
    %413 = tpu.matmul %411, %412, %cst_115 {dimension_numbers = #tpu.dot_dimension_numbers<[1], [0], [0], [1], [0, 0, 1, 1], [], []>} : vector<8x128xbf16>, vector<128x512xbf16>, vector<8x512xf32> -> vector<8x512xf32>
    %414 = arith.addf %410, %413 : vector<8x512xf32>
    %415 = vector.extract_strided_slice %414 {offsets = [0, 0], sizes = [8, 128], strides = [1, 1]} : vector<8x512xf32> to vector<8x128xf32>
    %416 = arith.negf %415 : vector<8x128xf32>
    %417 = math.exp %416 : vector<8x128xf32>
    %cst_116 = arith.constant 1.000000e+00 : f32
    %418 = vector.broadcast %cst_116 : f32 to vector<8x128xf32>
    %419 = arith.addf %418, %417 : vector<8x128xf32>
    %420 = arith.divf %418, %419 : vector<8x128xf32>
    %421 = vector.extract_strided_slice %414 {offsets = [0, 128], sizes = [8, 128], strides = [1, 1]} : vector<8x512xf32> to vector<8x128xf32>
    %422 = arith.negf %421 : vector<8x128xf32>
    %423 = math.exp %422 : vector<8x128xf32>
    %cst_117 = arith.constant 1.000000e+00 : f32
    %424 = vector.broadcast %cst_117 : f32 to vector<8x128xf32>
    %425 = arith.addf %424, %423 : vector<8x128xf32>
    %426 = arith.divf %424, %425 : vector<8x128xf32>
    %427 = vector.extract_strided_slice %414 {offsets = [0, 256], sizes = [8, 128], strides = [1, 1]} : vector<8x512xf32> to vector<8x128xf32>
    %428 = math.tanh %427 : vector<8x128xf32>
    %429 = vector.extract_strided_slice %414 {offsets = [0, 384], sizes = [8, 128], strides = [1, 1]} : vector<8x512xf32> to vector<8x128xf32>
    %430 = arith.negf %429 : vector<8x128xf32>
    %431 = math.exp %430 : vector<8x128xf32>
    %cst_118 = arith.constant 1.000000e+00 : f32
    %432 = vector.broadcast %cst_118 : f32 to vector<8x128xf32>
    %433 = arith.addf %432, %431 : vector<8x128xf32>
    %434 = arith.divf %432, %433 : vector<8x128xf32>
    %435 = arith.mulf %426, %371 : vector<8x128xf32>
    %436 = arith.mulf %420, %428 : vector<8x128xf32>
    %437 = arith.addf %435, %436 : vector<8x128xf32>
    %438 = math.tanh %437 : vector<8x128xf32>
    %439 = arith.mulf %434, %438 : vector<8x128xf32>
    %440 = arith.truncf %439 : vector<8x128xf32> to vector<8x128xbf16>
    %c0_119 = arith.constant 0 : index
    %c0_120 = arith.constant 0 : index
    %441 = vector.load %arg4[%c0_119, %c0_120] : memref<128x512xbf16, #tpu.memory_space<vmem>>, vector<128x512xbf16>
    %cst_121 = arith.constant dense<0.000000e+00> : vector<8x512xf32>
    %442 = tpu.matmul %440, %441, %cst_121 {dimension_numbers = #tpu.dot_dimension_numbers<[1], [0], [0], [1], [0, 0, 1, 1], [], []>} : vector<8x128xbf16>, vector<128x512xbf16>, vector<8x512xf32> -> vector<8x512xf32>
    %443 = arith.truncf %406 : vector<8x128xf32> to vector<8x128xbf16>
    %c0_122 = arith.constant 0 : index
    %c0_123 = arith.constant 0 : index
    %444 = vector.load %arg5[%c0_122, %c0_123] : memref<128x512xbf16, #tpu.memory_space<vmem>>, vector<128x512xbf16>
    %cst_124 = arith.constant dense<0.000000e+00> : vector<8x512xf32>
    %445 = tpu.matmul %443, %444, %cst_124 {dimension_numbers = #tpu.dot_dimension_numbers<[1], [0], [0], [1], [0, 0, 1, 1], [], []>} : vector<8x128xbf16>, vector<128x512xbf16>, vector<8x512xf32> -> vector<8x512xf32>
    %446 = arith.addf %442, %445 : vector<8x512xf32>
    %447 = arith.addf %446, %9 : vector<8x512xf32>
    %448 = vector.extract_strided_slice %447 {offsets = [0, 0], sizes = [8, 128], strides = [1, 1]} : vector<8x512xf32> to vector<8x128xf32>
    %449 = arith.negf %448 : vector<8x128xf32>
    %450 = math.exp %449 : vector<8x128xf32>
    %cst_125 = arith.constant 1.000000e+00 : f32
    %451 = vector.broadcast %cst_125 : f32 to vector<8x128xf32>
    %452 = arith.addf %451, %450 : vector<8x128xf32>
    %453 = arith.divf %451, %452 : vector<8x128xf32>
    %454 = vector.extract_strided_slice %447 {offsets = [0, 128], sizes = [8, 128], strides = [1, 1]} : vector<8x512xf32> to vector<8x128xf32>
    %455 = arith.negf %454 : vector<8x128xf32>
    %456 = math.exp %455 : vector<8x128xf32>
    %cst_126 = arith.constant 1.000000e+00 : f32
    %457 = vector.broadcast %cst_126 : f32 to vector<8x128xf32>
    %458 = arith.addf %457, %456 : vector<8x128xf32>
    %459 = arith.divf %457, %458 : vector<8x128xf32>
    %460 = vector.extract_strided_slice %447 {offsets = [0, 256], sizes = [8, 128], strides = [1, 1]} : vector<8x512xf32> to vector<8x128xf32>
    %461 = math.tanh %460 : vector<8x128xf32>
    %462 = vector.extract_strided_slice %447 {offsets = [0, 384], sizes = [8, 128], strides = [1, 1]} : vector<8x512xf32> to vector<8x128xf32>
    %463 = arith.negf %462 : vector<8x128xf32>
    %464 = math.exp %463 : vector<8x128xf32>
    %cst_127 = arith.constant 1.000000e+00 : f32
    %465 = vector.broadcast %cst_127 : f32 to vector<8x128xf32>
    %466 = arith.addf %465, %464 : vector<8x128xf32>
    %467 = arith.divf %465, %466 : vector<8x128xf32>
    %468 = arith.mulf %459, %404 : vector<8x128xf32>
    %469 = arith.mulf %453, %461 : vector<8x128xf32>
    %470 = arith.addf %468, %469 : vector<8x128xf32>
    %471 = math.tanh %470 : vector<8x128xf32>
    %472 = arith.mulf %467, %471 : vector<8x128xf32>
    %c7_i32 = arith.constant 7 : i32
    %c8_i32_128 = arith.constant 8 : i32
    %473 = arith.muli %c7_i32, %c8_i32_128 : i32
    %474 = tpu.assume_multiple %473, 8 : i32
    %475 = arith.index_cast %474 : i32 to index
    %c0_129 = arith.constant 0 : index
    %476 = vector.load %arg8[%475, %c0_129] : memref<64x512xf32, #tpu.memory_space<vmem>>, vector<8x512xf32>
    %477 = arith.truncf %439 : vector<8x128xf32> to vector<8x128xbf16>
    %c0_130 = arith.constant 0 : index
    %c0_131 = arith.constant 0 : index
    %478 = vector.load %arg2[%c0_130, %c0_131] : memref<128x512xbf16, #tpu.memory_space<vmem>>, vector<128x512xbf16>
    %cst_132 = arith.constant dense<0.000000e+00> : vector<8x512xf32>
    %479 = tpu.matmul %477, %478, %cst_132 {dimension_numbers = #tpu.dot_dimension_numbers<[1], [0], [0], [1], [0, 0, 1, 1], [], []>} : vector<8x128xbf16>, vector<128x512xbf16>, vector<8x512xf32> -> vector<8x512xf32>
    %480 = arith.addf %476, %479 : vector<8x512xf32>
    %481 = vector.extract_strided_slice %480 {offsets = [0, 0], sizes = [8, 128], strides = [1, 1]} : vector<8x512xf32> to vector<8x128xf32>
    %482 = arith.negf %481 : vector<8x128xf32>
    %483 = math.exp %482 : vector<8x128xf32>
    %cst_133 = arith.constant 1.000000e+00 : f32
    %484 = vector.broadcast %cst_133 : f32 to vector<8x128xf32>
    %485 = arith.addf %484, %483 : vector<8x128xf32>
    %486 = arith.divf %484, %485 : vector<8x128xf32>
    %487 = vector.extract_strided_slice %480 {offsets = [0, 128], sizes = [8, 128], strides = [1, 1]} : vector<8x512xf32> to vector<8x128xf32>
    %488 = arith.negf %487 : vector<8x128xf32>
    %489 = math.exp %488 : vector<8x128xf32>
    %cst_134 = arith.constant 1.000000e+00 : f32
    %490 = vector.broadcast %cst_134 : f32 to vector<8x128xf32>
    %491 = arith.addf %490, %489 : vector<8x128xf32>
    %492 = arith.divf %490, %491 : vector<8x128xf32>
    %493 = vector.extract_strided_slice %480 {offsets = [0, 256], sizes = [8, 128], strides = [1, 1]} : vector<8x512xf32> to vector<8x128xf32>
    %494 = math.tanh %493 : vector<8x128xf32>
    %495 = vector.extract_strided_slice %480 {offsets = [0, 384], sizes = [8, 128], strides = [1, 1]} : vector<8x512xf32> to vector<8x128xf32>
    %496 = arith.negf %495 : vector<8x128xf32>
    %497 = math.exp %496 : vector<8x128xf32>
    %cst_135 = arith.constant 1.000000e+00 : f32
    %498 = vector.broadcast %cst_135 : f32 to vector<8x128xf32>
    %499 = arith.addf %498, %497 : vector<8x128xf32>
    %500 = arith.divf %498, %499 : vector<8x128xf32>
    %501 = arith.mulf %492, %437 : vector<8x128xf32>
    %502 = arith.mulf %486, %494 : vector<8x128xf32>
    %503 = arith.addf %501, %502 : vector<8x128xf32>
    %504 = math.tanh %503 : vector<8x128xf32>
    %505 = arith.mulf %500, %504 : vector<8x128xf32>
    %506 = arith.truncf %505 : vector<8x128xf32> to vector<8x128xbf16>
    %c0_136 = arith.constant 0 : index
    %c0_137 = arith.constant 0 : index
    %507 = vector.load %arg4[%c0_136, %c0_137] : memref<128x512xbf16, #tpu.memory_space<vmem>>, vector<128x512xbf16>
    %cst_138 = arith.constant dense<0.000000e+00> : vector<8x512xf32>
    %508 = tpu.matmul %506, %507, %cst_138 {dimension_numbers = #tpu.dot_dimension_numbers<[1], [0], [0], [1], [0, 0, 1, 1], [], []>} : vector<8x128xbf16>, vector<128x512xbf16>, vector<8x512xf32> -> vector<8x512xf32>
    %509 = arith.truncf %472 : vector<8x128xf32> to vector<8x128xbf16>
    %c0_139 = arith.constant 0 : index
    %c0_140 = arith.constant 0 : index
    %510 = vector.load %arg5[%c0_139, %c0_140] : memref<128x512xbf16, #tpu.memory_space<vmem>>, vector<128x512xbf16>
    %cst_141 = arith.constant dense<0.000000e+00> : vector<8x512xf32>
    %511 = tpu.matmul %509, %510, %cst_141 {dimension_numbers = #tpu.dot_dimension_numbers<[1], [0], [0], [1], [0, 0, 1, 1], [], []>} : vector<8x128xbf16>, vector<128x512xbf16>, vector<8x512xf32> -> vector<8x512xf32>
    %512 = arith.addf %508, %511 : vector<8x512xf32>
    %513 = arith.addf %512, %9 : vector<8x512xf32>
    %514 = vector.extract_strided_slice %513 {offsets = [0, 0], sizes = [8, 128], strides = [1, 1]} : vector<8x512xf32> to vector<8x128xf32>
    %515 = arith.negf %514 : vector<8x128xf32>
    %516 = math.exp %515 : vector<8x128xf32>
    %cst_142 = arith.constant 1.000000e+00 : f32
    %517 = vector.broadcast %cst_142 : f32 to vector<8x128xf32>
    %518 = arith.addf %517, %516 : vector<8x128xf32>
    %519 = arith.divf %517, %518 : vector<8x128xf32>
    %520 = vector.extract_strided_slice %513 {offsets = [0, 128], sizes = [8, 128], strides = [1, 1]} : vector<8x512xf32> to vector<8x128xf32>
    %521 = arith.negf %520 : vector<8x128xf32>
    %522 = math.exp %521 : vector<8x128xf32>
    %cst_143 = arith.constant 1.000000e+00 : f32
    %523 = vector.broadcast %cst_143 : f32 to vector<8x128xf32>
    %524 = arith.addf %523, %522 : vector<8x128xf32>
    %525 = arith.divf %523, %524 : vector<8x128xf32>
    %526 = vector.extract_strided_slice %513 {offsets = [0, 256], sizes = [8, 128], strides = [1, 1]} : vector<8x512xf32> to vector<8x128xf32>
    %527 = math.tanh %526 : vector<8x128xf32>
    %528 = vector.extract_strided_slice %513 {offsets = [0, 384], sizes = [8, 128], strides = [1, 1]} : vector<8x512xf32> to vector<8x128xf32>
    %529 = arith.negf %528 : vector<8x128xf32>
    %530 = math.exp %529 : vector<8x128xf32>
    %cst_144 = arith.constant 1.000000e+00 : f32
    %531 = vector.broadcast %cst_144 : f32 to vector<8x128xf32>
    %532 = arith.addf %531, %530 : vector<8x128xf32>
    %533 = arith.divf %531, %532 : vector<8x128xf32>
    %534 = arith.mulf %525, %470 : vector<8x128xf32>
    %535 = arith.mulf %519, %527 : vector<8x128xf32>
    %536 = arith.addf %534, %535 : vector<8x128xf32>
    %537 = math.tanh %536 : vector<8x128xf32>
    %538 = arith.mulf %533, %537 : vector<8x128xf32>
    %c8_i32_145 = arith.constant 8 : i32
    %539 = arith.truncf %538 : vector<8x128xf32> to vector<8x128xbf16>
    %c0_146 = arith.constant 0 : index
    %c0_147 = arith.constant 0 : index
    %540 = vector.load %arg7[%c0_146, %c0_147] : memref<8x128xbf16, #tpu.memory_space<vmem>>, vector<8x128xbf16>
    tpu.vector_store %arg7[%c0_146, %c0_147], %539 {strides = array<i32>} : memref<8x128xbf16, #tpu.memory_space<vmem>>, vector<8x128xbf16>,
    return
  }
}

</mosaic_0001>

<llo_original>
// kernel: tpu_custom_call.1
$region0: #{tpu_custom_call.1}
  #allocation0 [shape = 'u32[]', space=smem, size = 0x4, offset = 0x4, fixed_abs, tag = 'smem constant byte address 0x4 - core index']
  #allocation1 [shape = 'u32[144,128]{1,0:T(1,128)}', space=vmem, size = 0x12000, scoped, tag = 'internal scratch']
  #allocation2 [shape = 'f32[64,512]{1,0:T(8,128)}', space=vmem, size = 0x20000, scoped, tag = 'scratch operand']
  %s0 = inlined_call_operand.hbm [shape: bf16[64,128], index: 0, kind: input, shape index: {}]
  %s1 = inlined_call_operand.hbm [shape: bf16[128,512], index: 1, kind: input, shape index: {}]
  %s2 = inlined_call_operand.hbm [shape: bf16[128,512], index: 2, kind: input, shape index: {}]
  %s3 = inlined_call_operand.vmem [shape: f32[1,512], index: 3, kind: input, shape index: {}]
  %s4 = inlined_call_operand.hbm [shape: bf16[128,512], index: 4, kind: input, shape index: {}]
  %s5 = inlined_call_operand.hbm [shape: bf16[128,512], index: 5, kind: input, shape index: {}]
  %s6 = inlined_call_operand.vmem [shape: f32[1,512], index: 6, kind: input, shape index: {}]
  %s7 = inlined_call_operand.hbm [shape: bf16[8,128], index: 7, kind: output, shape index: {}]
  %s8 = sld [smem:[#allocation0]]
  $region58: #{tpu_custom_call.1} parent=0
    _
  %s10 = ssub.s32 1, %s8
  %s11 = scalar_select 0, %s10, %s8
  $region1: #{tpu_custom_call.1} parent=0
    #allocation3 [shape = 'u8[16384]{0}', space=vmem, size = 0x4000, scoped, tag = 'input window, operand 0, single buffered']
    #allocation4 [shape = 's32[1]{0}', space=sflag, size = 0x4, scoped, tag = 'scoped memory for tpu_custom_call.1']
    #allocation5 [shape = 's32[1]{0}', space=sflag, size = 0x4, scoped, tag = 'scoped memory for tpu_custom_call.1']
    #allocation6 [shape = 'u8[131072]{0}', space=vmem, size = 0x20000, scoped, tag = 'input window, operand 1, single buffered']
    #allocation7 [shape = 's32[1]{0}', space=sflag, size = 0x4, scoped, tag = 'scoped memory for tpu_custom_call.1']
    #allocation8 [shape = 'u8[131072]{0}', space=vmem, size = 0x20000, scoped, tag = 'input window, operand 2, single buffered']
    #allocation9 [shape = 'u8[131072]{0}', space=vmem, size = 0x20000, scoped, tag = 'input window, operand 4, single buffered']
    #allocation10 [shape = 's32[1]{0}', space=sflag, size = 0x4, scoped, tag = 'scoped memory for tpu_custom_call.1']
    #allocation11 [shape = 'u8[131072]{0}', space=vmem, size = 0x20000, scoped, tag = 'input window, operand 5, single buffered']
    #allocation12 [shape = 'u8[2048]{0}', space=vmem, size = 0x800, scoped, tag = 'output window, operand 0, single buffered']
    %12 = vsyncpa [#allocation4], 0
    %13 = vsyncpa [#allocation7], 0
    %14 = vsyncpa [#allocation10], 0
    %15 = vsyncpa [#allocation5], 0
    // Predicated region
    $region2: #{tpu_custom_call.1} parent=1 // pred_check
      _
    $region3: #{tpu_custom_call.1} parent=1 // pred_check_branch
      %17 = sbr.rel (0) target = $region5
    $region4: #{tpu_custom_call.1} parent=1 // pred_region
      %s19 = ssub.s32 512, 512
      %20 = vsyncadd [#allocation4], %s19
      %s21 = sshll.u32 [#allocation3], 4
      %s22 = int_to_ptr.vmem [resolvable:$true] %s21
      %27 = dma.hbm_to_vmem [thread:$0]  %s0, 512, %s22, [#allocation4], 64, 64, 4
    $region5: #{tpu_custom_call.1} parent=1 // pred_fallthru
      _
    // Predicated region
    $region6: #{tpu_custom_call.1} parent=1 // pred_check
      _
    $region7: #{tpu_custom_call.1} parent=1 // pred_check_branch
      %29 = sbr.rel (0) target = $region9
    $region8: #{tpu_custom_call.1} parent=1 // pred_region
      %s31 = ssub.s32 4096, 4096
      %32 = vsyncadd [#allocation7], %s31
      %s33 = sshll.u32 [#allocation6], 4
      %s34 = int_to_ptr.vmem [resolvable:$true] %s33
      %39 = dma.hbm_to_vmem [thread:$0]  %s1, 4096, %s34, [#allocation7], 256, 256, 16
    $region9: #{tpu_custom_call.1} parent=1 // pred_fallthru
      _
    // Predicated region
    $region10: #{tpu_custom_call.1} parent=1 // pred_check
      _
    $region11: #{tpu_custom_call.1} parent=1 // pred_check_branch
      %41 = sbr.rel (0) target = $region13
    $region12: #{tpu_custom_call.1} parent=1 // pred_region
      %s43 = ssub.s32 4096, 4096
      %44 = vsyncadd [#allocation7], %s43
      %s45 = sshll.u32 [#allocation8], 4
      %s46 = int_to_ptr.vmem [resolvable:$true] %s45
      %51 = dma.hbm_to_vmem [thread:$0]  %s2, 4096, %s46, [#allocation7], 256, 256, 16
    $region13: #{tpu_custom_call.1} parent=1 // pred_fallthru
      _
    // Predicated region
    $region14: #{tpu_custom_call.1} parent=1 // pred_check
      _
    $region15: #{tpu_custom_call.1} parent=1 // pred_check_branch
      %53 = sbr.rel (0) target = $region17
    $region16: #{tpu_custom_call.1} parent=1 // pred_region
      _
    $region17: #{tpu_custom_call.1} parent=1 // pred_fallthru
      _
    // Predicated region
    $region18: #{tpu_custom_call.1} parent=1 // pred_check
      _
    $region19: #{tpu_custom_call.1} parent=1 // pred_check_branch
      %55 = sbr.rel (0) target = $region21
    $region20: #{tpu_custom_call.1} parent=1 // pred_region
      %s57 = ssub.s32 4096, 4096
      %58 = vsyncadd [#allocation10], %s57
      %s59 = sshll.u32 [#allocation9], 4
      %s60 = int_to_ptr.vmem [resolvable:$true] %s59
      %65 = dma.hbm_to_vmem [thread:$0]  %s4, 4096, %s60, [#allocation10], 256, 256, 16
    $region21: #{tpu_custom_call.1} parent=1 // pred_fallthru
      _
    // Predicated region
    $region22: #{tpu_custom_call.1} parent=1 // pred_check
      _
    $region23: #{tpu_custom_call.1} parent=1 // pred_check_branch
      %67 = sbr.rel (0) target = $region25
    $region24: #{tpu_custom_call.1} parent=1 // pred_region
      %s69 = ssub.s32 4096, 4096
      %70 = vsyncadd [#allocation10], %s69
      %s71 = sshll.u32 [#allocation11], 4
      %s72 = int_to_ptr.vmem [resolvable:$true] %s71
      %77 = dma.hbm_to_vmem [thread:$0]  %s5, 4096, %s72, [#allocation10], 256, 256, 16
    $region25: #{tpu_custom_call.1} parent=1 // pred_fallthru
      _
    // Predicated region
    $region26: #{tpu_custom_call.1} parent=1 // pred_check
      _
    $region27: #{tpu_custom_call.1} parent=1 // pred_check_branch
      %79 = sbr.rel (0) target = $region29
    $region28: #{tpu_custom_call.1} parent=1 // pred_region
      _
    $region29: #{tpu_custom_call.1} parent=1 // pred_fallthru
      _
    // Predicated region
    $region30: #{tpu_custom_call.1} parent=1 // pred_check
      _
    $region31: #{tpu_custom_call.1} parent=1 // pred_check_branch
      %81 = sbr.rel (0) target = $region33
    $region32: #{tpu_custom_call.1} parent=1 // pred_region
      %82 = dma.done [#allocation4], 512
    $region33: #{tpu_custom_call.1} parent=1 // pred_fallthru
      _
    // Predicated region
    $region34: #{tpu_custom_call.1} parent=1 // pred_check
      _
    $region35: #{tpu_custom_call.1} parent=1 // pred_check_branch
      %84 = sbr.rel (0) target = $region37
    $region36: #{tpu_custom_call.1} parent=1 // pred_region
      %85 = dma.done [#allocation7], 4096
    $region37: #{tpu_custom_call.1} parent=1 // pred_fallthru
      _
    // Predicated region
    $region38: #{tpu_custom_call.1} parent=1 // pred_check
      _
    $region39: #{tpu_custom_call.1} parent=1 // pred_check_branch
      %87 = sbr.rel (0) target = $region41
    $region40: #{tpu_custom_call.1} parent=1 // pred_region
      %88 = dma.done [#allocation7], 4096
    $region41: #{tpu_custom_call.1} parent=1 // pred_fallthru
      _
    // Predicated region
    $region42: #{tpu_custom_call.1} parent=1 // pred_check
      _
    $region43: #{tpu_custom_call.1} parent=1 // pred_check_branch
      %90 = sbr.rel (0) target = $region45
    $region44: #{tpu_custom_call.1} parent=1 // pred_region
      %91 = dma.done [#allocation10], 4096
    $region45: #{tpu_custom_call.1} parent=1 // pred_fallthru
      _
    // Predicated region
    $region46: #{tpu_custom_call.1} parent=1 // pred_check
      _
    $region47: #{tpu_custom_call.1} parent=1 // pred_check_branch
      %93 = sbr.rel (0) target = $region49
    $region48: #{tpu_custom_call.1} parent=1 // pred_region
      %94 = dma.done [#allocation10], 4096
    $region49: #{tpu_custom_call.1} parent=1 // pred_fallthru
      _
    %v96 = vld [vmem:[#allocation3] sm:$0xf]
    %v97 = vld [vmem:[#allocation3 + $0x4] sm:$0xf]
    %v98 = vld [vmem:[#allocation3 + $0x8] sm:$0xf]
    %v99 = vld [vmem:[#allocation3 + $0xc] sm:$0xf]
    %v100 = vld [vmem:[#allocation3 + $0x10] sm:$0xf]
    %v101 = vld [vmem:[#allocation3 + $0x14] sm:$0xf]
    %v102 = vld [vmem:[#allocation3 + $0x18] sm:$0xf]
    %v103 = vld [vmem:[#allocation3 + $0x1c] sm:$0xf]
    %v104 = vld [vmem:[#allocation6] sm:$0xff]
    %v105 = vld [vmem:[#allocation6 + $0x8] sm:$0xff]
    %v106 = vld [vmem:[#allocation6 + $0x10] sm:$0xff]
    %v107 = vld [vmem:[#allocation6 + $0x18] sm:$0xff]
    %v108 = vld [vmem:[#allocation6 + $0x20] sm:$0xff]
    %v109 = vld [vmem:[#allocation6 + $0x28] sm:$0xff]
    %v110 = vld [vmem:[#allocation6 + $0x30] sm:$0xff]
    %v111 = vld [vmem:[#allocation6 + $0x38] sm:$0xff]
    %v112 = vld [vmem:[#allocation6 + $0x40] sm:$0xff]
    %v113 = vld [vmem:[#allocation6 + $0x48] sm:$0xff]
    %v114 = vld [vmem:[#allocation6 + $0x50] sm:$0xff]
    %v115 = vld [vmem:[#allocation6 + $0x58] sm:$0xff]
    %v116 = vld [vmem:[#allocation6 + $0x60] sm:$0xff]
    %v117 = vld [vmem:[#allocation6 + $0x68] sm:$0xff]
    %v118 = vld [vmem:[#allocation6 + $0x70] sm:$0xff]
    %v119 = vld [vmem:[#allocation6 + $0x78] sm:$0xff]
    %v120 = vld [vmem:[#allocation6 + $0x80] sm:$0xff]
    %v121 = vld [vmem:[#allocation6 + $0x88] sm:$0xff]
    %v122 = vld [vmem:[#allocation6 + $0x90] sm:$0xff]
    %v123 = vld [vmem:[#allocation6 + $0x98] sm:$0xff]
    %v124 = vld [vmem:[#allocation6 + $0xa0] sm:$0xff]
    %v125 = vld [vmem:[#allocation6 + $0xa8] sm:$0xff]
    %v126 = vld [vmem:[#allocation6 + $0xb0] sm:$0xff]
    %v127 = vld [vmem:[#allocation6 + $0xb8] sm:$0xff]
    %v128 = vld [vmem:[#allocation6 + $0xc0] sm:$0xff]
    %v129 = vld [vmem:[#allocation6 + $0xc8] sm:$0xff]
    %v130 = vld [vmem:[#allocation6 + $0xd0] sm:$0xff]
    %v131 = vld [vmem:[#allocation6 + $0xd8] sm:$0xff]
    %v132 = vld [vmem:[#allocation6 + $0xe0] sm:$0xff]
    %v133 = vld [vmem:[#allocation6 + $0xe8] sm:$0xff]
    %v134 = vld [vmem:[#allocation6 + $0xf0] sm:$0xff]
    %v135 = vld [vmem:[#allocation6 + $0xf8] sm:$0xff]
    %v136 = vld [vmem:[%s3] sm:$0xf]
    %v138 = vlaneseq
    %v139 = vshrl.u32 %v138, 7
    %v140 = vsub.s32 0, %v139
    %v141 = vrot.slane %v136, %v140
    %v142 = vlaneseq
    %v143 = vshrl.u32 %v142, 7
    %v144 = vsub.s32 1, %v143
    %v145 = vrot.slane %v136, %v144
    %v146 = vlaneseq
    %v147 = vshrl.u32 %v146, 7
    %v148 = vsub.s32 2, %v147
    %v149 = vrot.slane %v136, %v148
    %v150 = vlaneseq
    %v151 = vshrl.u32 %v150, 7
    %v152 = vsub.s32 3, %v151
    %v153 = vrot.slane %v136, %v152
    %v166 = vunpack.c.l.b16 %v96
    %v167 = vunpack.c.l.b16 %v97
    %v168 = vunpack.c.l.b16 %v98
    %v169 = vunpack.c.l.b16 %v99
    %v170 = vunpack.c.l.b16 %v100
    %v171 = vunpack.c.l.b16 %v101
    %v172 = vunpack.c.l.b16 %v102
    %v173 = vunpack.c.l.b16 %v103
    %v174 = vpack.c.b16 %v167, %v166
    %v175 = vpack.c.b16 %v169, %v168
    %v176 = vpack.c.b16 %v171, %v170
    %v177 = vpack.c.b16 %v173, %v172
    %v214 = vunpack.c.l.b16 %v104
    %v215 = vunpack.c.h.b16 %v104
    %v216 = vunpack.c.l.b16 %v105
    %v217 = vunpack.c.h.b16 %v105
    %v218 = vunpack.c.l.b16 %v106
    %v219 = vunpack.c.h.b16 %v106
    %v220 = vunpack.c.l.b16 %v107
    %v221 = vunpack.c.h.b16 %v107
    %v222 = vunpack.c.l.b16 %v108
    %v223 = vunpack.c.h.b16 %v108
    %v224 = vunpack.c.l.b16 %v109
    %v225 = vunpack.c.h.b16 %v109
    %v226 = vunpack.c.l.b16 %v110
    %v227 = vunpack.c.h.b16 %v110
    %v228 = vunpack.c.l.b16 %v111
    %v229 = vunpack.c.h.b16 %v111
    %v230 = vunpack.c.l.b16 %v112
    %v231 = vunpack.c.h.b16 %v112
    %v232 = vunpack.c.l.b16 %v113
    %v233 = vunpack.c.h.b16 %v113
    %v234 = vunpack.c.l.b16 %v114
    %v235 = vunpack.c.h.b16 %v114
    %v236 = vunpack.c.l.b16 %v115
    %v237 = vunpack.c.h.b16 %v115
    %v238 = vunpack.c.l.b16 %v116
    %v239 = vunpack.c.h.b16 %v116
    %v240 = vunpack.c.l.b16 %v117
    %v241 = vunpack.c.h.b16 %v117
    %v242 = vunpack.c.l.b16 %v118
    %v243 = vunpack.c.h.b16 %v118
    %v244 = vunpack.c.l.b16 %v119
    %v245 = vunpack.c.h.b16 %v119
    %v246 = vunpack.c.l.b16 %v120
    %v247 = vunpack.c.h.b16 %v120
    %v248 = vunpack.c.l.b16 %v121
    %v249 = vunpack.c.h.b16 %v121
    %v250 = vunpack.c.l.b16 %v122
    %v251 = vunpack.c.h.b16 %v122
    %v252 = vunpack.c.l.b16 %v123
    %v253 = vunpack.c.h.b16 %v123
    %v254 = vunpack.c.l.b16 %v124
    %v255 = vunpack.c.h.b16 %v124
    %v256 = vunpack.c.l.b16 %v125
    %v257 = vunpack.c.h.b16 %v125
    %v258 = vunpack.c.l.b16 %v126
    %v259 = vunpack.c.h.b16 %v126
    %v260 = vunpack.c.l.b16 %v127
    %v261 = vunpack.c.h.b16 %v127
    %v262 = vunpack.c.l.b16 %v128
    %v263 = vunpack.c.h.b16 %v128
    %v264 = vunpack.c.l.b16 %v129
    %v265 = vunpack.c.h.b16 %v129
    %v266 = vunpack.c.l.b16 %v130
    %v267 = vunpack.c.h.b16 %v130
    %v268 = vunpack.c.l.b16 %v131
    %v269 = vunpack.c.h.b16 %v131
    %v270 = vunpack.c.l.b16 %v132
    %v271 = vunpack.c.h.b16 %v132
    %v272 = vunpack.c.l.b16 %v133
    %v273 = vunpack.c.h.b16 %v133
    %v274 = vunpack.c.l.b16 %v134
    %v275 = vunpack.c.h.b16 %v134
    %v276 = vunpack.c.l.b16 %v135
    %v277 = vunpack.c.h.b16 %v135
    %v278 = vpack.c.b16 %v218, %v214
    %v279 = vpack.c.b16 %v219, %v215
    %v280 = vpack.c.b16 %v220, %v216
    %v281 = vpack.c.b16 %v221, %v217
    %v282 = vpack.c.b16 %v226, %v222
    %v283 = vpack.c.b16 %v227, %v223
    %v284 = vpack.c.b16 %v228, %v224
    %v285 = vpack.c.b16 %v229, %v225
    %v286 = vpack.c.b16 %v234, %v230
    %v287 = vpack.c.b16 %v235, %v231
    %v288 = vpack.c.b16 %v236, %v232
    %v289 = vpack.c.b16 %v237, %v233
    %v290 = vpack.c.b16 %v242, %v238
    %v291 = vpack.c.b16 %v243, %v239
    %v292 = vpack.c.b16 %v244, %v240
    %v293 = vpack.c.b16 %v245, %v241
    %v294 = vpack.c.b16 %v250, %v246
    %v295 = vpack.c.b16 %v251, %v247
    %v296 = vpack.c.b16 %v252, %v248
    %v297 = vpack.c.b16 %v253, %v249
    %v298 = vpack.c.b16 %v258, %v254
    %v299 = vpack.c.b16 %v259, %v255
    %v300 = vpack.c.b16 %v260, %v256
    %v301 = vpack.c.b16 %v261, %v257
    %v302 = vpack.c.b16 %v266, %v262
    %v303 = vpack.c.b16 %v267, %v263
    %v304 = vpack.c.b16 %v268, %v264
    %v305 = vpack.c.b16 %v269, %v265
    %v306 = vpack.c.b16 %v274, %v270
    %v307 = vpack.c.b16 %v275, %v271
    %v308 = vpack.c.b16 %v276, %v272
    %v309 = vpack.c.b16 %v277, %v273
    %342 = vmatprep.subr.bf16.mxu0 %v279
    %343 = vmatpush1.bf16.msra.mxu0 %v278
    %344 = vmatprep.subr.bf16.mxu0 %v283
    %345 = vmatpush1.bf16.msra.mxu0 %v282
    %346 = vmatprep.subr.bf16.mxu0 %v287
    %347 = vmatpush1.bf16.msra.mxu0 %v286
    %348 = vmatprep.subr.bf16.mxu0 %v291
    %349 = vmatpush1.bf16.msra.mxu0 %v290
    %350 = vmatprep.subr.bf16.mxu0 %v295
    %351 = vmatpush1.bf16.msra.mxu0 %v294
    %352 = vmatprep.subr.bf16.mxu0 %v299
    %353 = vmatpush1.bf16.msra.mxu0 %v298
    %354 = vmatprep.subr.bf16.mxu0 %v303
    %355 = vmatpush1.bf16.msra.mxu0 %v302
    %356 = vmatprep.subr.bf16.mxu0 %v307
    %357 = vmatpush1.bf16.msra.mxu0 %v306
    %358 = vmatprep.subr.bf16.mxu0 0
    %359 = vmatpush1.bf16.msra.mxu0 0
    %360 = vmatprep.subr.bf16.mxu0 0
    %361 = vmatpush1.bf16.msra.mxu0 0
    %362 = vmatprep.subr.bf16.mxu0 0
    %363 = vmatpush1.bf16.msra.mxu0 0
    %364 = vmatprep.subr.bf16.mxu0 0
    %365 = vmatpush1.bf16.msra.mxu0 0
    %366 = vmatprep.subr.bf16.mxu0 0
    %367 = vmatpush1.bf16.msra.mxu0 0
    %368 = vmatprep.subr.bf16.mxu0 0
    %369 = vmatpush1.bf16.msra.mxu0 0
    %370 = vmatprep.subr.bf16.mxu0 0
    %371 = vmatpush1.bf16.msra.mxu0 0
    %372 = vmatprep.subr.bf16.mxu0 0
    %373 = vmatpush1.bf16.msra.mxu0 0
    %374 = vmatprep.mubr.bf16.mxu0 0
    %375 = vmatmul.mubr.bf16.gmra.mrb[0].mxu0 %v174
    %v376 = vpop.f32.mrb[0].mxu0
    %v377 = vadd.f32 %v141, %v376
    %v378 = vpop.f32.mrb[0].mxu0
    %v379 = vadd.f32 %v145, %v378
    %v380 = vpop.f32.mrb[0].mxu0
    %v381 = vadd.f32 %v141, %v380
    %v382 = vpop.f32.mrb[0].mxu0
    %v383 = vadd.f32 %v145, %v382
    %384 = vmatprep.mubr.bf16.mxu0 0
    %385 = vmatmul.mubr.bf16.gmra.mrb[0].mxu0 %v175
    %v386 = vpop.f32.mrb[0].mxu0
    %v387 = vadd.f32 %v141, %v386
    %v388 = vpop.f32.mrb[0].mxu0
    %v389 = vadd.f32 %v145, %v388
    %v390 = vpop.f32.mrb[0].mxu0
    %v391 = vadd.f32 %v141, %v390
    %v392 = vpop.f32.mrb[0].mxu0
    %v393 = vadd.f32 %v145, %v392
    %394 = vmatprep.mubr.bf16.mxu0 0
    %395 = vmatmul.mubr.bf16.gmra.mrb[0].mxu0 %v176
    %v396 = vpop.f32.mrb[0].mxu0
    %v397 = vadd.f32 %v141, %v396
    %v398 = vpop.f32.mrb[0].mxu0
    %v399 = vadd.f32 %v145, %v398
    %v400 = vpop.f32.mrb[0].mxu0
    %v401 = vadd.f32 %v141, %v400
    %v402 = vpop.f32.mrb[0].mxu0
    %v403 = vadd.f32 %v145, %v402
    %404 = vmatprep.mubr.bf16.mxu0 0
    %405 = vmatmul.mubr.bf16.gmra.mrb[0].mxu0 %v177
    %v406 = vpop.f32.mrb[0].mxu0
    %v407 = vadd.f32 %v141, %v406
    %v408 = vpop.f32.mrb[0].mxu0
    %v409 = vadd.f32 %v145, %v408
    %v410 = vpop.f32.mrb[0].mxu0
    %v411 = vadd.f32 %v141, %v410
    %v412 = vpop.f32.mrb[0].mxu0
    %v413 = vadd.f32 %v145, %v412
    %414 = vdwg.mxu0
    %415 = vmatprep.subr.bf16.mxu0 %v281
    %416 = vmatpush1.bf16.msra.mxu0 %v280
    %417 = vmatprep.subr.bf16.mxu0 %v285
    %418 = vmatpush1.bf16.msra.mxu0 %v284
    %419 = vmatprep.subr.bf16.mxu0 %v289
    %420 = vmatpush1.bf16.msra.mxu0 %v288
    %421 = vmatprep.subr.bf16.mxu0 %v293
    %422 = vmatpush1.bf16.msra.mxu0 %v292
    %423 = vmatprep.subr.bf16.mxu0 %v297
    %424 = vmatpush1.bf16.msra.mxu0 %v296
    %425 = vmatprep.subr.bf16.mxu0 %v301
    %426 = vmatpush1.bf16.msra.mxu0 %v300
    %427 = vmatprep.subr.bf16.mxu0 %v305
    %428 = vmatpush1.bf16.msra.mxu0 %v304
    %429 = vmatprep.subr.bf16.mxu0 %v309
    %430 = vmatpush1.bf16.msra.mxu0 %v308
    %431 = vmatprep.subr.bf16.mxu0 0
    %432 = vmatpush1.bf16.msra.mxu0 0
    %433 = vmatprep.subr.bf16.mxu0 0
    %434 = vmatpush1.bf16.msra.mxu0 0
    %435 = vmatprep.subr.bf16.mxu0 0
    %436 = vmatpush1.bf16.msra.mxu0 0
    %437 = vmatprep.subr.bf16.mxu0 0
    %438 = vmatpush1.bf16.msra.mxu0 0
    %439 = vmatprep.subr.bf16.mxu0 0
    %440 = vmatpush1.bf16.msra.mxu0 0
    %441 = vmatprep.subr.bf16.mxu0 0
    %442 = vmatpush1.bf16.msra.mxu0 0
    %443 = vmatprep.subr.bf16.mxu0 0
    %444 = vmatpush1.bf16.msra.mxu0 0
    %445 = vmatprep.subr.bf16.mxu0 0
    %446 = vmatpush1.bf16.msra.mxu0 0
    %447 = vmatprep.mubr.bf16.mxu0 0
    %448 = vmatmul.mubr.bf16.gmra.mrb[0].mxu0 %v174
    %v449 = vpop.f32.mrb[0].mxu0
    %v450 = vadd.f32 %v149, %v449
    %v451 = vpop.f32.mrb[0].mxu0
    %v452 = vadd.f32 %v153, %v451
    %v453 = vpop.f32.mrb[0].mxu0
    %v454 = vadd.f32 %v149, %v453
    %v455 = vpop.f32.mrb[0].mxu0
    %v456 = vadd.f32 %v153, %v455
    %457 = vmatprep.mubr.bf16.mxu0 0
    %458 = vmatmul.mubr.bf16.gmra.mrb[0].mxu0 %v175
    %v459 = vpop.f32.mrb[0].mxu0
    %v460 = vadd.f32 %v149, %v459
    %v461 = vpop.f32.mrb[0].mxu0
    %v462 = vadd.f32 %v153, %v461
    %v463 = vpop.f32.mrb[0].mxu0
    %v464 = vadd.f32 %v149, %v463
    %v465 = vpop.f32.mrb[0].mxu0
    %v466 = vadd.f32 %v153, %v465
    %467 = vmatprep.mubr.bf16.mxu0 0
    %468 = vmatmul.mubr.bf16.gmra.mrb[0].mxu0 %v176
    %v469 = vpop.f32.mrb[0].mxu0
    %v470 = vadd.f32 %v149, %v469
    %v471 = vpop.f32.mrb[0].mxu0
    %v472 = vadd.f32 %v153, %v471
    %v473 = vpop.f32.mrb[0].mxu0
    %v474 = vadd.f32 %v149, %v473
    %v475 = vpop.f32.mrb[0].mxu0
    %v476 = vadd.f32 %v153, %v475
    %477 = vmatprep.mubr.bf16.mxu0 0
    %478 = vmatmul.mubr.bf16.gmra.mrb[0].mxu0 %v177
    %v479 = vpop.f32.mrb[0].mxu0
    %v480 = vadd.f32 %v149, %v479
    %v481 = vpop.f32.mrb[0].mxu0
    %v482 = vadd.f32 %v153, %v481
    %v483 = vpop.f32.mrb[0].mxu0
    %v484 = vadd.f32 %v149, %v483
    %v485 = vpop.f32.mrb[0].mxu0
    %v486 = vadd.f32 %v153, %v485
    %487 = vdwg.mxu0
    %488 = vst [vmem:[#allocation2] sm:$0xff] %v377
    %489 = vst [vmem:[#allocation2 + $0x8] sm:$0xff] %v379
    %490 = vst [vmem:[#allocation2 + $0x10] sm:$0xff] %v450
    %491 = vst [vmem:[#allocation2 + $0x18] sm:$0xff] %v452
    %492 = vst [vmem:[#allocation2 + $0x20] sm:$0xff] %v381
    %493 = vst [vmem:[#allocation2 + $0x28] sm:$0xff] %v383
    %494 = vst [vmem:[#allocation2 + $0x30] sm:$0xff] %v454
    %495 = vst [vmem:[#allocation2 + $0x38] sm:$0xff] %v456
    %496 = vst [vmem:[#allocation2 + $0x40] sm:$0xff] %v387
    %497 = vst [vmem:[#allocation2 + $0x48] sm:$0xff] %v389
    %498 = vst [vmem:[#allocation2 + $0x50] sm:$0xff] %v460
    %499 = vst [vmem:[#allocation2 + $0x58] sm:$0xff] %v462
    %500 = vst [vmem:[#allocation2 + $0x60] sm:$0xff] %v391
    %501 = vst [vmem:[#allocation2 + $0x68] sm:$0xff] %v393
    %502 = vst [vmem:[#allocation2 + $0x70] sm:$0xff] %v464
    %503 = vst [vmem:[#allocation2 + $0x78] sm:$0xff] %v466
    %504 = vst [vmem:[#allocation2 + $0x80] sm:$0xff] %v397
    %505 = vst [vmem:[#allocation2 + $0x88] sm:$0xff] %v399
    %506 = vst [vmem:[#allocation2 + $0x90] sm:$0xff] %v470
    %507 = vst [vmem:[#allocation2 + $0x98] sm:$0xff] %v472
    %508 = vst [vmem:[#allocation2 + $0xa0] sm:$0xff] %v401
    %509 = vst [vmem:[#allocation2 + $0xa8] sm:$0xff] %v403
    %510 = vst [vmem:[#allocation2 + $0xb0] sm:$0xff] %v474
    %511 = vst [vmem:[#allocation2 + $0xb8] sm:$0xff] %v476
    %512 = vst [vmem:[#allocation2 + $0xc0] sm:$0xff] %v407
    %513 = vst [vmem:[#allocation2 + $0xc8] sm:$0xff] %v409
    %514 = vst [vmem:[#allocation2 + $0xd0] sm:$0xff] %v480
    %515 = vst [vmem:[#allocation2 + $0xd8] sm:$0xff] %v482
    %516 = vst [vmem:[#allocation2 + $0xe0] sm:$0xff] %v411
    %517 = vst [vmem:[#allocation2 + $0xe8] sm:$0xff] %v413
    %518 = vst [vmem:[#allocation2 + $0xf0] sm:$0xff] %v484
    %519 = vst [vmem:[#allocation2 + $0xf8] sm:$0xff] %v486
    %v520 = vld [vmem:[%s6] sm:$0xf]
    %v522 = vlaneseq
    %v523 = vshrl.u32 %v522, 7
    %v524 = vsub.s32 0, %v523
    %v525 = vrot.slane %v520, %v524
    %v526 = vlaneseq
    %v527 = vshrl.u32 %v526, 7
    %v528 = vsub.s32 1, %v527
    %v529 = vrot.slane %v520, %v528
    %v530 = vlaneseq
    %v531 = vshrl.u32 %v530, 7
    %v532 = vsub.s32 2, %v531
    %v533 = vrot.slane %v520, %v532
    %v534 = vlaneseq
    %v535 = vshrl.u32 %v534, 7
    %v536 = vsub.s32 3, %v535
    %v537 = vrot.slane %v520, %v536
    %s542 = smul.u32 0, 4
    %s543 = smul.addr %s542, 8
    %s544 = scalar_lea.vmem [#allocation2], %s543
    %v545 = vld [vmem:[%s544] sm:$0xff]
    %v546 = vld [vmem:[%s544 + $0x8] sm:$0xff]
    %v547 = vld [vmem:[%s544 + $0x10] sm:$0xff]
    %v548 = vld [vmem:[%s544 + $0x18] sm:$0xff]
    %v549 = vld [vmem:[#allocation8] sm:$0xff]
    %v550 = vld [vmem:[#allocation8 + $0x8] sm:$0xff]
    %v551 = vld [vmem:[#allocation8 + $0x10] sm:$0xff]
    %v552 = vld [vmem:[#allocation8 + $0x18] sm:$0xff]
    %v553 = vld [vmem:[#allocation8 + $0x20] sm:$0xff]
    %v554 = vld [vmem:[#allocation8 + $0x28] sm:$0xff]
    %v555 = vld [vmem:[#allocation8 + $0x30] sm:$0xff]
    %v556 = vld [vmem:[#allocation8 + $0x38] sm:$0xff]
    %v557 = vld [vmem:[#allocation8 + $0x40] sm:$0xff]
    %v558 = vld [vmem:[#allocation8 + $0x48] sm:$0xff]
    %v559 = vld [vmem:[#allocation8 + $0x50] sm:$0xff]
    %v560 = vld [vmem:[#allocation8 + $0x58] sm:$0xff]
    %v561 = vld [vmem:[#allocation8 + $0x60] sm:$0xff]
    %v562 = vld [vmem:[#allocation8 + $0x68] sm:$0xff]
    %v563 = vld [vmem:[#allocation8 + $0x70] sm:$0xff]
    %v564 = vld [vmem:[#allocation8 + $0x78] sm:$0xff]
    %v565 = vld [vmem:[#allocation8 + $0x80] sm:$0xff]
    %v566 = vld [vmem:[#allocation8 + $0x88] sm:$0xff]
    %v567 = vld [vmem:[#allocation8 + $0x90] sm:$0xff]
    %v568 = vld [vmem:[#allocation8 + $0x98] sm:$0xff]
    %v569 = vld [vmem:[#allocation8 + $0xa0] sm:$0xff]
    %v570 = vld [vmem:[#allocation8 + $0xa8] sm:$0xff]
    %v571 = vld [vmem:[#allocation8 + $0xb0] sm:$0xff]
    %v572 = vld [vmem:[#allocation8 + $0xb8] sm:$0xff]
    %v573 = vld [vmem:[#allocation8 + $0xc0] sm:$0xff]
    %v574 = vld [vmem:[#allocation8 + $0xc8] sm:$0xff]
    %v575 = vld [vmem:[#allocation8 + $0xd0] sm:$0xff]
    %v576 = vld [vmem:[#allocation8 + $0xd8] sm:$0xff]
    %v577 = vld [vmem:[#allocation8 + $0xe0] sm:$0xff]
    %v578 = vld [vmem:[#allocation8 + $0xe8] sm:$0xff]
    %v579 = vld [vmem:[#allocation8 + $0xf0] sm:$0xff]
    %v580 = vld [vmem:[#allocation8 + $0xf8] sm:$0xff]
    %v613 = vunpack.c.l.b16 %v549
    %v614 = vunpack.c.h.b16 %v549
    %v615 = vunpack.c.l.b16 %v550
    %v616 = vunpack.c.h.b16 %v550
    %v617 = vunpack.c.l.b16 %v551
    %v618 = vunpack.c.h.b16 %v551
    %v619 = vunpack.c.l.b16 %v552
    %v620 = vunpack.c.h.b16 %v552
    %v621 = vunpack.c.l.b16 %v553
    %v622 = vunpack.c.h.b16 %v553
    %v623 = vunpack.c.l.b16 %v554
    %v624 = vunpack.c.h.b16 %v554
    %v625 = vunpack.c.l.b16 %v555
    %v626 = vunpack.c.h.b16 %v555
    %v627 = vunpack.c.l.b16 %v556
    %v628 = vunpack.c.h.b16 %v556
    %v629 = vunpack.c.l.b16 %v557
    %v630 = vunpack.c.h.b16 %v557
    %v631 = vunpack.c.l.b16 %v558
    %v632 = vunpack.c.h.b16 %v558
    %v633 = vunpack.c.l.b16 %v559
    %v634 = vunpack.c.h.b16 %v559
    %v635 = vunpack.c.l.b16 %v560
    %v636 = vunpack.c.h.b16 %v560
    %v637 = vunpack.c.l.b16 %v561
    %v638 = vunpack.c.h.b16 %v561
    %v639 = vunpack.c.l.b16 %v562
    %v640 = vunpack.c.h.b16 %v562
    %v641 = vunpack.c.l.b16 %v563
    %v642 = vunpack.c.h.b16 %v563
    %v643 = vunpack.c.l.b16 %v564
    %v644 = vunpack.c.h.b16 %v564
    %v645 = vunpack.c.l.b16 %v565
    %v646 = vunpack.c.h.b16 %v565
    %v647 = vunpack.c.l.b16 %v566
    %v648 = vunpack.c.h.b16 %v566
    %v649 = vunpack.c.l.b16 %v567
    %v650 = vunpack.c.h.b16 %v567
    %v651 = vunpack.c.l.b16 %v568
    %v652 = vunpack.c.h.b16 %v568
    %v653 = vunpack.c.l.b16 %v569
    %v654 = vunpack.c.h.b16 %v569
    %v655 = vunpack.c.l.b16 %v570
    %v656 = vunpack.c.h.b16 %v570
    %v657 = vunpack.c.l.b16 %v571
    %v658 = vunpack.c.h.b16 %v571
    %v659 = vunpack.c.l.b16 %v572
    %v660 = vunpack.c.h.b16 %v572
    %v661 = vunpack.c.l.b16 %v573
    %v662 = vunpack.c.h.b16 %v573
    %v663 = vunpack.c.l.b16 %v574
    %v664 = vunpack.c.h.b16 %v574
    %v665 = vunpack.c.l.b16 %v575
    %v666 = vunpack.c.h.b16 %v575
    %v667 = vunpack.c.l.b16 %v576
    %v668 = vunpack.c.h.b16 %v576
    %v669 = vunpack.c.l.b16 %v577
    %v670 = vunpack.c.h.b16 %v577
    %v671 = vunpack.c.l.b16 %v578
    %v672 = vunpack.c.h.b16 %v578
    %v673 = vunpack.c.l.b16 %v579
    %v674 = vunpack.c.h.b16 %v579
    %v675 = vunpack.c.l.b16 %v580
    %v676 = vunpack.c.h.b16 %v580
    %v677 = vpack.c.b16 %v617, %v613
    %v678 = vpack.c.b16 %v618, %v614
    %v679 = vpack.c.b16 %v619, %v615
    %v680 = vpack.c.b16 %v620, %v616
    %v681 = vpack.c.b16 %v625, %v621
    %v682 = vpack.c.b16 %v626, %v622
    %v683 = vpack.c.b16 %v627, %v623
    %v684 = vpack.c.b16 %v628, %v624
    %v685 = vpack.c.b16 %v633, %v629
    %v686 = vpack.c.b16 %v634, %v630
    %v687 = vpack.c.b16 %v635, %v631
    %v688 = vpack.c.b16 %v636, %v632
    %v689 = vpack.c.b16 %v641, %v637
    %v690 = vpack.c.b16 %v642, %v638
    %v691 = vpack.c.b16 %v643, %v639
    %v692 = vpack.c.b16 %v644, %v640
    %v693 = vpack.c.b16 %v649, %v645
    %v694 = vpack.c.b16 %v650, %v646
    %v695 = vpack.c.b16 %v651, %v647
    %v696 = vpack.c.b16 %v652, %v648
    %v697 = vpack.c.b16 %v657, %v653
    %v698 = vpack.c.b16 %v658, %v654
    %v699 = vpack.c.b16 %v659, %v655
    %v700 = vpack.c.b16 %v660, %v656
    %v701 = vpack.c.b16 %v665, %v661
    %v702 = vpack.c.b16 %v666, %v662
    %v703 = vpack.c.b16 %v667, %v663
    %v704 = vpack.c.b16 %v668, %v664
    %v705 = vpack.c.b16 %v673, %v669
    %v706 = vpack.c.b16 %v674, %v670
    %v707 = vpack.c.b16 %v675, %v671
    %v708 = vpack.c.b16 %v676, %v672
    %741 = vmatprep.subr.bf16.mxu0 %v678
    %742 = vmatpush1.bf16.msra.mxu0 %v677
    %743 = vmatprep.subr.bf16.mxu0 %v682
    %744 = vmatpush1.bf16.msra.mxu0 %v681
    %745 = vmatprep.subr.bf16.mxu0 %v686
    %746 = vmatpush1.bf16.msra.mxu0 %v685
    %747 = vmatprep.subr.bf16.mxu0 %v690
    %748 = vmatpush1.bf16.msra.mxu0 %v689
    %749 = vmatprep.subr.bf16.mxu0 %v694
    %750 = vmatpush1.bf16.msra.mxu0 %v693
    %751 = vmatprep.subr.bf16.mxu0 %v698
    %752 = vmatpush1.bf16.msra.mxu0 %v697
    %753 = vmatprep.subr.bf16.mxu0 %v702
    %754 = vmatpush1.bf16.msra.mxu0 %v701
    %755 = vmatprep.subr.bf16.mxu0 %v706
    %756 = vmatpush1.bf16.msra.mxu0 %v705
    %757 = vmatprep.subr.bf16.mxu0 0
    %758 = vmatpush1.bf16.msra.mxu0 0
    %759 = vmatprep.subr.bf16.mxu0 0
    %760 = vmatpush1.bf16.msra.mxu0 0
    %761 = vmatprep.subr.bf16.mxu0 0
    %762 = vmatpush1.bf16.msra.mxu0 0
    %763 = vmatprep.subr.bf16.mxu0 0
    %764 = vmatpush1.bf16.msra.mxu0 0
    %765 = vmatprep.subr.bf16.mxu0 0
    %766 = vmatpush1.bf16.msra.mxu0 0
    %767 = vmatprep.subr.bf16.mxu0 0
    %768 = vmatpush1.bf16.msra.mxu0 0
    %769 = vmatprep.subr.bf16.mxu0 0
    %770 = vmatpush1.bf16.msra.mxu0 0
    %771 = vmatprep.subr.bf16.mxu0 0
    %772 = vmatpush1.bf16.msra.mxu0 0
    %773 = vmatprep.mubr.bf16.mxu0 0
    %774 = vmatmul.mubr.bf16.gmra.mrb[0].mxu0 0
    %v775 = vpop.f32.mrb[0].mxu0
    %v776 = vadd.f32 0.0, %v775
    %v777 = vpop.f32.mrb[0].mxu0
    %v778 = vadd.f32 0.0, %v777
    %v779 = vpop.f32.mrb[0].mxu0
    %v780 = vpop.f32.mrb[0].mxu0
    %781 = vdwg.mxu0
    %782 = vmatprep.subr.bf16.mxu0 %v680
    %783 = vmatpush1.bf16.msra.mxu0 %v679
    %784 = vmatprep.subr.bf16.mxu0 %v684
    %785 = vmatpush1.bf16.msra.mxu0 %v683
    %786 = vmatprep.subr.bf16.mxu0 %v688
    %787 = vmatpush1.bf16.msra.mxu0 %v687
    %788 = vmatprep.subr.bf16.mxu0 %v692
    %789 = vmatpush1.bf16.msra.mxu0 %v691
    %790 = vmatprep.subr.bf16.mxu0 %v696
    %791 = vmatpush1.bf16.msra.mxu0 %v695
    %792 = vmatprep.subr.bf16.mxu0 %v700
    %793 = vmatpush1.bf16.msra.mxu0 %v699
    %794 = vmatprep.subr.bf16.mxu0 %v704
    %795 = vmatpush1.bf16.msra.mxu0 %v703
    %796 = vmatprep.subr.bf16.mxu0 %v708
    %797 = vmatpush1.bf16.msra.mxu0 %v707
    %798 = vmatprep.subr.bf16.mxu0 0
    %799 = vmatpush1.bf16.msra.mxu0 0
    %800 = vmatprep.subr.bf16.mxu0 0
    %801 = vmatpush1.bf16.msra.mxu0 0
    %802 = vmatprep.subr.bf16.mxu0 0
    %803 = vmatpush1.bf16.msra.mxu0 0
    %804 = vmatprep.subr.bf16.mxu0 0
    %805 = vmatpush1.bf16.msra.mxu0 0
    %806 = vmatprep.subr.bf16.mxu0 0
    %807 = vmatpush1.bf16.msra.mxu0 0
    %808 = vmatprep.subr.bf16.mxu0 0
    %809 = vmatpush1.bf16.msra.mxu0 0
    %810 = vmatprep.subr.bf16.mxu0 0
    %811 = vmatpush1.bf16.msra.mxu0 0
    %812 = vmatprep.subr.bf16.mxu0 0
    %813 = vmatpush1.bf16.msra.mxu0 0
    %814 = vmatprep.mubr.bf16.mxu0 0
    %815 = vmatmul.mubr.bf16.gmra.mrb[0].mxu0 0
    %v816 = vpop.f32.mrb[0].mxu0
    %v817 = vadd.f32 0.0, %v816
    %v818 = vpop.f32.mrb[0].mxu0
    %v819 = vadd.f32 0.0, %v818
    %v820 = vpop.f32.mrb[0].mxu0
    %v821 = vpop.f32.mrb[0].mxu0
    %822 = vdwg.mxu0
    %v823 = vadd.f32 %v545, %v776
    %v824 = vadd.f32 %v546, %v778
    %v825 = vadd.f32 %v547, %v817
    %v826 = vadd.f32 %v548, %v819
    %v827 = vxor.u32 %v823, 2147483648
    %v828 = vmul.f32 %v827, 1.442695
    %v829 = vpow.pop %v828
    %v830 = vadd.f32 %v829, 1.0
    %v831 = vrcp.pop %v830
    %v832 = vmul.f32 1.0, %v831
    %v833 = vxor.u32 %v824, 2147483648
    %v834 = vmul.f32 %v833, 1.442695
    %v835 = vpow.pop %v834
    %v836 = vadd.f32 %v835, 1.0
    %v837 = vrcp.pop %v836
    %v838 = vmul.f32 1.0, %v837
    %v839 = vtanh.pop %v825
    %v840 = vxor.u32 %v826, 2147483648
    %v841 = vmul.f32 %v840, 1.442695
    %v842 = vpow.pop %v841
    %v843 = vadd.f32 %v842, 1.0
    %v844 = vrcp.pop %v843
    %v845 = vmul.f32 1.0, %v844
    %v846 = vmul.f32 %v838, 0.0
    %v847 = vmul.f32 %v832, %v839
    %v848 = vadd.f32 %v846, %v847
    %v849 = vtanh.pop %v848
    %v850 = vmul.f32 %v845, %v849
    %v851 = vpack.c.bf16 %v850, %v850
    %v852 = vld [vmem:[#allocation9] sm:$0xff]
    %v853 = vld [vmem:[#allocation9 + $0x8] sm:$0xff]
    %v854 = vld [vmem:[#allocation9 + $0x10] sm:$0xff]
    %v855 = vld [vmem:[#allocation9 + $0x18] sm:$0xff]
    %v856 = vld [vmem:[#allocation9 + $0x20] sm:$0xff]
    %v857 = vld [vmem:[#allocation9 + $0x28] sm:$0xff]
    %v858 = vld [vmem:[#allocation9 + $0x30] sm:$0xff]
    %v859 = vld [vmem:[#allocation9 + $0x38] sm:$0xff]
    %v860 = vld [vmem:[#allocation9 + $0x40] sm:$0xff]
    %v861 = vld [vmem:[#allocation9 + $0x48] sm:$0xff]
    %v862 = vld [vmem:[#allocation9 + $0x50] sm:$0xff]
    %v863 = vld [vmem:[#allocation9 + $0x58] sm:$0xff]
    %v864 = vld [vmem:[#allocation9 + $0x60] sm:$0xff]
    %v865 = vld [vmem:[#allocation9 + $0x68] sm:$0xff]
    %v866 = vld [vmem:[#allocation9 + $0x70] sm:$0xff]
    %v867 = vld [vmem:[#allocation9 + $0x78] sm:$0xff]
    %v868 = vld [vmem:[#allocation9 + $0x80] sm:$0xff]
    %v869 = vld [vmem:[#allocation9 + $0x88] sm:$0xff]
    %v870 = vld [vmem:[#allocation9 + $0x90] sm:$0xff]
    %v871 = vld [vmem:[#allocation9 + $0x98] sm:$0xff]
    %v872 = vld [vmem:[#allocation9 + $0xa0] sm:$0xff]
    %v873 = vld [vmem:[#allocation9 + $0xa8] sm:$0xff]
    %v874 = vld [vmem:[#allocation9 + $0xb0] sm:$0xff]
    %v875 = vld [vmem:[#allocation9 + $0xb8] sm:$0xff]
    %v876 = vld [vmem:[#allocation9 + $0xc0] sm:$0xff]
    %v877 = vld [vmem:[#allocation9 + $0xc8] sm:$0xff]
    %v878 = vld [vmem:[#allocation9 + $0xd0] sm:$0xff]
    %v879 = vld [vmem:[#allocation9 + $0xd8] sm:$0xff]
    %v880 = vld [vmem:[#allocation9 + $0xe0] sm:$0xff]
    %v881 = vld [vmem:[#allocation9 + $0xe8] sm:$0xff]
    %v882 = vld [vmem:[#allocation9 + $0xf0] sm:$0xff]
    %v883 = vld [vmem:[#allocation9 + $0xf8] sm:$0xff]
    %v884 = vld [vmem:[#allocation11] sm:$0xff]
    %v885 = vld [vmem:[#allocation11 + $0x8] sm:$0xff]
    %v886 = vld [vmem:[#allocation11 + $0x10] sm:$0xff]
    %v887 = vld [vmem:[#allocation11 + $0x18] sm:$0xff]
    %v888 = vld [vmem:[#allocation11 + $0x20] sm:$0xff]
    %v889 = vld [vmem:[#allocation11 + $0x28] sm:$0xff]
    %v890 = vld [vmem:[#allocation11 + $0x30] sm:$0xff]
    %v891 = vld [vmem:[#allocation11 + $0x38] sm:$0xff]
    %v892 = vld [vmem:[#allocation11 + $0x40] sm:$0xff]
    %v893 = vld [vmem:[#allocation11 + $0x48] sm:$0xff]
    %v894 = vld [vmem:[#allocation11 + $0x50] sm:$0xff]
    %v895 = vld [vmem:[#allocation11 + $0x58] sm:$0xff]
    %v896 = vld [vmem:[#allocation11 + $0x60] sm:$0xff]
    %v897 = vld [vmem:[#allocation11 + $0x68] sm:$0xff]
    %v898 = vld [vmem:[#allocation11 + $0x70] sm:$0xff]
    %v899 = vld [vmem:[#allocation11 + $0x78] sm:$0xff]
    %v900 = vld [vmem:[#allocation11 + $0x80] sm:$0xff]
    %v901 = vld [vmem:[#allocation11 + $0x88] sm:$0xff]
    %v902 = vld [vmem:[#allocation11 + $0x90] sm:$0xff]
    %v903 = vld [vmem:[#allocation11 + $0x98] sm:$0xff]
    %v904 = vld [vmem:[#allocation11 + $0xa0] sm:$0xff]
    %v905 = vld [vmem:[#allocation11 + $0xa8] sm:$0xff]
    %v906 = vld [vmem:[#allocation11 + $0xb0] sm:$0xff]
    %v907 = vld [vmem:[#allocation11 + $0xb8] sm:$0xff]
    %v908 = vld [vmem:[#allocation11 + $0xc0] sm:$0xff]
    %v909 = vld [vmem:[#allocation11 + $0xc8] sm:$0xff]
    %v910 = vld [vmem:[#allocation11 + $0xd0] sm:$0xff]
    %v911 = vld [vmem:[#allocation11 + $0xd8] sm:$0xff]
    %v912 = vld [vmem:[#allocation11 + $0xe0] sm:$0xff]
    %v913 = vld [vmem:[#allocation11 + $0xe8] sm:$0xff]
    %v914 = vld [vmem:[#allocation11 + $0xf0] sm:$0xff]
    %v915 = vld [vmem:[#allocation11 + $0xf8] sm:$0xff]
    %v948 = vunpack.c.l.b16 %v884
    %v949 = vunpack.c.h.b16 %v884
    %v950 = vunpack.c.l.b16 %v885
    %v951 = vunpack.c.h.b16 %v885
    %v952 = vunpack.c.l.b16 %v886
    %v953 = vunpack.c.h.b16 %v886
    %v954 = vunpack.c.l.b16 %v887
    %v955 = vunpack.c.h.b16 %v887
    %v956 = vunpack.c.l.b16 %v888
    %v957 = vunpack.c.h.b16 %v888
    %v958 = vunpack.c.l.b16 %v889
    %v959 = vunpack.c.h.b16 %v889
    %v960 = vunpack.c.l.b16 %v890
    %v961 = vunpack.c.h.b16 %v890
    %v962 = vunpack.c.l.b16 %v891
    %v963 = vunpack.c.h.b16 %v891
    %v964 = vunpack.c.l.b16 %v892
    %v965 = vunpack.c.h.b16 %v892
    %v966 = vunpack.c.l.b16 %v893
    %v967 = vunpack.c.h.b16 %v893
    %v968 = vunpack.c.l.b16 %v894
    %v969 = vunpack.c.h.b16 %v894
    %v970 = vunpack.c.l.b16 %v895
    %v971 = vunpack.c.h.b16 %v895
    %v972 = vunpack.c.l.b16 %v896
    %v973 = vunpack.c.h.b16 %v896
    %v974 = vunpack.c.l.b16 %v897
    %v975 = vunpack.c.h.b16 %v897
    %v976 = vunpack.c.l.b16 %v898
    %v977 = vunpack.c.h.b16 %v898
    %v978 = vunpack.c.l.b16 %v899
    %v979 = vunpack.c.h.b16 %v899
    %v980 = vunpack.c.l.b16 %v900
    %v981 = vunpack.c.h.b16 %v900
    %v982 = vunpack.c.l.b16 %v901
    %v983 = vunpack.c.h.b16 %v901
    %v984 = vunpack.c.l.b16 %v902
    %v985 = vunpack.c.h.b16 %v902
    %v986 = vunpack.c.l.b16 %v903
    %v987 = vunpack.c.h.b16 %v903
    %v988 = vunpack.c.l.b16 %v904
    %v989 = vunpack.c.h.b16 %v904
    %v990 = vunpack.c.l.b16 %v905
    %v991 = vunpack.c.h.b16 %v905
    %v992 = vunpack.c.l.b16 %v906
    %v993 = vunpack.c.h.b16 %v906
    %v994 = vunpack.c.l.b16 %v907
    %v995 = vunpack.c.h.b16 %v907
    %v996 = vunpack.c.l.b16 %v908
    %v997 = vunpack.c.h.b16 %v908
    %v998 = vunpack.c.l.b16 %v909
    %v999 = vunpack.c.h.b16 %v909
    %v1000 = vunpack.c.l.b16 %v910
    %v1001 = vunpack.c.h.b16 %v910
    %v1002 = vunpack.c.l.b16 %v911
    %v1003 = vunpack.c.h.b16 %v911
    %v1004 = vunpack.c.l.b16 %v912
    %v1005 = vunpack.c.h.b16 %v912
    %v1006 = vunpack.c.l.b16 %v913
    %v1007 = vunpack.c.h.b16 %v913
    %v1008 = vunpack.c.l.b16 %v914
    %v1009 = vunpack.c.h.b16 %v914
    %v1010 = vunpack.c.l.b16 %v915
    %v1011 = vunpack.c.h.b16 %v915
    %v1012 = vpack.c.b16 %v952, %v948
    %v1013 = vpack.c.b16 %v953, %v949
    %v1014 = vpack.c.b16 %v954, %v950
    %v1015 = vpack.c.b16 %v955, %v951
    %v1016 = vpack.c.b16 %v960, %v956
    %v1017 = vpack.c.b16 %v961, %v957
    %v1018 = vpack.c.b16 %v962, %v958
    %v1019 = vpack.c.b16 %v963, %v959
    %v1020 = vpack.c.b16 %v968, %v964
    %v1021 = vpack.c.b16 %v969, %v965
    %v1022 = vpack.c.b16 %v970, %v966
    %v1023 = vpack.c.b16 %v971, %v967
    %v1024 = vpack.c.b16 %v976, %v972
    %v1025 = vpack.c.b16 %v977, %v973
    %v1026 = vpack.c.b16 %v978, %v974
    %v1027 = vpack.c.b16 %v979, %v975
    %v1028 = vpack.c.b16 %v984, %v980
    %v1029 = vpack.c.b16 %v985, %v981
    %v1030 = vpack.c.b16 %v986, %v982
    %v1031 = vpack.c.b16 %v987, %v983
    %v1032 = vpack.c.b16 %v992, %v988
    %v1033 = vpack.c.b16 %v993, %v989
    %v1034 = vpack.c.b16 %v994, %v990
    %v1035 = vpack.c.b16 %v995, %v991
    %v1036 = vpack.c.b16 %v1000, %v996
    %v1037 = vpack.c.b16 %v1001, %v997
    %v1038 = vpack.c.b16 %v1002, %v998
    %v1039 = vpack.c.b16 %v1003, %v999
    %v1040 = vpack.c.b16 %v1008, %v1004
    %v1041 = vpack.c.b16 %v1009, %v1005
    %v1042 = vpack.c.b16 %v1010, %v1006
    %v1043 = vpack.c.b16 %v1011, %v1007
    %1076 = vmatprep.subr.bf16.mxu0 %v1013
    %1077 = vmatpush1.bf16.msra.mxu0 %v1012
    %1078 = vmatprep.subr.bf16.mxu0 %v1017
    %1079 = vmatpush1.bf16.msra.mxu0 %v1016
    %1080 = vmatprep.subr.bf16.mxu0 %v1021
    %1081 = vmatpush1.bf16.msra.mxu0 %v1020
    %1082 = vmatprep.subr.bf16.mxu0 %v1025
    %1083 = vmatpush1.bf16.msra.mxu0 %v1024
    %1084 = vmatprep.subr.bf16.mxu0 %v1029
    %1085 = vmatpush1.bf16.msra.mxu0 %v1028
    %1086 = vmatprep.subr.bf16.mxu0 %v1033
    %1087 = vmatpush1.bf16.msra.mxu0 %v1032
    %1088 = vmatprep.subr.bf16.mxu0 %v1037
    %1089 = vmatpush1.bf16.msra.mxu0 %v1036
    %1090 = vmatprep.subr.bf16.mxu0 %v1041
    %1091 = vmatpush1.bf16.msra.mxu0 %v1040
    %1092 = vmatprep.subr.bf16.mxu0 0
    %1093 = vmatpush1.bf16.msra.mxu0 0
    %1094 = vmatprep.subr.bf16.mxu0 0
    %1095 = vmatpush1.bf16.msra.mxu0 0
    %1096 = vmatprep.subr.bf16.mxu0 0
    %1097 = vmatpush1.bf16.msra.mxu0 0
    %1098 = vmatprep.subr.bf16.mxu0 0
    %1099 = vmatpush1.bf16.msra.mxu0 0
    %1100 = vmatprep.subr.bf16.mxu0 0
    %1101 = vmatpush1.bf16.msra.mxu0 0
    %1102 = vmatprep.subr.bf16.mxu0 0
    %1103 = vmatpush1.bf16.msra.mxu0 0
    %1104 = vmatprep.subr.bf16.mxu0 0
    %1105 = vmatpush1.bf16.msra.mxu0 0
    %1106 = vmatprep.subr.bf16.mxu0 0
    %1107 = vmatpush1.bf16.msra.mxu0 0
    %1108 = vmatprep.mubr.bf16.mxu0 0
    %1109 = vmatmul.mubr.bf16.gmra.mrb[0].mxu0 0
    %v1110 = vpop.f32.mrb[0].mxu0
    %v1111 = vadd.f32 0.0, %v1110
    %v1112 = vpop.f32.mrb[0].mxu0
    %v1113 = vadd.f32 0.0, %v1112
    %v1114 = vpop.f32.mrb[0].mxu0
    %v1115 = vpop.f32.mrb[0].mxu0
    %1116 = vdwg.mxu0
    %1117 = vmatprep.subr.bf16.mxu0 %v1015
    %1118 = vmatpush1.bf16.msra.mxu0 %v1014
    %1119 = vmatprep.subr.bf16.mxu0 %v1019
    %1120 = vmatpush1.bf16.msra.mxu0 %v1018
    %1121 = vmatprep.subr.bf16.mxu0 %v1023
    %1122 = vmatpush1.bf16.msra.mxu0 %v1022
    %1123 = vmatprep.subr.bf16.mxu0 %v1027
    %1124 = vmatpush1.bf16.msra.mxu0 %v1026
    %1125 = vmatprep.subr.bf16.mxu0 %v1031
    %1126 = vmatpush1.bf16.msra.mxu0 %v1030
    %1127 = vmatprep.subr.bf16.mxu0 %v1035
    %1128 = vmatpush1.bf16.msra.mxu0 %v1034
    %1129 = vmatprep.subr.bf16.mxu0 %v1039
    %1130 = vmatpush1.bf16.msra.mxu0 %v1038
    %1131 = vmatprep.subr.bf16.mxu0 %v1043
    %1132 = vmatpush1.bf16.msra.mxu0 %v1042
    %1133 = vmatprep.subr.bf16.mxu0 0
    %1134 = vmatpush1.bf16.msra.mxu0 0
    %1135 = vmatprep.subr.bf16.mxu0 0
    %1136 = vmatpush1.bf16.msra.mxu0 0
    %1137 = vmatprep.subr.bf16.mxu0 0
    %1138 = vmatpush1.bf16.msra.mxu0 0
    %1139 = vmatprep.subr.bf16.mxu0 0
    %1140 = vmatpush1.bf16.msra.mxu0 0
    %1141 = vmatprep.subr.bf16.mxu0 0
    %1142 = vmatpush1.bf16.msra.mxu0 0
    %1143 = vmatprep.subr.bf16.mxu0 0
    %1144 = vmatpush1.bf16.msra.mxu0 0
    %1145 = vmatprep.subr.bf16.mxu0 0
    %1146 = vmatpush1.bf16.msra.mxu0 0
    %1147 = vmatprep.subr.bf16.mxu0 0
    %1148 = vmatpush1.bf16.msra.mxu0 0
    %1149 = vmatprep.mubr.bf16.mxu0 0
    %1150 = vmatmul.mubr.bf16.gmra.mrb[0].mxu0 0
    %v1151 = vpop.f32.mrb[0].mxu0
    %v1152 = vadd.f32 0.0, %v1151
    %v1153 = vpop.f32.mrb[0].mxu0
    %v1154 = vadd.f32 0.0, %v1153
    %v1155 = vpop.f32.mrb[0].mxu0
    %v1156 = vpop.f32.mrb[0].mxu0
    %1157 = vdwg.mxu0
    %v1190 = vunpack.c.l.b16 %v852
    %v1191 = vunpack.c.h.b16 %v852
    %v1192 = vunpack.c.l.b16 %v853
    %v1193 = vunpack.c.h.b16 %v853
    %v1194 = vunpack.c.l.b16 %v854
    %v1195 = vunpack.c.h.b16 %v854
    %v1196 = vunpack.c.l.b16 %v855
    %v1197 = vunpack.c.h.b16 %v855
    %v1198 = vunpack.c.l.b16 %v856
    %v1199 = vunpack.c.h.b16 %v856
    %v1200 = vunpack.c.l.b16 %v857
    %v1201 = vunpack.c.h.b16 %v857
    %v1202 = vunpack.c.l.b16 %v858
    %v1203 = vunpack.c.h.b16 %v858
    %v1204 = vunpack.c.l.b16 %v859
    %v1205 = vunpack.c.h.b16 %v859
    %v1206 = vunpack.c.l.b16 %v860
    %v1207 = vunpack.c.h.b16 %v860
    %v1208 = vunpack.c.l.b16 %v861
    %v1209 = vunpack.c.h.b16 %v861
    %v1210 = vunpack.c.l.b16 %v862
    %v1211 = vunpack.c.h.b16 %v862
    %v1212 = vunpack.c.l.b16 %v863
    %v1213 = vunpack.c.h.b16 %v863
    %v1214 = vunpack.c.l.b16 %v864
    %v1215 = vunpack.c.h.b16 %v864
    %v1216 = vunpack.c.l.b16 %v865
    %v1217 = vunpack.c.h.b16 %v865
    %v1218 = vunpack.c.l.b16 %v866
    %v1219 = vunpack.c.h.b16 %v866
    %v1220 = vunpack.c.l.b16 %v867
    %v1221 = vunpack.c.h.b16 %v867
    %v1222 = vunpack.c.l.b16 %v868
    %v1223 = vunpack.c.h.b16 %v868
    %v1224 = vunpack.c.l.b16 %v869
    %v1225 = vunpack.c.h.b16 %v869
    %v1226 = vunpack.c.l.b16 %v870
    %v1227 = vunpack.c.h.b16 %v870
    %v1228 = vunpack.c.l.b16 %v871
    %v1229 = vunpack.c.h.b16 %v871
    %v1230 = vunpack.c.l.b16 %v872
    %v1231 = vunpack.c.h.b16 %v872
    %v1232 = vunpack.c.l.b16 %v873
    %v1233 = vunpack.c.h.b16 %v873
    %v1234 = vunpack.c.l.b16 %v874
    %v1235 = vunpack.c.h.b16 %v874
    %v1236 = vunpack.c.l.b16 %v875
    %v1237 = vunpack.c.h.b16 %v875
    %v1238 = vunpack.c.l.b16 %v876
    %v1239 = vunpack.c.h.b16 %v876
    %v1240 = vunpack.c.l.b16 %v877
    %v1241 = vunpack.c.h.b16 %v877
    %v1242 = vunpack.c.l.b16 %v878
    %v1243 = vunpack.c.h.b16 %v878
    %v1244 = vunpack.c.l.b16 %v879
    %v1245 = vunpack.c.h.b16 %v879
    %v1246 = vunpack.c.l.b16 %v880
    %v1247 = vunpack.c.h.b16 %v880
    %v1248 = vunpack.c.l.b16 %v881
    %v1249 = vunpack.c.h.b16 %v881
    %v1250 = vunpack.c.l.b16 %v882
    %v1251 = vunpack.c.h.b16 %v882
    %v1252 = vunpack.c.l.b16 %v883
    %v1253 = vunpack.c.h.b16 %v883
    %v1254 = vpack.c.b16 %v1194, %v1190
    %v1255 = vpack.c.b16 %v1195, %v1191
    %v1256 = vpack.c.b16 %v1196, %v1192
    %v1257 = vpack.c.b16 %v1197, %v1193
    %v1258 = vpack.c.b16 %v1202, %v1198
    %v1259 = vpack.c.b16 %v1203, %v1199
    %v1260 = vpack.c.b16 %v1204, %v1200
    %v1261 = vpack.c.b16 %v1205, %v1201
    %v1262 = vpack.c.b16 %v1210, %v1206
    %v1263 = vpack.c.b16 %v1211, %v1207
    %v1264 = vpack.c.b16 %v1212, %v1208
    %v1265 = vpack.c.b16 %v1213, %v1209
    %v1266 = vpack.c.b16 %v1218, %v1214
    %v1267 = vpack.c.b16 %v1219, %v1215
    %v1268 = vpack.c.b16 %v1220, %v1216
    %v1269 = vpack.c.b16 %v1221, %v1217
    %v1270 = vpack.c.b16 %v1226, %v1222
    %v1271 = vpack.c.b16 %v1227, %v1223
    %v1272 = vpack.c.b16 %v1228, %v1224
    %v1273 = vpack.c.b16 %v1229, %v1225
    %v1274 = vpack.c.b16 %v1234, %v1230
    %v1275 = vpack.c.b16 %v1235, %v1231
    %v1276 = vpack.c.b16 %v1236, %v1232
    %v1277 = vpack.c.b16 %v1237, %v1233
    %v1278 = vpack.c.b16 %v1242, %v1238
    %v1279 = vpack.c.b16 %v1243, %v1239
    %v1280 = vpack.c.b16 %v1244, %v1240
    %v1281 = vpack.c.b16 %v1245, %v1241
    %v1282 = vpack.c.b16 %v1250, %v1246
    %v1283 = vpack.c.b16 %v1251, %v1247
    %v1284 = vpack.c.b16 %v1252, %v1248
    %v1285 = vpack.c.b16 %v1253, %v1249
    %1318 = vmatprep.subr.bf16.mxu0 %v1255
    %1319 = vmatpush1.bf16.msra.mxu0 %v1254
    %1320 = vmatprep.subr.bf16.mxu0 %v1259
    %1321 = vmatpush1.bf16.msra.mxu0 %v1258
    %1322 = vmatprep.subr.bf16.mxu0 %v1263
    %1323 = vmatpush1.bf16.msra.mxu0 %v1262
    %1324 = vmatprep.subr.bf16.mxu0 %v1267
    %1325 = vmatpush1.bf16.msra.mxu0 %v1266
    %1326 = vmatprep.subr.bf16.mxu0 %v1271
    %1327 = vmatpush1.bf16.msra.mxu0 %v1270
    %1328 = vmatprep.subr.bf16.mxu0 %v1275
    %1329 = vmatpush1.bf16.msra.mxu0 %v1274
    %1330 = vmatprep.subr.bf16.mxu0 %v1279
    %1331 = vmatpush1.bf16.msra.mxu0 %v1278
    %1332 = vmatprep.subr.bf16.mxu0 %v1283
    %1333 = vmatpush1.bf16.msra.mxu0 %v1282
    %1334 = vmatprep.subr.bf16.mxu0 0
    %1335 = vmatpush1.bf16.msra.mxu0 0
    %1336 = vmatprep.subr.bf16.mxu0 0
    %1337 = vmatpush1.bf16.msra.mxu0 0
    %1338 = vmatprep.subr.bf16.mxu0 0
    %1339 = vmatpush1.bf16.msra.mxu0 0
    %1340 = vmatprep.subr.bf16.mxu0 0
    %1341 = vmatpush1.bf16.msra.mxu0 0
    %1342 = vmatprep.subr.bf16.mxu0 0
    %1343 = vmatpush1.bf16.msra.mxu0 0
    %1344 = vmatprep.subr.bf16.mxu0 0
    %1345 = vmatpush1.bf16.msra.mxu0 0
    %1346 = vmatprep.subr.bf16.mxu0 0
    %1347 = vmatpush1.bf16.msra.mxu0 0
    %1348 = vmatprep.subr.bf16.mxu0 0
    %1349 = vmatpush1.bf16.msra.mxu0 0
    %1350 = vmatprep.mubr.bf16.mxu0 0
    %1351 = vmatmul.mubr.bf16.gmra.mrb[0].mxu0 %v851
    %v1352 = vpop.f32.mrb[0].mxu0
    %v1353 = vadd.f32 %v1111, %v1352
    %v1354 = vpop.f32.mrb[0].mxu0
    %v1355 = vadd.f32 %v1113, %v1354
    %v1356 = vpop.f32.mrb[0].mxu0
    %v1357 = vpop.f32.mrb[0].mxu0
    %1358 = vdwg.mxu0
    %1359 = vmatprep.subr.bf16.mxu0 %v1257
    %1360 = vmatpush1.bf16.msra.mxu0 %v1256
    %1361 = vmatprep.subr.bf16.mxu0 %v1261
    %1362 = vmatpush1.bf16.msra.mxu0 %v1260
    %1363 = vmatprep.subr.bf16.mxu0 %v1265
    %1364 = vmatpush1.bf16.msra.mxu0 %v1264
    %1365 = vmatprep.subr.bf16.mxu0 %v1269
    %1366 = vmatpush1.bf16.msra.mxu0 %v1268
    %1367 = vmatprep.subr.bf16.mxu0 %v1273
    %1368 = vmatpush1.bf16.msra.mxu0 %v1272
    %1369 = vmatprep.subr.bf16.mxu0 %v1277
    %1370 = vmatpush1.bf16.msra.mxu0 %v1276
    %1371 = vmatprep.subr.bf16.mxu0 %v1281
    %1372 = vmatpush1.bf16.msra.mxu0 %v1280
    %1373 = vmatprep.subr.bf16.mxu0 %v1285
    %1374 = vmatpush1.bf16.msra.mxu0 %v1284
    %1375 = vmatprep.subr.bf16.mxu0 0
    %1376 = vmatpush1.bf16.msra.mxu0 0
    %1377 = vmatprep.subr.bf16.mxu0 0
    %1378 = vmatpush1.bf16.msra.mxu0 0
    %1379 = vmatprep.subr.bf16.mxu0 0
    %1380 = vmatpush1.bf16.msra.mxu0 0
    %1381 = vmatprep.subr.bf16.mxu0 0
    %1382 = vmatpush1.bf16.msra.mxu0 0
    %1383 = vmatprep.subr.bf16.mxu0 0
    %1384 = vmatpush1.bf16.msra.mxu0 0
    %1385 = vmatprep.subr.bf16.mxu0 0
    %1386 = vmatpush1.bf16.msra.mxu0 0
    %1387 = vmatprep.subr.bf16.mxu0 0
    %1388 = vmatpush1.bf16.msra.mxu0 0
    %1389 = vmatprep.subr.bf16.mxu0 0
    %1390 = vmatpush1.bf16.msra.mxu0 0
    %1391 = vmatprep.mubr.bf16.mxu0 0
    %1392 = vmatmul.mubr.bf16.gmra.mrb[0].mxu0 %v851
    %v1393 = vpop.f32.mrb[0].mxu0
    %v1394 = vadd.f32 %v1152, %v1393
    %v1395 = vpop.f32.mrb[0].mxu0
    %v1396 = vadd.f32 %v1154, %v1395
    %v1397 = vpop.f32.mrb[0].mxu0
    %v1398 = vpop.f32.mrb[0].mxu0
    %1399 = vdwg.mxu0
    %v1400 = vadd.f32 %v1353, %v525
    %v1401 = vadd.f32 %v1355, %v529
    %v1402 = vadd.f32 %v1394, %v533
    %v1403 = vadd.f32 %v1396, %v537
    %v1404 = vxor.u32 %v1400, 2147483648
    %v1405 = vmul.f32 %v1404, 1.442695
    %v1406 = vpow.pop %v1405
    %v1407 = vadd.f32 %v1406, 1.0
    %v1408 = vrcp.pop %v1407
    %v1409 = vmul.f32 1.0, %v1408
    %v1410 = vxor.u32 %v1401, 2147483648
    %v1411 = vmul.f32 %v1410, 1.442695
    %v1412 = vpow.pop %v1411
    %v1413 = vadd.f32 %v1412, 1.0
    %v1414 = vrcp.pop %v1413
    %v1415 = vmul.f32 1.0, %v1414
    %v1416 = vtanh.pop %v1402
    %v1417 = vxor.u32 %v1403, 2147483648
    %v1418 = vmul.f32 %v1417, 1.442695
    %v1419 = vpow.pop %v1418
    %v1420 = vadd.f32 %v1419, 1.0
    %v1421 = vrcp.pop %v1420
    %v1422 = vmul.f32 1.0, %v1421
    %v1423 = vmul.f32 %v1415, 0.0
    %v1424 = vmul.f32 %v1409, %v1416
    %v1425 = vadd.f32 %v1423, %v1424
    %v1426 = vtanh.pop %v1425
    %v1427 = vmul.f32 %v1422, %v1426
    %s1428 = smul.u32 1, 4
    %s1429 = smul.addr %s1428, 8
    %s1430 = scalar_lea.vmem [#allocation2], %s1429
    %v1431 = vld [vmem:[%s1430] sm:$0xff]
    %v1432 = vld [vmem:[%s1430 + $0x8] sm:$0xff]
    %v1433 = vld [vmem:[%s1430 + $0x10] sm:$0xff]
    %v1434 = vld [vmem:[%s1430 + $0x18] sm:$0xff]
    %1435 = vmatprep.subr.bf16.mxu0 %v678
    %1436 = vmatpush1.bf16.msra.mxu0 %v677
    %1437 = vmatprep.subr.bf16.mxu0 %v682
    %1438 = vmatpush1.bf16.msra.mxu0 %v681
    %1439 = vmatprep.subr.bf16.mxu0 %v686
    %1440 = vmatpush1.bf16.msra.mxu0 %v685
    %1441 = vmatprep.subr.bf16.mxu0 %v690
    %1442 = vmatpush1.bf16.msra.mxu0 %v689
    %1443 = vmatprep.subr.bf16.mxu0 %v694
    %1444 = vmatpush1.bf16.msra.mxu0 %v693
    %1445 = vmatprep.subr.bf16.mxu0 %v698
    %1446 = vmatpush1.bf16.msra.mxu0 %v697
    %1447 = vmatprep.subr.bf16.mxu0 %v702
    %1448 = vmatpush1.bf16.msra.mxu0 %v701
    %1449 = vmatprep.subr.bf16.mxu0 %v706
    %1450 = vmatpush1.bf16.msra.mxu0 %v705
    %1451 = vmatprep.subr.bf16.mxu0 0
    %1452 = vmatpush1.bf16.msra.mxu0 0
    %1453 = vmatprep.subr.bf16.mxu0 0
    %1454 = vmatpush1.bf16.msra.mxu0 0
    %1455 = vmatprep.subr.bf16.mxu0 0
    %1456 = vmatpush1.bf16.msra.mxu0 0
    %1457 = vmatprep.subr.bf16.mxu0 0
    %1458 = vmatpush1.bf16.msra.mxu0 0
    %1459 = vmatprep.subr.bf16.mxu0 0
    %1460 = vmatpush1.bf16.msra.mxu0 0
    %1461 = vmatprep.subr.bf16.mxu0 0
    %1462 = vmatpush1.bf16.msra.mxu0 0
    %1463 = vmatprep.subr.bf16.mxu0 0
    %1464 = vmatpush1.bf16.msra.mxu0 0
    %1465 = vmatprep.subr.bf16.mxu0 0
    %1466 = vmatpush1.bf16.msra.mxu0 0
    %1467 = vmatprep.mubr.bf16.mxu0 0
    %1468 = vmatmul.mubr.bf16.gmra.mrb[0].mxu0 %v851
    %v1469 = vpop.f32.mrb[0].mxu0
    %v1470 = vadd.f32 0.0, %v1469
    %v1471 = vpop.f32.mrb[0].mxu0
    %v1472 = vadd.f32 0.0, %v1471
    %v1473 = vpop.f32.mrb[0].mxu0
    %v1474 = vpop.f32.mrb[0].mxu0
    %1475 = vdwg.mxu0
    %1476 = vmatprep.subr.bf16.mxu0 %v680
    %1477 = vmatpush1.bf16.msra.mxu0 %v679
    %1478 = vmatprep.subr.bf16.mxu0 %v684
    %1479 = vmatpush1.bf16.msra.mxu0 %v683
    %1480 = vmatprep.subr.bf16.mxu0 %v688
    %1481 = vmatpush1.bf16.msra.mxu0 %v687
    %1482 = vmatprep.subr.bf16.mxu0 %v692
    %1483 = vmatpush1.bf16.msra.mxu0 %v691
    %1484 = vmatprep.subr.bf16.mxu0 %v696
    %1485 = vmatpush1.bf16.msra.mxu0 %v695
    %1486 = vmatprep.subr.bf16.mxu0 %v700
    %1487 = vmatpush1.bf16.msra.mxu0 %v699
    %1488 = vmatprep.subr.bf16.mxu0 %v704
    %1489 = vmatpush1.bf16.msra.mxu0 %v703
    %1490 = vmatprep.subr.bf16.mxu0 %v708
    %1491 = vmatpush1.bf16.msra.mxu0 %v707
    %1492 = vmatprep.subr.bf16.mxu0 0
    %1493 = vmatpush1.bf16.msra.mxu0 0
    %1494 = vmatprep.subr.bf16.mxu0 0
    %1495 = vmatpush1.bf16.msra.mxu0 0
    %1496 = vmatprep.subr.bf16.mxu0 0
    %1497 = vmatpush1.bf16.msra.mxu0 0
    %1498 = vmatprep.subr.bf16.mxu0 0
    %1499 = vmatpush1.bf16.msra.mxu0 0
    %1500 = vmatprep.subr.bf16.mxu0 0
    %1501 = vmatpush1.bf16.msra.mxu0 0
    %1502 = vmatprep.subr.bf16.mxu0 0
    %1503 = vmatpush1.bf16.msra.mxu0 0
    %1504 = vmatprep.subr.bf16.mxu0 0
    %1505 = vmatpush1.bf16.msra.mxu0 0
    %1506 = vmatprep.subr.bf16.mxu0 0
    %1507 = vmatpush1.bf16.msra.mxu0 0
    %1508 = vmatprep.mubr.bf16.mxu0 0
    %1509 = vmatmul.mubr.bf16.gmra.mrb[0].mxu0 %v851
    %v1510 = vpop.f32.mrb[0].mxu0
    %v1511 = vadd.f32 0.0, %v1510
    %v1512 = vpop.f32.mrb[0].mxu0
    %v1513 = vadd.f32 0.0, %v1512
    %v1514 = vpop.f32.mrb[0].mxu0
    %v1515 = vpop.f32.mrb[0].mxu0
    %1516 = vdwg.mxu0
    %v1517 = vadd.f32 %v1431, %v1470
    %v1518 = vadd.f32 %v1432, %v1472
    %v1519 = vadd.f32 %v1433, %v1511
    %v1520 = vadd.f32 %v1434, %v1513
    %v1521 = vxor.u32 %v1517, 2147483648
    %v1522 = vmul.f32 %v1521, 1.442695
    %v1523 = vpow.pop %v1522
    %v1524 = vadd.f32 %v1523, 1.0
    %v1525 = vrcp.pop %v1524
    %v1526 = vmul.f32 1.0, %v1525
    %v1527 = vxor.u32 %v1518, 2147483648
    %v1528 = vmul.f32 %v1527, 1.442695
    %v1529 = vpow.pop %v1528
    %v1530 = vadd.f32 %v1529, 1.0
    %v1531 = vrcp.pop %v1530
    %v1532 = vmul.f32 1.0, %v1531
    %v1533 = vtanh.pop %v1519
    %v1534 = vxor.u32 %v1520, 2147483648
    %v1535 = vmul.f32 %v1534, 1.442695
    %v1536 = vpow.pop %v1535
    %v1537 = vadd.f32 %v1536, 1.0
    %v1538 = vrcp.pop %v1537
    %v1539 = vmul.f32 1.0, %v1538
    %v1540 = vmul.f32 %v1532, %v848
    %v1541 = vmul.f32 %v1526, %v1533
    %v1542 = vadd.f32 %v1540, %v1541
    %v1543 = vtanh.pop %v1542
    %v1544 = vmul.f32 %v1539, %v1543
    %v1545 = vpack.c.bf16 %v1544, %v1544
    %v1546 = vpack.c.bf16 %v1427, %v1427
    %1547 = vmatprep.subr.bf16.mxu0 %v1013
    %1548 = vmatpush1.bf16.msra.mxu0 %v1012
    %1549 = vmatprep.subr.bf16.mxu0 %v1017
    %1550 = vmatpush1.bf16.msra.mxu0 %v1016
    %1551 = vmatprep.subr.bf16.mxu0 %v1021
    %1552 = vmatpush1.bf16.msra.mxu0 %v1020
    %1553 = vmatprep.subr.bf16.mxu0 %v1025
    %1554 = vmatpush1.bf16.msra.mxu0 %v1024
    %1555 = vmatprep.subr.bf16.mxu0 %v1029
    %1556 = vmatpush1.bf16.msra.mxu0 %v1028
    %1557 = vmatprep.subr.bf16.mxu0 %v1033
    %1558 = vmatpush1.bf16.msra.mxu0 %v1032
    %1559 = vmatprep.subr.bf16.mxu0 %v1037
    %1560 = vmatpush1.bf16.msra.mxu0 %v1036
    %1561 = vmatprep.subr.bf16.mxu0 %v1041
    %1562 = vmatpush1.bf16.msra.mxu0 %v1040
    %1563 = vmatprep.subr.bf16.mxu0 0
    %1564 = vmatpush1.bf16.msra.mxu0 0
    %1565 = vmatprep.subr.bf16.mxu0 0
    %1566 = vmatpush1.bf16.msra.mxu0 0
    %1567 = vmatprep.subr.bf16.mxu0 0
    %1568 = vmatpush1.bf16.msra.mxu0 0
    %1569 = vmatprep.subr.bf16.mxu0 0
    %1570 = vmatpush1.bf16.msra.mxu0 0
    %1571 = vmatprep.subr.bf16.mxu0 0
    %1572 = vmatpush1.bf16.msra.mxu0 0
    %1573 = vmatprep.subr.bf16.mxu0 0
    %1574 = vmatpush1.bf16.msra.mxu0 0
    %1575 = vmatprep.subr.bf16.mxu0 0
    %1576 = vmatpush1.bf16.msra.mxu0 0
    %1577 = vmatprep.subr.bf16.mxu0 0
    %1578 = vmatpush1.bf16.msra.mxu0 0
    %1579 = vmatprep.mubr.bf16.mxu0 0
    %1580 = vmatmul.mubr.bf16.gmra.mrb[0].mxu0 %v1546
    %v1581 = vpop.f32.mrb[0].mxu0
    %v1582 = vadd.f32 0.0, %v1581
    %v1583 = vpop.f32.mrb[0].mxu0
    %v1584 = vadd.f32 0.0, %v1583
    %v1585 = vpop.f32.mrb[0].mxu0
    %v1586 = vpop.f32.mrb[0].mxu0
    %1587 = vdwg.mxu0
    %1588 = vmatprep.subr.bf16.mxu0 %v1015
    %1589 = vmatpush1.bf16.msra.mxu0 %v1014
    %1590 = vmatprep.subr.bf16.mxu0 %v1019
    %1591 = vmatpush1.bf16.msra.mxu0 %v1018
    %1592 = vmatprep.subr.bf16.mxu0 %v1023
    %1593 = vmatpush1.bf16.msra.mxu0 %v1022
    %1594 = vmatprep.subr.bf16.mxu0 %v1027
    %1595 = vmatpush1.bf16.msra.mxu0 %v1026
    %1596 = vmatprep.subr.bf16.mxu0 %v1031
    %1597 = vmatpush1.bf16.msra.mxu0 %v1030
    %1598 = vmatprep.subr.bf16.mxu0 %v1035
    %1599 = vmatpush1.bf16.msra.mxu0 %v1034
    %1600 = vmatprep.subr.bf16.mxu0 %v1039
    %1601 = vmatpush1.bf16.msra.mxu0 %v1038
    %1602 = vmatprep.subr.bf16.mxu0 %v1043
    %1603 = vmatpush1.bf16.msra.mxu0 %v1042
    %1604 = vmatprep.subr.bf16.mxu0 0
    %1605 = vmatpush1.bf16.msra.mxu0 0
    %1606 = vmatprep.subr.bf16.mxu0 0
    %1607 = vmatpush1.bf16.msra.mxu0 0
    %1608 = vmatprep.subr.bf16.mxu0 0
    %1609 = vmatpush1.bf16.msra.mxu0 0
    %1610 = vmatprep.subr.bf16.mxu0 0
    %1611 = vmatpush1.bf16.msra.mxu0 0
    %1612 = vmatprep.subr.bf16.mxu0 0
    %1613 = vmatpush1.bf16.msra.mxu0 0
    %1614 = vmatprep.subr.bf16.mxu0 0
    %1615 = vmatpush1.bf16.msra.mxu0 0
    %1616 = vmatprep.subr.bf16.mxu0 0
    %1617 = vmatpush1.bf16.msra.mxu0 0
    %1618 = vmatprep.subr.bf16.mxu0 0
    %1619 = vmatpush1.bf16.msra.mxu0 0
    %1620 = vmatprep.mubr.bf16.mxu0 0
    %1621 = vmatmul.mubr.bf16.gmra.mrb[0].mxu0 %v1546
    %v1622 = vpop.f32.mrb[0].mxu0
    %v1623 = vadd.f32 0.0, %v1622
    %v1624 = vpop.f32.mrb[0].mxu0
    %v1625 = vadd.f32 0.0, %v1624
    %v1626 = vpop.f32.mrb[0].mxu0
    %v1627 = vpop.f32.mrb[0].mxu0
    %1628 = vdwg.mxu0
    %1629 = vmatprep.subr.bf16.mxu0 %v1255
    %1630 = vmatpush1.bf16.msra.mxu0 %v1254
    %1631 = vmatprep.subr.bf16.mxu0 %v1259
    %1632 = vmatpush1.bf16.msra.mxu0 %v1258
    %1633 = vmatprep.subr.bf16.mxu0 %v1263
    %1634 = vmatpush1.bf16.msra.mxu0 %v1262
    %1635 = vmatprep.subr.bf16.mxu0 %v1267
    %1636 = vmatpush1.bf16.msra.mxu0 %v1266
    %1637 = vmatprep.subr.bf16.mxu0 %v1271
    %1638 = vmatpush1.bf16.msra.mxu0 %v1270
    %1639 = vmatprep.subr.bf16.mxu0 %v1275
    %1640 = vmatpush1.bf16.msra.mxu0 %v1274
    %1641 = vmatprep.subr.bf16.mxu0 %v1279
    %1642 = vmatpush1.bf16.msra.mxu0 %v1278
    %1643 = vmatprep.subr.bf16.mxu0 %v1283
    %1644 = vmatpush1.bf16.msra.mxu0 %v1282
    %1645 = vmatprep.subr.bf16.mxu0 0
    %1646 = vmatpush1.bf16.msra.mxu0 0
    %1647 = vmatprep.subr.bf16.mxu0 0
    %1648 = vmatpush1.bf16.msra.mxu0 0
    %1649 = vmatprep.subr.bf16.mxu0 0
    %1650 = vmatpush1.bf16.msra.mxu0 0
    %1651 = vmatprep.subr.bf16.mxu0 0
    %1652 = vmatpush1.bf16.msra.mxu0 0
    %1653 = vmatprep.subr.bf16.mxu0 0
    %1654 = vmatpush1.bf16.msra.mxu0 0
    %1655 = vmatprep.subr.bf16.mxu0 0
    %1656 = vmatpush1.bf16.msra.mxu0 0
    %1657 = vmatprep.subr.bf16.mxu0 0
    %1658 = vmatpush1.bf16.msra.mxu0 0
    %1659 = vmatprep.subr.bf16.mxu0 0
    %1660 = vmatpush1.bf16.msra.mxu0 0
    %1661 = vmatprep.mubr.bf16.mxu0 0
    %1662 = vmatmul.mubr.bf16.gmra.mrb[0].mxu0 %v1545
    %v1663 = vpop.f32.mrb[0].mxu0
    %v1664 = vadd.f32 %v1582, %v1663
    %v1665 = vpop.f32.mrb[0].mxu0
    %v1666 = vadd.f32 %v1584, %v1665
    %v1667 = vpop.f32.mrb[0].mxu0
    %v1668 = vpop.f32.mrb[0].mxu0
    %1669 = vdwg.mxu0
    %1670 = vmatprep.subr.bf16.mxu0 %v1257
    %1671 = vmatpush1.bf16.msra.mxu0 %v1256
    %1672 = vmatprep.subr.bf16.mxu0 %v1261
    %1673 = vmatpush1.bf16.msra.mxu0 %v1260
    %1674 = vmatprep.subr.bf16.mxu0 %v1265
    %1675 = vmatpush1.bf16.msra.mxu0 %v1264
    %1676 = vmatprep.subr.bf16.mxu0 %v1269
    %1677 = vmatpush1.bf16.msra.mxu0 %v1268
    %1678 = vmatprep.subr.bf16.mxu0 %v1273
    %1679 = vmatpush1.bf16.msra.mxu0 %v1272
    %1680 = vmatprep.subr.bf16.mxu0 %v1277
    %1681 = vmatpush1.bf16.msra.mxu0 %v1276
    %1682 = vmatprep.subr.bf16.mxu0 %v1281
    %1683 = vmatpush1.bf16.msra.mxu0 %v1280
    %1684 = vmatprep.subr.bf16.mxu0 %v1285
    %1685 = vmatpush1.bf16.msra.mxu0 %v1284
    %1686 = vmatprep.subr.bf16.mxu0 0
    %1687 = vmatpush1.bf16.msra.mxu0 0
    %1688 = vmatprep.subr.bf16.mxu0 0
    %1689 = vmatpush1.bf16.msra.mxu0 0
    %1690 = vmatprep.subr.bf16.mxu0 0
    %1691 = vmatpush1.bf16.msra.mxu0 0
    %1692 = vmatprep.subr.bf16.mxu0 0
    %1693 = vmatpush1.bf16.msra.mxu0 0
    %1694 = vmatprep.subr.bf16.mxu0 0
    %1695 = vmatpush1.bf16.msra.mxu0 0
    %1696 = vmatprep.subr.bf16.mxu0 0
    %1697 = vmatpush1.bf16.msra.mxu0 0
    %1698 = vmatprep.subr.bf16.mxu0 0
    %1699 = vmatpush1.bf16.msra.mxu0 0
    %1700 = vmatprep.subr.bf16.mxu0 0
    %1701 = vmatpush1.bf16.msra.mxu0 0
    %1702 = vmatprep.mubr.bf16.mxu0 0
    %1703 = vmatmul.mubr.bf16.gmra.mrb[0].mxu0 %v1545
    %v1704 = vpop.f32.mrb[0].mxu0
    %v1705 = vadd.f32 %v1623, %v1704
    %v1706 = vpop.f32.mrb[0].mxu0
    %v1707 = vadd.f32 %v1625, %v1706
    %v1708 = vpop.f32.mrb[0].mxu0
    %v1709 = vpop.f32.mrb[0].mxu0
    %1710 = vdwg.mxu0
    %v1711 = vadd.f32 %v1664, %v525
    %v1712 = vadd.f32 %v1666, %v529
    %v1713 = vadd.f32 %v1705, %v533
    %v1714 = vadd.f32 %v1707, %v537
    %v1715 = vxor.u32 %v1711, 2147483648
    %v1716 = vmul.f32 %v1715, 1.442695
    %v1717 = vpow.pop %v1716
    %v1718 = vadd.f32 %v1717, 1.0
    %v1719 = vrcp.pop %v1718
    %v1720 = vmul.f32 1.0, %v1719
    %v1721 = vxor.u32 %v1712, 2147483648
    %v1722 = vmul.f32 %v1721, 1.442695
    %v1723 = vpow.pop %v1722
    %v1724 = vadd.f32 %v1723, 1.0
    %v1725 = vrcp.pop %v1724
    %v1726 = vmul.f32 1.0, %v1725
    %v1727 = vtanh.pop %v1713
    %v1728 = vxor.u32 %v1714, 2147483648
    %v1729 = vmul.f32 %v1728, 1.442695
    %v1730 = vpow.pop %v1729
    %v1731 = vadd.f32 %v1730, 1.0
    %v1732 = vrcp.pop %v1731
    %v1733 = vmul.f32 1.0, %v1732
    %v1734 = vmul.f32 %v1726, %v1425
    %v1735 = vmul.f32 %v1720, %v1727
    %v1736 = vadd.f32 %v1734, %v1735
    %v1737 = vtanh.pop %v1736
    %v1738 = vmul.f32 %v1733, %v1737
    %s1739 = smul.u32 2, 4
    %s1740 = smul.addr %s1739, 8
    %s1741 = scalar_lea.vmem [#allocation2], %s1740
    %v1742 = vld [vmem:[%s1741] sm:$0xff]
    %v1743 = vld [vmem:[%s1741 + $0x8] sm:$0xff]
    %v1744 = vld [vmem:[%s1741 + $0x10] sm:$0xff]
    %v1745 = vld [vmem:[%s1741 + $0x18] sm:$0xff]
    %1746 = vmatprep.subr.bf16.mxu0 %v678
    %1747 = vmatpush1.bf16.msra.mxu0 %v677
    %1748 = vmatprep.subr.bf16.mxu0 %v682
    %1749 = vmatpush1.bf16.msra.mxu0 %v681
    %1750 = vmatprep.subr.bf16.mxu0 %v686
    %1751 = vmatpush1.bf16.msra.mxu0 %v685
    %1752 = vmatprep.subr.bf16.mxu0 %v690
    %1753 = vmatpush1.bf16.msra.mxu0 %v689
    %1754 = vmatprep.subr.bf16.mxu0 %v694
    %1755 = vmatpush1.bf16.msra.mxu0 %v693
    %1756 = vmatprep.subr.bf16.mxu0 %v698
    %1757 = vmatpush1.bf16.msra.mxu0 %v697
    %1758 = vmatprep.subr.bf16.mxu0 %v702
    %1759 = vmatpush1.bf16.msra.mxu0 %v701
    %1760 = vmatprep.subr.bf16.mxu0 %v706
    %1761 = vmatpush1.bf16.msra.mxu0 %v705
    %1762 = vmatprep.subr.bf16.mxu0 0
    %1763 = vmatpush1.bf16.msra.mxu0 0
    %1764 = vmatprep.subr.bf16.mxu0 0
    %1765 = vmatpush1.bf16.msra.mxu0 0
    %1766 = vmatprep.subr.bf16.mxu0 0
    %1767 = vmatpush1.bf16.msra.mxu0 0
    %1768 = vmatprep.subr.bf16.mxu0 0
    %1769 = vmatpush1.bf16.msra.mxu0 0
    %1770 = vmatprep.subr.bf16.mxu0 0
    %1771 = vmatpush1.bf16.msra.mxu0 0
    %1772 = vmatprep.subr.bf16.mxu0 0
    %1773 = vmatpush1.bf16.msra.mxu0 0
    %1774 = vmatprep.subr.bf16.mxu0 0
    %1775 = vmatpush1.bf16.msra.mxu0 0
    %1776 = vmatprep.subr.bf16.mxu0 0
    %1777 = vmatpush1.bf16.msra.mxu0 0
    %1778 = vmatprep.mubr.bf16.mxu0 0
    %1779 = vmatmul.mubr.bf16.gmra.mrb[0].mxu0 %v1545
    %v1780 = vpop.f32.mrb[0].mxu0
    %v1781 = vadd.f32 0.0, %v1780
    %v1782 = vpop.f32.mrb[0].mxu0
    %v1783 = vadd.f32 0.0, %v1782
    %v1784 = vpop.f32.mrb[0].mxu0
    %v1785 = vpop.f32.mrb[0].mxu0
    %1786 = vdwg.mxu0
    %1787 = vmatprep.subr.bf16.mxu0 %v680
    %1788 = vmatpush1.bf16.msra.mxu0 %v679
    %1789 = vmatprep.subr.bf16.mxu0 %v684
    %1790 = vmatpush1.bf16.msra.mxu0 %v683
    %1791 = vmatprep.subr.bf16.mxu0 %v688
    %1792 = vmatpush1.bf16.msra.mxu0 %v687
    %1793 = vmatprep.subr.bf16.mxu0 %v692
    %1794 = vmatpush1.bf16.msra.mxu0 %v691
    %1795 = vmatprep.subr.bf16.mxu0 %v696
    %1796 = vmatpush1.bf16.msra.mxu0 %v695
    %1797 = vmatprep.subr.bf16.mxu0 %v700
    %1798 = vmatpush1.bf16.msra.mxu0 %v699
    %1799 = vmatprep.subr.bf16.mxu0 %v704
    %1800 = vmatpush1.bf16.msra.mxu0 %v703
    %1801 = vmatprep.subr.bf16.mxu0 %v708
    %1802 = vmatpush1.bf16.msra.mxu0 %v707
    %1803 = vmatprep.subr.bf16.mxu0 0
    %1804 = vmatpush1.bf16.msra.mxu0 0
    %1805 = vmatprep.subr.bf16.mxu0 0
    %1806 = vmatpush1.bf16.msra.mxu0 0
    %1807 = vmatprep.subr.bf16.mxu0 0
    %1808 = vmatpush1.bf16.msra.mxu0 0
    %1809 = vmatprep.subr.bf16.mxu0 0
    %1810 = vmatpush1.bf16.msra.mxu0 0
    %1811 = vmatprep.subr.bf16.mxu0 0
    %1812 = vmatpush1.bf16.msra.mxu0 0
    %1813 = vmatprep.subr.bf16.mxu0 0
    %1814 = vmatpush1.bf16.msra.mxu0 0
    %1815 = vmatprep.subr.bf16.mxu0 0
    %1816 = vmatpush1.bf16.msra.mxu0 0
    %1817 = vmatprep.subr.bf16.mxu0 0
    %1818 = vmatpush1.bf16.msra.mxu0 0
    %1819 = vmatprep.mubr.bf16.mxu0 0
    %1820 = vmatmul.mubr.bf16.gmra.mrb[0].mxu0 %v1545
    %v1821 = vpop.f32.mrb[0].mxu0
    %v1822 = vadd.f32 0.0, %v1821
    %v1823 = vpop.f32.mrb[0].mxu0
    %v1824 = vadd.f32 0.0, %v1823
    %v1825 = vpop.f32.mrb[0].mxu0
    %v1826 = vpop.f32.mrb[0].mxu0
    %1827 = vdwg.mxu0
    %v1828 = vadd.f32 %v1742, %v1781
    %v1829 = vadd.f32 %v1743, %v1783
    %v1830 = vadd.f32 %v1744, %v1822
    %v1831 = vadd.f32 %v1745, %v1824
    %v1832 = vxor.u32 %v1828, 2147483648
    %v1833 = vmul.f32 %v1832, 1.442695
    %v1834 = vpow.pop %v1833
    %v1835 = vadd.f32 %v1834, 1.0
    %v1836 = vrcp.pop %v1835
    %v1837 = vmul.f32 1.0, %v1836
    %v1838 = vxor.u32 %v1829, 2147483648
    %v1839 = vmul.f32 %v1838, 1.442695
    %v1840 = vpow.pop %v1839
    %v1841 = vadd.f32 %v1840, 1.0
    %v1842 = vrcp.pop %v1841
    %v1843 = vmul.f32 1.0, %v1842
    %v1844 = vtanh.pop %v1830
    %v1845 = vxor.u32 %v1831, 2147483648
    %v1846 = vmul.f32 %v1845, 1.442695
    %v1847 = vpow.pop %v1846
    %v1848 = vadd.f32 %v1847, 1.0
    %v1849 = vrcp.pop %v1848
    %v1850 = vmul.f32 1.0, %v1849
    %v1851 = vmul.f32 %v1843, %v1542
    %v1852 = vmul.f32 %v1837, %v1844
    %v1853 = vadd.f32 %v1851, %v1852
    %v1854 = vtanh.pop %v1853
    %v1855 = vmul.f32 %v1850, %v1854
    %v1856 = vpack.c.bf16 %v1855, %v1855
    %v1857 = vpack.c.bf16 %v1738, %v1738
    %1858 = vmatprep.subr.bf16.mxu0 %v1013
    %1859 = vmatpush1.bf16.msra.mxu0 %v1012
    %1860 = vmatprep.subr.bf16.mxu0 %v1017
    %1861 = vmatpush1.bf16.msra.mxu0 %v1016
    %1862 = vmatprep.subr.bf16.mxu0 %v1021
    %1863 = vmatpush1.bf16.msra.mxu0 %v1020
    %1864 = vmatprep.subr.bf16.mxu0 %v1025
    %1865 = vmatpush1.bf16.msra.mxu0 %v1024
    %1866 = vmatprep.subr.bf16.mxu0 %v1029
    %1867 = vmatpush1.bf16.msra.mxu0 %v1028
    %1868 = vmatprep.subr.bf16.mxu0 %v1033
    %1869 = vmatpush1.bf16.msra.mxu0 %v1032
    %1870 = vmatprep.subr.bf16.mxu0 %v1037
    %1871 = vmatpush1.bf16.msra.mxu0 %v1036
    %1872 = vmatprep.subr.bf16.mxu0 %v1041
    %1873 = vmatpush1.bf16.msra.mxu0 %v1040
    %1874 = vmatprep.subr.bf16.mxu0 0
    %1875 = vmatpush1.bf16.msra.mxu0 0
    %1876 = vmatprep.subr.bf16.mxu0 0
    %1877 = vmatpush1.bf16.msra.mxu0 0
    %1878 = vmatprep.subr.bf16.mxu0 0
    %1879 = vmatpush1.bf16.msra.mxu0 0
    %1880 = vmatprep.subr.bf16.mxu0 0
    %1881 = vmatpush1.bf16.msra.mxu0 0
    %1882 = vmatprep.subr.bf16.mxu0 0
    %1883 = vmatpush1.bf16.msra.mxu0 0
    %1884 = vmatprep.subr.bf16.mxu0 0
    %1885 = vmatpush1.bf16.msra.mxu0 0
    %1886 = vmatprep.subr.bf16.mxu0 0
    %1887 = vmatpush1.bf16.msra.mxu0 0
    %1888 = vmatprep.subr.bf16.mxu0 0
    %1889 = vmatpush1.bf16.msra.mxu0 0
    %1890 = vmatprep.mubr.bf16.mxu0 0
    %1891 = vmatmul.mubr.bf16.gmra.mrb[0].mxu0 %v1857
    %v1892 = vpop.f32.mrb[0].mxu0
    %v1893 = vadd.f32 0.0, %v1892
    %v1894 = vpop.f32.mrb[0].mxu0
    %v1895 = vadd.f32 0.0, %v1894
    %v1896 = vpop.f32.mrb[0].mxu0
    %v1897 = vpop.f32.mrb[0].mxu0
    %1898 = vdwg.mxu0
    %1899 = vmatprep.subr.bf16.mxu0 %v1015
    %1900 = vmatpush1.bf16.msra.mxu0 %v1014
    %1901 = vmatprep.subr.bf16.mxu0 %v1019
    %1902 = vmatpush1.bf16.msra.mxu0 %v1018
    %1903 = vmatprep.subr.bf16.mxu0 %v1023
    %1904 = vmatpush1.bf16.msra.mxu0 %v1022
    %1905 = vmatprep.subr.bf16.mxu0 %v1027
    %1906 = vmatpush1.bf16.msra.mxu0 %v1026
    %1907 = vmatprep.subr.bf16.mxu0 %v1031
    %1908 = vmatpush1.bf16.msra.mxu0 %v1030
    %1909 = vmatprep.subr.bf16.mxu0 %v1035
    %1910 = vmatpush1.bf16.msra.mxu0 %v1034
    %1911 = vmatprep.subr.bf16.mxu0 %v1039
    %1912 = vmatpush1.bf16.msra.mxu0 %v1038
    %1913 = vmatprep.subr.bf16.mxu0 %v1043
    %1914 = vmatpush1.bf16.msra.mxu0 %v1042
    %1915 = vmatprep.subr.bf16.mxu0 0
    %1916 = vmatpush1.bf16.msra.mxu0 0
    %1917 = vmatprep.subr.bf16.mxu0 0
    %1918 = vmatpush1.bf16.msra.mxu0 0
    %1919 = vmatprep.subr.bf16.mxu0 0
    %1920 = vmatpush1.bf16.msra.mxu0 0
    %1921 = vmatprep.subr.bf16.mxu0 0
    %1922 = vmatpush1.bf16.msra.mxu0 0
    %1923 = vmatprep.subr.bf16.mxu0 0
    %1924 = vmatpush1.bf16.msra.mxu0 0
    %1925 = vmatprep.subr.bf16.mxu0 0
    %1926 = vmatpush1.bf16.msra.mxu0 0
    %1927 = vmatprep.subr.bf16.mxu0 0
    %1928 = vmatpush1.bf16.msra.mxu0 0
    %1929 = vmatprep.subr.bf16.mxu0 0
    %1930 = vmatpush1.bf16.msra.mxu0 0
    %1931 = vmatprep.mubr.bf16.mxu0 0
    %1932 = vmatmul.mubr.bf16.gmra.mrb[0].mxu0 %v1857
    %v1933 = vpop.f32.mrb[0].mxu0
    %v1934 = vadd.f32 0.0, %v1933
    %v1935 = vpop.f32.mrb[0].mxu0
    %v1936 = vadd.f32 0.0, %v1935
    %v1937 = vpop.f32.mrb[0].mxu0
    %v1938 = vpop.f32.mrb[0].mxu0
    %1939 = vdwg.mxu0
    %1940 = vmatprep.subr.bf16.mxu0 %v1255
    %1941 = vmatpush1.bf16.msra.mxu0 %v1254
    %1942 = vmatprep.subr.bf16.mxu0 %v1259
    %1943 = vmatpush1.bf16.msra.mxu0 %v1258
    %1944 = vmatprep.subr.bf16.mxu0 %v1263
    %1945 = vmatpush1.bf16.msra.mxu0 %v1262
    %1946 = vmatprep.subr.bf16.mxu0 %v1267
    %1947 = vmatpush1.bf16.msra.mxu0 %v1266
    %1948 = vmatprep.subr.bf16.mxu0 %v1271
    %1949 = vmatpush1.bf16.msra.mxu0 %v1270
    %1950 = vmatprep.subr.bf16.mxu0 %v1275
    %1951 = vmatpush1.bf16.msra.mxu0 %v1274
    %1952 = vmatprep.subr.bf16.mxu0 %v1279
    %1953 = vmatpush1.bf16.msra.mxu0 %v1278
    %1954 = vmatprep.subr.bf16.mxu0 %v1283
    %1955 = vmatpush1.bf16.msra.mxu0 %v1282
    %1956 = vmatprep.subr.bf16.mxu0 0
    %1957 = vmatpush1.bf16.msra.mxu0 0
    %1958 = vmatprep.subr.bf16.mxu0 0
    %1959 = vmatpush1.bf16.msra.mxu0 0
    %1960 = vmatprep.subr.bf16.mxu0 0
    %1961 = vmatpush1.bf16.msra.mxu0 0
    %1962 = vmatprep.subr.bf16.mxu0 0
    %1963 = vmatpush1.bf16.msra.mxu0 0
    %1964 = vmatprep.subr.bf16.mxu0 0
    %1965 = vmatpush1.bf16.msra.mxu0 0
    %1966 = vmatprep.subr.bf16.mxu0 0
    %1967 = vmatpush1.bf16.msra.mxu0 0
    %1968 = vmatprep.subr.bf16.mxu0 0
    %1969 = vmatpush1.bf16.msra.mxu0 0
    %1970 = vmatprep.subr.bf16.mxu0 0
    %1971 = vmatpush1.bf16.msra.mxu0 0
    %1972 = vmatprep.mubr.bf16.mxu0 0
    %1973 = vmatmul.mubr.bf16.gmra.mrb[0].mxu0 %v1856
    %v1974 = vpop.f32.mrb[0].mxu0
    %v1975 = vadd.f32 %v1893, %v1974
    %v1976 = vpop.f32.mrb[0].mxu0
    %v1977 = vadd.f32 %v1895, %v1976
    %v1978 = vpop.f32.mrb[0].mxu0
    %v1979 = vpop.f32.mrb[0].mxu0
    %1980 = vdwg.mxu0
    %1981 = vmatprep.subr.bf16.mxu0 %v1257
    %1982 = vmatpush1.bf16.msra.mxu0 %v1256
    %1983 = vmatprep.subr.bf16.mxu0 %v1261
    %1984 = vmatpush1.bf16.msra.mxu0 %v1260
    %1985 = vmatprep.subr.bf16.mxu0 %v1265
    %1986 = vmatpush1.bf16.msra.mxu0 %v1264
    %1987 = vmatprep.subr.bf16.mxu0 %v1269
    %1988 = vmatpush1.bf16.msra.mxu0 %v1268
    %1989 = vmatprep.subr.bf16.mxu0 %v1273
    %1990 = vmatpush1.bf16.msra.mxu0 %v1272
    %1991 = vmatprep.subr.bf16.mxu0 %v1277
    %1992 = vmatpush1.bf16.msra.mxu0 %v1276
    %1993 = vmatprep.subr.bf16.mxu0 %v1281
    %1994 = vmatpush1.bf16.msra.mxu0 %v1280
    %1995 = vmatprep.subr.bf16.mxu0 %v1285
    %1996 = vmatpush1.bf16.msra.mxu0 %v1284
    %1997 = vmatprep.subr.bf16.mxu0 0
    %1998 = vmatpush1.bf16.msra.mxu0 0
    %1999 = vmatprep.subr.bf16.mxu0 0
    %2000 = vmatpush1.bf16.msra.mxu0 0
    %2001 = vmatprep.subr.bf16.mxu0 0
    %2002 = vmatpush1.bf16.msra.mxu0 0
    %2003 = vmatprep.subr.bf16.mxu0 0
    %2004 = vmatpush1.bf16.msra.mxu0 0
    %2005 = vmatprep.subr.bf16.mxu0 0
    %2006 = vmatpush1.bf16.msra.mxu0 0
    %2007 = vmatprep.subr.bf16.mxu0 0
    %2008 = vmatpush1.bf16.msra.mxu0 0
    %2009 = vmatprep.subr.bf16.mxu0 0
    %2010 = vmatpush1.bf16.msra.mxu0 0
    %2011 = vmatprep.subr.bf16.mxu0 0
    %2012 = vmatpush1.bf16.msra.mxu0 0
    %2013 = vmatprep.mubr.bf16.mxu0 0
    %2014 = vmatmul.mubr.bf16.gmra.mrb[0].mxu0 %v1856
    %v2015 = vpop.f32.mrb[0].mxu0
    %v2016 = vadd.f32 %v1934, %v2015
    %v2017 = vpop.f32.mrb[0].mxu0
    %v2018 = vadd.f32 %v1936, %v2017
    %v2019 = vpop.f32.mrb[0].mxu0
    %v2020 = vpop.f32.mrb[0].mxu0
    %2021 = vdwg.mxu0
    %v2022 = vadd.f32 %v1975, %v525
    %v2023 = vadd.f32 %v1977, %v529
    %v2024 = vadd.f32 %v2016, %v533
    %v2025 = vadd.f32 %v2018, %v537
    %v2026 = vxor.u32 %v2022, 2147483648
    %v2027 = vmul.f32 %v2026, 1.442695
    %v2028 = vpow.pop %v2027
    %v2029 = vadd.f32 %v2028, 1.0
    %v2030 = vrcp.pop %v2029
    %v2031 = vmul.f32 1.0, %v2030
    %v2032 = vxor.u32 %v2023, 2147483648
    %v2033 = vmul.f32 %v2032, 1.442695
    %v2034 = vpow.pop %v2033
    %v2035 = vadd.f32 %v2034, 1.0
    %v2036 = vrcp.pop %v2035
    %v2037 = vmul.f32 1.0, %v2036
    %v2038 = vtanh.pop %v2024
    %v2039 = vxor.u32 %v2025, 2147483648
    %v2040 = vmul.f32 %v2039, 1.442695
    %v2041 = vpow.pop %v2040
    %v2042 = vadd.f32 %v2041, 1.0
    %v2043 = vrcp.pop %v2042
    %v2044 = vmul.f32 1.0, %v2043
    %v2045 = vmul.f32 %v2037, %v1736
    %v2046 = vmul.f32 %v2031, %v2038
    %v2047 = vadd.f32 %v2045, %v2046
    %v2048 = vtanh.pop %v2047
    %v2049 = vmul.f32 %v2044, %v2048
    %s2050 = smul.u32 3, 4
    %s2051 = smul.addr %s2050, 8
    %s2052 = scalar_lea.vmem [#allocation2], %s2051
    %v2053 = vld [vmem:[%s2052] sm:$0xff]
    %v2054 = vld [vmem:[%s2052 + $0x8] sm:$0xff]
    %v2055 = vld [vmem:[%s2052 + $0x10] sm:$0xff]
    %v2056 = vld [vmem:[%s2052 + $0x18] sm:$0xff]
    %2057 = vmatprep.subr.bf16.mxu0 %v678
    %2058 = vmatpush1.bf16.msra.mxu0 %v677
    %2059 = vmatprep.subr.bf16.mxu0 %v682
    %2060 = vmatpush1.bf16.msra.mxu0 %v681
    %2061 = vmatprep.subr.bf16.mxu0 %v686
    %2062 = vmatpush1.bf16.msra.mxu0 %v685
    %2063 = vmatprep.subr.bf16.mxu0 %v690
    %2064 = vmatpush1.bf16.msra.mxu0 %v689
    %2065 = vmatprep.subr.bf16.mxu0 %v694
    %2066 = vmatpush1.bf16.msra.mxu0 %v693
    %2067 = vmatprep.subr.bf16.mxu0 %v698
    %2068 = vmatpush1.bf16.msra.mxu0 %v697
    %2069 = vmatprep.subr.bf16.mxu0 %v702
    %2070 = vmatpush1.bf16.msra.mxu0 %v701
    %2071 = vmatprep.subr.bf16.mxu0 %v706
    %2072 = vmatpush1.bf16.msra.mxu0 %v705
    %2073 = vmatprep.subr.bf16.mxu0 0
    %2074 = vmatpush1.bf16.msra.mxu0 0
    %2075 = vmatprep.subr.bf16.mxu0 0
    %2076 = vmatpush1.bf16.msra.mxu0 0
    %2077 = vmatprep.subr.bf16.mxu0 0
    %2078 = vmatpush1.bf16.msra.mxu0 0
    %2079 = vmatprep.subr.bf16.mxu0 0
    %2080 = vmatpush1.bf16.msra.mxu0 0
    %2081 = vmatprep.subr.bf16.mxu0 0
    %2082 = vmatpush1.bf16.msra.mxu0 0
    %2083 = vmatprep.subr.bf16.mxu0 0
    %2084 = vmatpush1.bf16.msra.mxu0 0
    %2085 = vmatprep.subr.bf16.mxu0 0
    %2086 = vmatpush1.bf16.msra.mxu0 0
    %2087 = vmatprep.subr.bf16.mxu0 0
    %2088 = vmatpush1.bf16.msra.mxu0 0
    %2089 = vmatprep.mubr.bf16.mxu0 0
    %2090 = vmatmul.mubr.bf16.gmra.mrb[0].mxu0 %v1856
    %v2091 = vpop.f32.mrb[0].mxu0
    %v2092 = vadd.f32 0.0, %v2091
    %v2093 = vpop.f32.mrb[0].mxu0
    %v2094 = vadd.f32 0.0, %v2093
    %v2095 = vpop.f32.mrb[0].mxu0
    %v2096 = vpop.f32.mrb[0].mxu0
    %2097 = vdwg.mxu0
    %2098 = vmatprep.subr.bf16.mxu0 %v680
    %2099 = vmatpush1.bf16.msra.mxu0 %v679
    %2100 = vmatprep.subr.bf16.mxu0 %v684
    %2101 = vmatpush1.bf16.msra.mxu0 %v683
    %2102 = vmatprep.subr.bf16.mxu0 %v688
    %2103 = vmatpush1.bf16.msra.mxu0 %v687
    %2104 = vmatprep.subr.bf16.mxu0 %v692
    %2105 = vmatpush1.bf16.msra.mxu0 %v691
    %2106 = vmatprep.subr.bf16.mxu0 %v696
    %2107 = vmatpush1.bf16.msra.mxu0 %v695
    %2108 = vmatprep.subr.bf16.mxu0 %v700
    %2109 = vmatpush1.bf16.msra.mxu0 %v699
    %2110 = vmatprep.subr.bf16.mxu0 %v704
    %2111 = vmatpush1.bf16.msra.mxu0 %v703
    %2112 = vmatprep.subr.bf16.mxu0 %v708
    %2113 = vmatpush1.bf16.msra.mxu0 %v707
    %2114 = vmatprep.subr.bf16.mxu0 0
    %2115 = vmatpush1.bf16.msra.mxu0 0
    %2116 = vmatprep.subr.bf16.mxu0 0
    %2117 = vmatpush1.bf16.msra.mxu0 0
    %2118 = vmatprep.subr.bf16.mxu0 0
    %2119 = vmatpush1.bf16.msra.mxu0 0
    %2120 = vmatprep.subr.bf16.mxu0 0
    %2121 = vmatpush1.bf16.msra.mxu0 0
    %2122 = vmatprep.subr.bf16.mxu0 0
    %2123 = vmatpush1.bf16.msra.mxu0 0
    %2124 = vmatprep.subr.bf16.mxu0 0
    %2125 = vmatpush1.bf16.msra.mxu0 0
    %2126 = vmatprep.subr.bf16.mxu0 0
    %2127 = vmatpush1.bf16.msra.mxu0 0
    %2128 = vmatprep.subr.bf16.mxu0 0
    %2129 = vmatpush1.bf16.msra.mxu0 0
    %2130 = vmatprep.mubr.bf16.mxu0 0
    %2131 = vmatmul.mubr.bf16.gmra.mrb[0].mxu0 %v1856
    %v2132 = vpop.f32.mrb[0].mxu0
    %v2133 = vadd.f32 0.0, %v2132
    %v2134 = vpop.f32.mrb[0].mxu0
    %v2135 = vadd.f32 0.0, %v2134
    %v2136 = vpop.f32.mrb[0].mxu0
    %v2137 = vpop.f32.mrb[0].mxu0
    %2138 = vdwg.mxu0
    %v2139 = vadd.f32 %v2053, %v2092
    %v2140 = vadd.f32 %v2054, %v2094
    %v2141 = vadd.f32 %v2055, %v2133
    %v2142 = vadd.f32 %v2056, %v2135
    %v2143 = vxor.u32 %v2139, 2147483648
    %v2144 = vmul.f32 %v2143, 1.442695
    %v2145 = vpow.pop %v2144
    %v2146 = vadd.f32 %v2145, 1.0
    %v2147 = vrcp.pop %v2146
    %v2148 = vmul.f32 1.0, %v2147
    %v2149 = vxor.u32 %v2140, 2147483648
    %v2150 = vmul.f32 %v2149, 1.442695
    %v2151 = vpow.pop %v2150
    %v2152 = vadd.f32 %v2151, 1.0
    %v2153 = vrcp.pop %v2152
    %v2154 = vmul.f32 1.0, %v2153
    %v2155 = vtanh.pop %v2141
    %v2156 = vxor.u32 %v2142, 2147483648
    %v2157 = vmul.f32 %v2156, 1.442695
    %v2158 = vpow.pop %v2157
    %v2159 = vadd.f32 %v2158, 1.0
    %v2160 = vrcp.pop %v2159
    %v2161 = vmul.f32 1.0, %v2160
    %v2162 = vmul.f32 %v2154, %v1853
    %v2163 = vmul.f32 %v2148, %v2155
    %v2164 = vadd.f32 %v2162, %v2163
    %v2165 = vtanh.pop %v2164
    %v2166 = vmul.f32 %v2161, %v2165
    %v2167 = vpack.c.bf16 %v2166, %v2166
    %v2168 = vpack.c.bf16 %v2049, %v2049
    %2169 = vmatprep.subr.bf16.mxu0 %v1013
    %2170 = vmatpush1.bf16.msra.mxu0 %v1012
    %2171 = vmatprep.subr.bf16.mxu0 %v1017
    %2172 = vmatpush1.bf16.msra.mxu0 %v1016
    %2173 = vmatprep.subr.bf16.mxu0 %v1021
    %2174 = vmatpush1.bf16.msra.mxu0 %v1020
    %2175 = vmatprep.subr.bf16.mxu0 %v1025
    %2176 = vmatpush1.bf16.msra.mxu0 %v1024
    %2177 = vmatprep.subr.bf16.mxu0 %v1029
    %2178 = vmatpush1.bf16.msra.mxu0 %v1028
    %2179 = vmatprep.subr.bf16.mxu0 %v1033
    %2180 = vmatpush1.bf16.msra.mxu0 %v1032
    %2181 = vmatprep.subr.bf16.mxu0 %v1037
    %2182 = vmatpush1.bf16.msra.mxu0 %v1036
    %2183 = vmatprep.subr.bf16.mxu0 %v1041
    %2184 = vmatpush1.bf16.msra.mxu0 %v1040
    %2185 = vmatprep.subr.bf16.mxu0 0
    %2186 = vmatpush1.bf16.msra.mxu0 0
    %2187 = vmatprep.subr.bf16.mxu0 0
    %2188 = vmatpush1.bf16.msra.mxu0 0
    %2189 = vmatprep.subr.bf16.mxu0 0
    %2190 = vmatpush1.bf16.msra.mxu0 0
    %2191 = vmatprep.subr.bf16.mxu0 0
    %2192 = vmatpush1.bf16.msra.mxu0 0
    %2193 = vmatprep.subr.bf16.mxu0 0
    %2194 = vmatpush1.bf16.msra.mxu0 0
    %2195 = vmatprep.subr.bf16.mxu0 0
    %2196 = vmatpush1.bf16.msra.mxu0 0
    %2197 = vmatprep.subr.bf16.mxu0 0
    %2198 = vmatpush1.bf16.msra.mxu0 0
    %2199 = vmatprep.subr.bf16.mxu0 0
    %2200 = vmatpush1.bf16.msra.mxu0 0
    %2201 = vmatprep.mubr.bf16.mxu0 0
    %2202 = vmatmul.mubr.bf16.gmra.mrb[0].mxu0 %v2168
    %v2203 = vpop.f32.mrb[0].mxu0
    %v2204 = vadd.f32 0.0, %v2203
    %v2205 = vpop.f32.mrb[0].mxu0
    %v2206 = vadd.f32 0.0, %v2205
    %v2207 = vpop.f32.mrb[0].mxu0
    %v2208 = vpop.f32.mrb[0].mxu0
    %2209 = vdwg.mxu0
    %2210 = vmatprep.subr.bf16.mxu0 %v1015
    %2211 = vmatpush1.bf16.msra.mxu0 %v1014
    %2212 = vmatprep.subr.bf16.mxu0 %v1019
    %2213 = vmatpush1.bf16.msra.mxu0 %v1018
    %2214 = vmatprep.subr.bf16.mxu0 %v1023
    %2215 = vmatpush1.bf16.msra.mxu0 %v1022
    %2216 = vmatprep.subr.bf16.mxu0 %v1027
    %2217 = vmatpush1.bf16.msra.mxu0 %v1026
    %2218 = vmatprep.subr.bf16.mxu0 %v1031
    %2219 = vmatpush1.bf16.msra.mxu0 %v1030
    %2220 = vmatprep.subr.bf16.mxu0 %v1035
    %2221 = vmatpush1.bf16.msra.mxu0 %v1034
    %2222 = vmatprep.subr.bf16.mxu0 %v1039
    %2223 = vmatpush1.bf16.msra.mxu0 %v1038
    %2224 = vmatprep.subr.bf16.mxu0 %v1043
    %2225 = vmatpush1.bf16.msra.mxu0 %v1042
    %2226 = vmatprep.subr.bf16.mxu0 0
    %2227 = vmatpush1.bf16.msra.mxu0 0
    %2228 = vmatprep.subr.bf16.mxu0 0
    %2229 = vmatpush1.bf16.msra.mxu0 0
    %2230 = vmatprep.subr.bf16.mxu0 0
    %2231 = vmatpush1.bf16.msra.mxu0 0
    %2232 = vmatprep.subr.bf16.mxu0 0
    %2233 = vmatpush1.bf16.msra.mxu0 0
    %2234 = vmatprep.subr.bf16.mxu0 0
    %2235 = vmatpush1.bf16.msra.mxu0 0
    %2236 = vmatprep.subr.bf16.mxu0 0
    %2237 = vmatpush1.bf16.msra.mxu0 0
    %2238 = vmatprep.subr.bf16.mxu0 0
    %2239 = vmatpush1.bf16.msra.mxu0 0
    %2240 = vmatprep.subr.bf16.mxu0 0
    %2241 = vmatpush1.bf16.msra.mxu0 0
    %2242 = vmatprep.mubr.bf16.mxu0 0
    %2243 = vmatmul.mubr.bf16.gmra.mrb[0].mxu0 %v2168
    %v2244 = vpop.f32.mrb[0].mxu0
    %v2245 = vadd.f32 0.0, %v2244
    %v2246 = vpop.f32.mrb[0].mxu0
    %v2247 = vadd.f32 0.0, %v2246
    %v2248 = vpop.f32.mrb[0].mxu0
    %v2249 = vpop.f32.mrb[0].mxu0
    %2250 = vdwg.mxu0
    %2251 = vmatprep.subr.bf16.mxu0 %v1255
    %2252 = vmatpush1.bf16.msra.mxu0 %v1254
    %2253 = vmatprep.subr.bf16.mxu0 %v1259
    %2254 = vmatpush1.bf16.msra.mxu0 %v1258
    %2255 = vmatprep.subr.bf16.mxu0 %v1263
    %2256 = vmatpush1.bf16.msra.mxu0 %v1262
    %2257 = vmatprep.subr.bf16.mxu0 %v1267
    %2258 = vmatpush1.bf16.msra.mxu0 %v1266
    %2259 = vmatprep.subr.bf16.mxu0 %v1271
    %2260 = vmatpush1.bf16.msra.mxu0 %v1270
    %2261 = vmatprep.subr.bf16.mxu0 %v1275
    %2262 = vmatpush1.bf16.msra.mxu0 %v1274
    %2263 = vmatprep.subr.bf16.mxu0 %v1279
    %2264 = vmatpush1.bf16.msra.mxu0 %v1278
    %2265 = vmatprep.subr.bf16.mxu0 %v1283
    %2266 = vmatpush1.bf16.msra.mxu0 %v1282
    %2267 = vmatprep.subr.bf16.mxu0 0
    %2268 = vmatpush1.bf16.msra.mxu0 0
    %2269 = vmatprep.subr.bf16.mxu0 0
    %2270 = vmatpush1.bf16.msra.mxu0 0
    %2271 = vmatprep.subr.bf16.mxu0 0
    %2272 = vmatpush1.bf16.msra.mxu0 0
    %2273 = vmatprep.subr.bf16.mxu0 0
    %2274 = vmatpush1.bf16.msra.mxu0 0
    %2275 = vmatprep.subr.bf16.mxu0 0
    %2276 = vmatpush1.bf16.msra.mxu0 0
    %2277 = vmatprep.subr.bf16.mxu0 0
    %2278 = vmatpush1.bf16.msra.mxu0 0
    %2279 = vmatprep.subr.bf16.mxu0 0
    %2280 = vmatpush1.bf16.msra.mxu0 0
    %2281 = vmatprep.subr.bf16.mxu0 0
    %2282 = vmatpush1.bf16.msra.mxu0 0
    %2283 = vmatprep.mubr.bf16.mxu0 0
    %2284 = vmatmul.mubr.bf16.gmra.mrb[0].mxu0 %v2167
    %v2285 = vpop.f32.mrb[0].mxu0
    %v2286 = vadd.f32 %v2204, %v2285
    %v2287 = vpop.f32.mrb[0].mxu0
    %v2288 = vadd.f32 %v2206, %v2287
    %v2289 = vpop.f32.mrb[0].mxu0
    %v2290 = vpop.f32.mrb[0].mxu0
    %2291 = vdwg.mxu0
    %2292 = vmatprep.subr.bf16.mxu0 %v1257
    %2293 = vmatpush1.bf16.msra.mxu0 %v1256
    %2294 = vmatprep.subr.bf16.mxu0 %v1261
    %2295 = vmatpush1.bf16.msra.mxu0 %v1260
    %2296 = vmatprep.subr.bf16.mxu0 %v1265
    %2297 = vmatpush1.bf16.msra.mxu0 %v1264
    %2298 = vmatprep.subr.bf16.mxu0 %v1269
    %2299 = vmatpush1.bf16.msra.mxu0 %v1268
    %2300 = vmatprep.subr.bf16.mxu0 %v1273
    %2301 = vmatpush1.bf16.msra.mxu0 %v1272
    %2302 = vmatprep.subr.bf16.mxu0 %v1277
    %2303 = vmatpush1.bf16.msra.mxu0 %v1276
    %2304 = vmatprep.subr.bf16.mxu0 %v1281
    %2305 = vmatpush1.bf16.msra.mxu0 %v1280
    %2306 = vmatprep.subr.bf16.mxu0 %v1285
    %2307 = vmatpush1.bf16.msra.mxu0 %v1284
    %2308 = vmatprep.subr.bf16.mxu0 0
    %2309 = vmatpush1.bf16.msra.mxu0 0
    %2310 = vmatprep.subr.bf16.mxu0 0
    %2311 = vmatpush1.bf16.msra.mxu0 0
    %2312 = vmatprep.subr.bf16.mxu0 0
    %2313 = vmatpush1.bf16.msra.mxu0 0
    %2314 = vmatprep.subr.bf16.mxu0 0
    %2315 = vmatpush1.bf16.msra.mxu0 0
    %2316 = vmatprep.subr.bf16.mxu0 0
    %2317 = vmatpush1.bf16.msra.mxu0 0
    %2318 = vmatprep.subr.bf16.mxu0 0
    %2319 = vmatpush1.bf16.msra.mxu0 0
    %2320 = vmatprep.subr.bf16.mxu0 0
    %2321 = vmatpush1.bf16.msra.mxu0 0
    %2322 = vmatprep.subr.bf16.mxu0 0
    %2323 = vmatpush1.bf16.msra.mxu0 0
    %2324 = vmatprep.mubr.bf16.mxu0 0
    %2325 = vmatmul.mubr.bf16.gmra.mrb[0].mxu0 %v2167
    %v2326 = vpop.f32.mrb[0].mxu0
    %v2327 = vadd.f32 %v2245, %v2326
    %v2328 = vpop.f32.mrb[0].mxu0
    %v2329 = vadd.f32 %v2247, %v2328
    %v2330 = vpop.f32.mrb[0].mxu0
    %v2331 = vpop.f32.mrb[0].mxu0
    %2332 = vdwg.mxu0
    %v2333 = vadd.f32 %v2286, %v525
    %v2334 = vadd.f32 %v2288, %v529
    %v2335 = vadd.f32 %v2327, %v533
    %v2336 = vadd.f32 %v2329, %v537
    %v2337 = vxor.u32 %v2333, 2147483648
    %v2338 = vmul.f32 %v2337, 1.442695
    %v2339 = vpow.pop %v2338
    %v2340 = vadd.f32 %v2339, 1.0
    %v2341 = vrcp.pop %v2340
    %v2342 = vmul.f32 1.0, %v2341
    %v2343 = vxor.u32 %v2334, 2147483648
    %v2344 = vmul.f32 %v2343, 1.442695
    %v2345 = vpow.pop %v2344
    %v2346 = vadd.f32 %v2345, 1.0
    %v2347 = vrcp.pop %v2346
    %v2348 = vmul.f32 1.0, %v2347
    %v2349 = vtanh.pop %v2335
    %v2350 = vxor.u32 %v2336, 2147483648
    %v2351 = vmul.f32 %v2350, 1.442695
    %v2352 = vpow.pop %v2351
    %v2353 = vadd.f32 %v2352, 1.0
    %v2354 = vrcp.pop %v2353
    %v2355 = vmul.f32 1.0, %v2354
    %v2356 = vmul.f32 %v2348, %v2047
    %v2357 = vmul.f32 %v2342, %v2349
    %v2358 = vadd.f32 %v2356, %v2357
    %v2359 = vtanh.pop %v2358
    %v2360 = vmul.f32 %v2355, %v2359
    %s2361 = smul.u32 4, 4
    %s2362 = smul.addr %s2361, 8
    %s2363 = scalar_lea.vmem [#allocation2], %s2362
    %v2364 = vld [vmem:[%s2363] sm:$0xff]
    %v2365 = vld [vmem:[%s2363 + $0x8] sm:$0xff]
    %v2366 = vld [vmem:[%s2363 + $0x10] sm:$0xff]
    %v2367 = vld [vmem:[%s2363 + $0x18] sm:$0xff]
    %2368 = vmatprep.subr.bf16.mxu0 %v678
    %2369 = vmatpush1.bf16.msra.mxu0 %v677
    %2370 = vmatprep.subr.bf16.mxu0 %v682
    %2371 = vmatpush1.bf16.msra.mxu0 %v681
    %2372 = vmatprep.subr.bf16.mxu0 %v686
    %2373 = vmatpush1.bf16.msra.mxu0 %v685
    %2374 = vmatprep.subr.bf16.mxu0 %v690
    %2375 = vmatpush1.bf16.msra.mxu0 %v689
    %2376 = vmatprep.subr.bf16.mxu0 %v694
    %2377 = vmatpush1.bf16.msra.mxu0 %v693
    %2378 = vmatprep.subr.bf16.mxu0 %v698
    %2379 = vmatpush1.bf16.msra.mxu0 %v697
    %2380 = vmatprep.subr.bf16.mxu0 %v702
    %2381 = vmatpush1.bf16.msra.mxu0 %v701
    %2382 = vmatprep.subr.bf16.mxu0 %v706
    %2383 = vmatpush1.bf16.msra.mxu0 %v705
    %2384 = vmatprep.subr.bf16.mxu0 0
    %2385 = vmatpush1.bf16.msra.mxu0 0
    %2386 = vmatprep.subr.bf16.mxu0 0
    %2387 = vmatpush1.bf16.msra.mxu0 0
    %2388 = vmatprep.subr.bf16.mxu0 0
    %2389 = vmatpush1.bf16.msra.mxu0 0
    %2390 = vmatprep.subr.bf16.mxu0 0
    %2391 = vmatpush1.bf16.msra.mxu0 0
    %2392 = vmatprep.subr.bf16.mxu0 0
    %2393 = vmatpush1.bf16.msra.mxu0 0
    %2394 = vmatprep.subr.bf16.mxu0 0
    %2395 = vmatpush1.bf16.msra.mxu0 0
    %2396 = vmatprep.subr.bf16.mxu0 0
    %2397 = vmatpush1.bf16.msra.mxu0 0
    %2398 = vmatprep.subr.bf16.mxu0 0
    %2399 = vmatpush1.bf16.msra.mxu0 0
    %2400 = vmatprep.mubr.bf16.mxu0 0
    %2401 = vmatmul.mubr.bf16.gmra.mrb[0].mxu0 %v2167
    %v2402 = vpop.f32.mrb[0].mxu0
    %v2403 = vadd.f32 0.0, %v2402
    %v2404 = vpop.f32.mrb[0].mxu0
    %v2405 = vadd.f32 0.0, %v2404
    %v2406 = vpop.f32.mrb[0].mxu0
    %v2407 = vpop.f32.mrb[0].mxu0
    %2408 = vdwg.mxu0
    %2409 = vmatprep.subr.bf16.mxu0 %v680
    %2410 = vmatpush1.bf16.msra.mxu0 %v679
    %2411 = vmatprep.subr.bf16.mxu0 %v684
    %2412 = vmatpush1.bf16.msra.mxu0 %v683
    %2413 = vmatprep.subr.bf16.mxu0 %v688
    %2414 = vmatpush1.bf16.msra.mxu0 %v687
    %2415 = vmatprep.subr.bf16.mxu0 %v692
    %2416 = vmatpush1.bf16.msra.mxu0 %v691
    %2417 = vmatprep.subr.bf16.mxu0 %v696
    %2418 = vmatpush1.bf16.msra.mxu0 %v695
    %2419 = vmatprep.subr.bf16.mxu0 %v700
    %2420 = vmatpush1.bf16.msra.mxu0 %v699
    %2421 = vmatprep.subr.bf16.mxu0 %v704
    %2422 = vmatpush1.bf16.msra.mxu0 %v703
    %2423 = vmatprep.subr.bf16.mxu0 %v708
    %2424 = vmatpush1.bf16.msra.mxu0 %v707
    %2425 = vmatprep.subr.bf16.mxu0 0
    %2426 = vmatpush1.bf16.msra.mxu0 0
    %2427 = vmatprep.subr.bf16.mxu0 0
    %2428 = vmatpush1.bf16.msra.mxu0 0
    %2429 = vmatprep.subr.bf16.mxu0 0
    %2430 = vmatpush1.bf16.msra.mxu0 0
    %2431 = vmatprep.subr.bf16.mxu0 0
    %2432 = vmatpush1.bf16.msra.mxu0 0
    %2433 = vmatprep.subr.bf16.mxu0 0
    %2434 = vmatpush1.bf16.msra.mxu0 0
    %2435 = vmatprep.subr.bf16.mxu0 0
    %2436 = vmatpush1.bf16.msra.mxu0 0
    %2437 = vmatprep.subr.bf16.mxu0 0
    %2438 = vmatpush1.bf16.msra.mxu0 0
    %2439 = vmatprep.subr.bf16.mxu0 0
    %2440 = vmatpush1.bf16.msra.mxu0 0
    %2441 = vmatprep.mubr.bf16.mxu0 0
    %2442 = vmatmul.mubr.bf16.gmra.mrb[0].mxu0 %v2167
    %v2443 = vpop.f32.mrb[0].mxu0
    %v2444 = vadd.f32 0.0, %v2443
    %v2445 = vpop.f32.mrb[0].mxu0
    %v2446 = vadd.f32 0.0, %v2445
    %v2447 = vpop.f32.mrb[0].mxu0
    %v2448 = vpop.f32.mrb[0].mxu0
    %2449 = vdwg.mxu0
    %v2450 = vadd.f32 %v2364, %v2403
    %v2451 = vadd.f32 %v2365, %v2405
    %v2452 = vadd.f32 %v2366, %v2444
    %v2453 = vadd.f32 %v2367, %v2446
    %v2454 = vxor.u32 %v2450, 2147483648
    %v2455 = vmul.f32 %v2454, 1.442695
    %v2456 = vpow.pop %v2455
    %v2457 = vadd.f32 %v2456, 1.0
    %v2458 = vrcp.pop %v2457
    %v2459 = vmul.f32 1.0, %v2458
    %v2460 = vxor.u32 %v2451, 2147483648
    %v2461 = vmul.f32 %v2460, 1.442695
    %v2462 = vpow.pop %v2461
    %v2463 = vadd.f32 %v2462, 1.0
    %v2464 = vrcp.pop %v2463
    %v2465 = vmul.f32 1.0, %v2464
    %v2466 = vtanh.pop %v2452
    %v2467 = vxor.u32 %v2453, 2147483648
    %v2468 = vmul.f32 %v2467, 1.442695
    %v2469 = vpow.pop %v2468
    %v2470 = vadd.f32 %v2469, 1.0
    %v2471 = vrcp.pop %v2470
    %v2472 = vmul.f32 1.0, %v2471
    %v2473 = vmul.f32 %v2465, %v2164
    %v2474 = vmul.f32 %v2459, %v2466
    %v2475 = vadd.f32 %v2473, %v2474
    %v2476 = vtanh.pop %v2475
    %v2477 = vmul.f32 %v2472, %v2476
    %v2478 = vpack.c.bf16 %v2477, %v2477
    %v2479 = vpack.c.bf16 %v2360, %v2360
    %2480 = vmatprep.subr.bf16.mxu0 %v1013
    %2481 = vmatpush1.bf16.msra.mxu0 %v1012
    %2482 = vmatprep.subr.bf16.mxu0 %v1017
    %2483 = vmatpush1.bf16.msra.mxu0 %v1016
    %2484 = vmatprep.subr.bf16.mxu0 %v1021
    %2485 = vmatpush1.bf16.msra.mxu0 %v1020
    %2486 = vmatprep.subr.bf16.mxu0 %v1025
    %2487 = vmatpush1.bf16.msra.mxu0 %v1024
    %2488 = vmatprep.subr.bf16.mxu0 %v1029
    %2489 = vmatpush1.bf16.msra.mxu0 %v1028
    %2490 = vmatprep.subr.bf16.mxu0 %v1033
    %2491 = vmatpush1.bf16.msra.mxu0 %v1032
    %2492 = vmatprep.subr.bf16.mxu0 %v1037
    %2493 = vmatpush1.bf16.msra.mxu0 %v1036
    %2494 = vmatprep.subr.bf16.mxu0 %v1041
    %2495 = vmatpush1.bf16.msra.mxu0 %v1040
    %2496 = vmatprep.subr.bf16.mxu0 0
    %2497 = vmatpush1.bf16.msra.mxu0 0
    %2498 = vmatprep.subr.bf16.mxu0 0
    %2499 = vmatpush1.bf16.msra.mxu0 0
    %2500 = vmatprep.subr.bf16.mxu0 0
    %2501 = vmatpush1.bf16.msra.mxu0 0
    %2502 = vmatprep.subr.bf16.mxu0 0
    %2503 = vmatpush1.bf16.msra.mxu0 0
    %2504 = vmatprep.subr.bf16.mxu0 0
    %2505 = vmatpush1.bf16.msra.mxu0 0
    %2506 = vmatprep.subr.bf16.mxu0 0
    %2507 = vmatpush1.bf16.msra.mxu0 0
    %2508 = vmatprep.subr.bf16.mxu0 0
    %2509 = vmatpush1.bf16.msra.mxu0 0
    %2510 = vmatprep.subr.bf16.mxu0 0
    %2511 = vmatpush1.bf16.msra.mxu0 0
    %2512 = vmatprep.mubr.bf16.mxu0 0
    %2513 = vmatmul.mubr.bf16.gmra.mrb[0].mxu0 %v2479
    %v2514 = vpop.f32.mrb[0].mxu0
    %v2515 = vadd.f32 0.0, %v2514
    %v2516 = vpop.f32.mrb[0].mxu0
    %v2517 = vadd.f32 0.0, %v2516
    %v2518 = vpop.f32.mrb[0].mxu0
    %v2519 = vpop.f32.mrb[0].mxu0
    %2520 = vdwg.mxu0
    %2521 = vmatprep.subr.bf16.mxu0 %v1015
    %2522 = vmatpush1.bf16.msra.mxu0 %v1014
    %2523 = vmatprep.subr.bf16.mxu0 %v1019
    %2524 = vmatpush1.bf16.msra.mxu0 %v1018
    %2525 = vmatprep.subr.bf16.mxu0 %v1023
    %2526 = vmatpush1.bf16.msra.mxu0 %v1022
    %2527 = vmatprep.subr.bf16.mxu0 %v1027
    %2528 = vmatpush1.bf16.msra.mxu0 %v1026
    %2529 = vmatprep.subr.bf16.mxu0 %v1031
    %2530 = vmatpush1.bf16.msra.mxu0 %v1030
    %2531 = vmatprep.subr.bf16.mxu0 %v1035
    %2532 = vmatpush1.bf16.msra.mxu0 %v1034
    %2533 = vmatprep.subr.bf16.mxu0 %v1039
    %2534 = vmatpush1.bf16.msra.mxu0 %v1038
    %2535 = vmatprep.subr.bf16.mxu0 %v1043
    %2536 = vmatpush1.bf16.msra.mxu0 %v1042
    %2537 = vmatprep.subr.bf16.mxu0 0
    %2538 = vmatpush1.bf16.msra.mxu0 0
    %2539 = vmatprep.subr.bf16.mxu0 0
    %2540 = vmatpush1.bf16.msra.mxu0 0
    %2541 = vmatprep.subr.bf16.mxu0 0
    %2542 = vmatpush1.bf16.msra.mxu0 0
    %2543 = vmatprep.subr.bf16.mxu0 0
    %2544 = vmatpush1.bf16.msra.mxu0 0
    %2545 = vmatprep.subr.bf16.mxu0 0
    %2546 = vmatpush1.bf16.msra.mxu0 0
    %2547 = vmatprep.subr.bf16.mxu0 0
    %2548 = vmatpush1.bf16.msra.mxu0 0
    %2549 = vmatprep.subr.bf16.mxu0 0
    %2550 = vmatpush1.bf16.msra.mxu0 0
    %2551 = vmatprep.subr.bf16.mxu0 0
    %2552 = vmatpush1.bf16.msra.mxu0 0
    %2553 = vmatprep.mubr.bf16.mxu0 0
    %2554 = vmatmul.mubr.bf16.gmra.mrb[0].mxu0 %v2479
    %v2555 = vpop.f32.mrb[0].mxu0
    %v2556 = vadd.f32 0.0, %v2555
    %v2557 = vpop.f32.mrb[0].mxu0
    %v2558 = vadd.f32 0.0, %v2557
    %v2559 = vpop.f32.mrb[0].mxu0
    %v2560 = vpop.f32.mrb[0].mxu0
    %2561 = vdwg.mxu0
    %2562 = vmatprep.subr.bf16.mxu0 %v1255
    %2563 = vmatpush1.bf16.msra.mxu0 %v1254
    %2564 = vmatprep.subr.bf16.mxu0 %v1259
    %2565 = vmatpush1.bf16.msra.mxu0 %v1258
    %2566 = vmatprep.subr.bf16.mxu0 %v1263
    %2567 = vmatpush1.bf16.msra.mxu0 %v1262
    %2568 = vmatprep.subr.bf16.mxu0 %v1267
    %2569 = vmatpush1.bf16.msra.mxu0 %v1266
    %2570 = vmatprep.subr.bf16.mxu0 %v1271
    %2571 = vmatpush1.bf16.msra.mxu0 %v1270
    %2572 = vmatprep.subr.bf16.mxu0 %v1275
    %2573 = vmatpush1.bf16.msra.mxu0 %v1274
    %2574 = vmatprep.subr.bf16.mxu0 %v1279
    %2575 = vmatpush1.bf16.msra.mxu0 %v1278
    %2576 = vmatprep.subr.bf16.mxu0 %v1283
    %2577 = vmatpush1.bf16.msra.mxu0 %v1282
    %2578 = vmatprep.subr.bf16.mxu0 0
    %2579 = vmatpush1.bf16.msra.mxu0 0
    %2580 = vmatprep.subr.bf16.mxu0 0
    %2581 = vmatpush1.bf16.msra.mxu0 0
    %2582 = vmatprep.subr.bf16.mxu0 0
    %2583 = vmatpush1.bf16.msra.mxu0 0
    %2584 = vmatprep.subr.bf16.mxu0 0
    %2585 = vmatpush1.bf16.msra.mxu0 0
    %2586 = vmatprep.subr.bf16.mxu0 0
    %2587 = vmatpush1.bf16.msra.mxu0 0
    %2588 = vmatprep.subr.bf16.mxu0 0
    %2589 = vmatpush1.bf16.msra.mxu0 0
    %2590 = vmatprep.subr.bf16.mxu0 0
    %2591 = vmatpush1.bf16.msra.mxu0 0
    %2592 = vmatprep.subr.bf16.mxu0 0
    %2593 = vmatpush1.bf16.msra.mxu0 0
    %2594 = vmatprep.mubr.bf16.mxu0 0
    %2595 = vmatmul.mubr.bf16.gmra.mrb[0].mxu0 %v2478
    %v2596 = vpop.f32.mrb[0].mxu0
    %v2597 = vadd.f32 %v2515, %v2596
    %v2598 = vpop.f32.mrb[0].mxu0
    %v2599 = vadd.f32 %v2517, %v2598
    %v2600 = vpop.f32.mrb[0].mxu0
    %v2601 = vpop.f32.mrb[0].mxu0
    %2602 = vdwg.mxu0
    %2603 = vmatprep.subr.bf16.mxu0 %v1257
    %2604 = vmatpush1.bf16.msra.mxu0 %v1256
    %2605 = vmatprep.subr.bf16.mxu0 %v1261
    %2606 = vmatpush1.bf16.msra.mxu0 %v1260
    %2607 = vmatprep.subr.bf16.mxu0 %v1265
    %2608 = vmatpush1.bf16.msra.mxu0 %v1264
    %2609 = vmatprep.subr.bf16.mxu0 %v1269
    %2610 = vmatpush1.bf16.msra.mxu0 %v1268
    %2611 = vmatprep.subr.bf16.mxu0 %v1273
    %2612 = vmatpush1.bf16.msra.mxu0 %v1272
    %2613 = vmatprep.subr.bf16.mxu0 %v1277
    %2614 = vmatpush1.bf16.msra.mxu0 %v1276
    %2615 = vmatprep.subr.bf16.mxu0 %v1281
    %2616 = vmatpush1.bf16.msra.mxu0 %v1280
    %2617 = vmatprep.subr.bf16.mxu0 %v1285
    %2618 = vmatpush1.bf16.msra.mxu0 %v1284
    %2619 = vmatprep.subr.bf16.mxu0 0
    %2620 = vmatpush1.bf16.msra.mxu0 0
    %2621 = vmatprep.subr.bf16.mxu0 0
    %2622 = vmatpush1.bf16.msra.mxu0 0
    %2623 = vmatprep.subr.bf16.mxu0 0
    %2624 = vmatpush1.bf16.msra.mxu0 0
    %2625 = vmatprep.subr.bf16.mxu0 0
    %2626 = vmatpush1.bf16.msra.mxu0 0
    %2627 = vmatprep.subr.bf16.mxu0 0
    %2628 = vmatpush1.bf16.msra.mxu0 0
    %2629 = vmatprep.subr.bf16.mxu0 0
    %2630 = vmatpush1.bf16.msra.mxu0 0
    %2631 = vmatprep.subr.bf16.mxu0 0
    %2632 = vmatpush1.bf16.msra.mxu0 0
    %2633 = vmatprep.subr.bf16.mxu0 0
    %2634 = vmatpush1.bf16.msra.mxu0 0
    %2635 = vmatprep.mubr.bf16.mxu0 0
    %2636 = vmatmul.mubr.bf16.gmra.mrb[0].mxu0 %v2478
    %v2637 = vpop.f32.mrb[0].mxu0
    %v2638 = vadd.f32 %v2556, %v2637
    %v2639 = vpop.f32.mrb[0].mxu0
    %v2640 = vadd.f32 %v2558, %v2639
    %v2641 = vpop.f32.mrb[0].mxu0
    %v2642 = vpop.f32.mrb[0].mxu0
    %2643 = vdwg.mxu0
    %v2644 = vadd.f32 %v2597, %v525
    %v2645 = vadd.f32 %v2599, %v529
    %v2646 = vadd.f32 %v2638, %v533
    %v2647 = vadd.f32 %v2640, %v537
    %v2648 = vxor.u32 %v2644, 2147483648
    %v2649 = vmul.f32 %v2648, 1.442695
    %v2650 = vpow.pop %v2649
    %v2651 = vadd.f32 %v2650, 1.0
    %v2652 = vrcp.pop %v2651
    %v2653 = vmul.f32 1.0, %v2652
    %v2654 = vxor.u32 %v2645, 2147483648
    %v2655 = vmul.f32 %v2654, 1.442695
    %v2656 = vpow.pop %v2655
    %v2657 = vadd.f32 %v2656, 1.0
    %v2658 = vrcp.pop %v2657
    %v2659 = vmul.f32 1.0, %v2658
    %v2660 = vtanh.pop %v2646
    %v2661 = vxor.u32 %v2647, 2147483648
    %v2662 = vmul.f32 %v2661, 1.442695
    %v2663 = vpow.pop %v2662
    %v2664 = vadd.f32 %v2663, 1.0
    %v2665 = vrcp.pop %v2664
    %v2666 = vmul.f32 1.0, %v2665
    %v2667 = vmul.f32 %v2659, %v2358
    %v2668 = vmul.f32 %v2653, %v2660
    %v2669 = vadd.f32 %v2667, %v2668
    %v2670 = vtanh.pop %v2669
    %v2671 = vmul.f32 %v2666, %v2670
    %s2672 = smul.u32 5, 4
    %s2673 = smul.addr %s2672, 8
    %s2674 = scalar_lea.vmem [#allocation2], %s2673
    %v2675 = vld [vmem:[%s2674] sm:$0xff]
    %v2676 = vld [vmem:[%s2674 + $0x8] sm:$0xff]
    %v2677 = vld [vmem:[%s2674 + $0x10] sm:$0xff]
    %v2678 = vld [vmem:[%s2674 + $0x18] sm:$0xff]
    %2679 = vmatprep.subr.bf16.mxu0 %v678
    %2680 = vmatpush1.bf16.msra.mxu0 %v677
    %2681 = vmatprep.subr.bf16.mxu0 %v682
    %2682 = vmatpush1.bf16.msra.mxu0 %v681
    %2683 = vmatprep.subr.bf16.mxu0 %v686
    %2684 = vmatpush1.bf16.msra.mxu0 %v685
    %2685 = vmatprep.subr.bf16.mxu0 %v690
    %2686 = vmatpush1.bf16.msra.mxu0 %v689
    %2687 = vmatprep.subr.bf16.mxu0 %v694
    %2688 = vmatpush1.bf16.msra.mxu0 %v693
    %2689 = vmatprep.subr.bf16.mxu0 %v698
    %2690 = vmatpush1.bf16.msra.mxu0 %v697
    %2691 = vmatprep.subr.bf16.mxu0 %v702
    %2692 = vmatpush1.bf16.msra.mxu0 %v701
    %2693 = vmatprep.subr.bf16.mxu0 %v706
    %2694 = vmatpush1.bf16.msra.mxu0 %v705
    %2695 = vmatprep.subr.bf16.mxu0 0
    %2696 = vmatpush1.bf16.msra.mxu0 0
    %2697 = vmatprep.subr.bf16.mxu0 0
    %2698 = vmatpush1.bf16.msra.mxu0 0
    %2699 = vmatprep.subr.bf16.mxu0 0
    %2700 = vmatpush1.bf16.msra.mxu0 0
    %2701 = vmatprep.subr.bf16.mxu0 0
    %2702 = vmatpush1.bf16.msra.mxu0 0
    %2703 = vmatprep.subr.bf16.mxu0 0
    %2704 = vmatpush1.bf16.msra.mxu0 0
    %2705 = vmatprep.subr.bf16.mxu0 0
    %2706 = vmatpush1.bf16.msra.mxu0 0
    %2707 = vmatprep.subr.bf16.mxu0 0
    %2708 = vmatpush1.bf16.msra.mxu0 0
    %2709 = vmatprep.subr.bf16.mxu0 0
    %2710 = vmatpush1.bf16.msra.mxu0 0
    %2711 = vmatprep.mubr.bf16.mxu0 0
    %2712 = vmatmul.mubr.bf16.gmra.mrb[0].mxu0 %v2478
    %v2713 = vpop.f32.mrb[0].mxu0
    %v2714 = vadd.f32 0.0, %v2713
    %v2715 = vpop.f32.mrb[0].mxu0
    %v2716 = vadd.f32 0.0, %v2715
    %v2717 = vpop.f32.mrb[0].mxu0
    %v2718 = vpop.f32.mrb[0].mxu0
    %2719 = vdwg.mxu0
    %2720 = vmatprep.subr.bf16.mxu0 %v680
    %2721 = vmatpush1.bf16.msra.mxu0 %v679
    %2722 = vmatprep.subr.bf16.mxu0 %v684
    %2723 = vmatpush1.bf16.msra.mxu0 %v683
    %2724 = vmatprep.subr.bf16.mxu0 %v688
    %2725 = vmatpush1.bf16.msra.mxu0 %v687
    %2726 = vmatprep.subr.bf16.mxu0 %v692
    %2727 = vmatpush1.bf16.msra.mxu0 %v691
    %2728 = vmatprep.subr.bf16.mxu0 %v696
    %2729 = vmatpush1.bf16.msra.mxu0 %v695
    %2730 = vmatprep.subr.bf16.mxu0 %v700
    %2731 = vmatpush1.bf16.msra.mxu0 %v699
    %2732 = vmatprep.subr.bf16.mxu0 %v704
    %2733 = vmatpush1.bf16.msra.mxu0 %v703
    %2734 = vmatprep.subr.bf16.mxu0 %v708
    %2735 = vmatpush1.bf16.msra.mxu0 %v707
    %2736 = vmatprep.subr.bf16.mxu0 0
    %2737 = vmatpush1.bf16.msra.mxu0 0
    %2738 = vmatprep.subr.bf16.mxu0 0
    %2739 = vmatpush1.bf16.msra.mxu0 0
    %2740 = vmatprep.subr.bf16.mxu0 0
    %2741 = vmatpush1.bf16.msra.mxu0 0
    %2742 = vmatprep.subr.bf16.mxu0 0
    %2743 = vmatpush1.bf16.msra.mxu0 0
    %2744 = vmatprep.subr.bf16.mxu0 0
    %2745 = vmatpush1.bf16.msra.mxu0 0
    %2746 = vmatprep.subr.bf16.mxu0 0
    %2747 = vmatpush1.bf16.msra.mxu0 0
    %2748 = vmatprep.subr.bf16.mxu0 0
    %2749 = vmatpush1.bf16.msra.mxu0 0
    %2750 = vmatprep.subr.bf16.mxu0 0
    %2751 = vmatpush1.bf16.msra.mxu0 0
    %2752 = vmatprep.mubr.bf16.mxu0 0
    %2753 = vmatmul.mubr.bf16.gmra.mrb[0].mxu0 %v2478
    %v2754 = vpop.f32.mrb[0].mxu0
    %v2755 = vadd.f32 0.0, %v2754
    %v2756 = vpop.f32.mrb[0].mxu0
    %v2757 = vadd.f32 0.0, %v2756
    %v2758 = vpop.f32.mrb[0].mxu0
    %v2759 = vpop.f32.mrb[0].mxu0
    %2760 = vdwg.mxu0
    %v2761 = vadd.f32 %v2675, %v2714
    %v2762 = vadd.f32 %v2676, %v2716
    %v2763 = vadd.f32 %v2677, %v2755
    %v2764 = vadd.f32 %v2678, %v2757
    %v2765 = vxor.u32 %v2761, 2147483648
    %v2766 = vmul.f32 %v2765, 1.442695
    %v2767 = vpow.pop %v2766
    %v2768 = vadd.f32 %v2767, 1.0
    %v2769 = vrcp.pop %v2768
    %v2770 = vmul.f32 1.0, %v2769
    %v2771 = vxor.u32 %v2762, 2147483648
    %v2772 = vmul.f32 %v2771, 1.442695
    %v2773 = vpow.pop %v2772
    %v2774 = vadd.f32 %v2773, 1.0
    %v2775 = vrcp.pop %v2774
    %v2776 = vmul.f32 1.0, %v2775
    %v2777 = vtanh.pop %v2763
    %v2778 = vxor.u32 %v2764, 2147483648
    %v2779 = vmul.f32 %v2778, 1.442695
    %v2780 = vpow.pop %v2779
    %v2781 = vadd.f32 %v2780, 1.0
    %v2782 = vrcp.pop %v2781
    %v2783 = vmul.f32 1.0, %v2782
    %v2784 = vmul.f32 %v2776, %v2475
    %v2785 = vmul.f32 %v2770, %v2777
    %v2786 = vadd.f32 %v2784, %v2785
    %v2787 = vtanh.pop %v2786
    %v2788 = vmul.f32 %v2783, %v2787
    %v2789 = vpack.c.bf16 %v2788, %v2788
    %v2790 = vpack.c.bf16 %v2671, %v2671
    %2791 = vmatprep.subr.bf16.mxu0 %v1013
    %2792 = vmatpush1.bf16.msra.mxu0 %v1012
    %2793 = vmatprep.subr.bf16.mxu0 %v1017
    %2794 = vmatpush1.bf16.msra.mxu0 %v1016
    %2795 = vmatprep.subr.bf16.mxu0 %v1021
    %2796 = vmatpush1.bf16.msra.mxu0 %v1020
    %2797 = vmatprep.subr.bf16.mxu0 %v1025
    %2798 = vmatpush1.bf16.msra.mxu0 %v1024
    %2799 = vmatprep.subr.bf16.mxu0 %v1029
    %2800 = vmatpush1.bf16.msra.mxu0 %v1028
    %2801 = vmatprep.subr.bf16.mxu0 %v1033
    %2802 = vmatpush1.bf16.msra.mxu0 %v1032
    %2803 = vmatprep.subr.bf16.mxu0 %v1037
    %2804 = vmatpush1.bf16.msra.mxu0 %v1036
    %2805 = vmatprep.subr.bf16.mxu0 %v1041
    %2806 = vmatpush1.bf16.msra.mxu0 %v1040
    %2807 = vmatprep.subr.bf16.mxu0 0
    %2808 = vmatpush1.bf16.msra.mxu0 0
    %2809 = vmatprep.subr.bf16.mxu0 0
    %2810 = vmatpush1.bf16.msra.mxu0 0
    %2811 = vmatprep.subr.bf16.mxu0 0
    %2812 = vmatpush1.bf16.msra.mxu0 0
    %2813 = vmatprep.subr.bf16.mxu0 0
    %2814 = vmatpush1.bf16.msra.mxu0 0
    %2815 = vmatprep.subr.bf16.mxu0 0
    %2816 = vmatpush1.bf16.msra.mxu0 0
    %2817 = vmatprep.subr.bf16.mxu0 0
    %2818 = vmatpush1.bf16.msra.mxu0 0
    %2819 = vmatprep.subr.bf16.mxu0 0
    %2820 = vmatpush1.bf16.msra.mxu0 0
    %2821 = vmatprep.subr.bf16.mxu0 0
    %2822 = vmatpush1.bf16.msra.mxu0 0
    %2823 = vmatprep.mubr.bf16.mxu0 0
    %2824 = vmatmul.mubr.bf16.gmra.mrb[0].mxu0 %v2790
    %v2825 = vpop.f32.mrb[0].mxu0
    %v2826 = vadd.f32 0.0, %v2825
    %v2827 = vpop.f32.mrb[0].mxu0
    %v2828 = vadd.f32 0.0, %v2827
    %v2829 = vpop.f32.mrb[0].mxu0
    %v2830 = vpop.f32.mrb[0].mxu0
    %2831 = vdwg.mxu0
    %2832 = vmatprep.subr.bf16.mxu0 %v1015
    %2833 = vmatpush1.bf16.msra.mxu0 %v1014
    %2834 = vmatprep.subr.bf16.mxu0 %v1019
    %2835 = vmatpush1.bf16.msra.mxu0 %v1018
    %2836 = vmatprep.subr.bf16.mxu0 %v1023
    %2837 = vmatpush1.bf16.msra.mxu0 %v1022
    %2838 = vmatprep.subr.bf16.mxu0 %v1027
    %2839 = vmatpush1.bf16.msra.mxu0 %v1026
    %2840 = vmatprep.subr.bf16.mxu0 %v1031
    %2841 = vmatpush1.bf16.msra.mxu0 %v1030
    %2842 = vmatprep.subr.bf16.mxu0 %v1035
    %2843 = vmatpush1.bf16.msra.mxu0 %v1034
    %2844 = vmatprep.subr.bf16.mxu0 %v1039
    %2845 = vmatpush1.bf16.msra.mxu0 %v1038
    %2846 = vmatprep.subr.bf16.mxu0 %v1043
    %2847 = vmatpush1.bf16.msra.mxu0 %v1042
    %2848 = vmatprep.subr.bf16.mxu0 0
    %2849 = vmatpush1.bf16.msra.mxu0 0
    %2850 = vmatprep.subr.bf16.mxu0 0
    %2851 = vmatpush1.bf16.msra.mxu0 0
    %2852 = vmatprep.subr.bf16.mxu0 0
    %2853 = vmatpush1.bf16.msra.mxu0 0
    %2854 = vmatprep.subr.bf16.mxu0 0
    %2855 = vmatpush1.bf16.msra.mxu0 0
    %2856 = vmatprep.subr.bf16.mxu0 0
    %2857 = vmatpush1.bf16.msra.mxu0 0
    %2858 = vmatprep.subr.bf16.mxu0 0
    %2859 = vmatpush1.bf16.msra.mxu0 0
    %2860 = vmatprep.subr.bf16.mxu0 0
    %2861 = vmatpush1.bf16.msra.mxu0 0
    %2862 = vmatprep.subr.bf16.mxu0 0
    %2863 = vmatpush1.bf16.msra.mxu0 0
    %2864 = vmatprep.mubr.bf16.mxu0 0
    %2865 = vmatmul.mubr.bf16.gmra.mrb[0].mxu0 %v2790
    %v2866 = vpop.f32.mrb[0].mxu0
    %v2867 = vadd.f32 0.0, %v2866
    %v2868 = vpop.f32.mrb[0].mxu0
    %v2869 = vadd.f32 0.0, %v2868
    %v2870 = vpop.f32.mrb[0].mxu0
    %v2871 = vpop.f32.mrb[0].mxu0
    %2872 = vdwg.mxu0
    %2873 = vmatprep.subr.bf16.mxu0 %v1255
    %2874 = vmatpush1.bf16.msra.mxu0 %v1254
    %2875 = vmatprep.subr.bf16.mxu0 %v1259
    %2876 = vmatpush1.bf16.msra.mxu0 %v1258
    %2877 = vmatprep.subr.bf16.mxu0 %v1263
    %2878 = vmatpush1.bf16.msra.mxu0 %v1262
    %2879 = vmatprep.subr.bf16.mxu0 %v1267
    %2880 = vmatpush1.bf16.msra.mxu0 %v1266
    %2881 = vmatprep.subr.bf16.mxu0 %v1271
    %2882 = vmatpush1.bf16.msra.mxu0 %v1270
    %2883 = vmatprep.subr.bf16.mxu0 %v1275
    %2884 = vmatpush1.bf16.msra.mxu0 %v1274
    %2885 = vmatprep.subr.bf16.mxu0 %v1279
    %2886 = vmatpush1.bf16.msra.mxu0 %v1278
    %2887 = vmatprep.subr.bf16.mxu0 %v1283
    %2888 = vmatpush1.bf16.msra.mxu0 %v1282
    %2889 = vmatprep.subr.bf16.mxu0 0
    %2890 = vmatpush1.bf16.msra.mxu0 0
    %2891 = vmatprep.subr.bf16.mxu0 0
    %2892 = vmatpush1.bf16.msra.mxu0 0
    %2893 = vmatprep.subr.bf16.mxu0 0
    %2894 = vmatpush1.bf16.msra.mxu0 0
    %2895 = vmatprep.subr.bf16.mxu0 0
    %2896 = vmatpush1.bf16.msra.mxu0 0
    %2897 = vmatprep.subr.bf16.mxu0 0
    %2898 = vmatpush1.bf16.msra.mxu0 0
    %2899 = vmatprep.subr.bf16.mxu0 0
    %2900 = vmatpush1.bf16.msra.mxu0 0
    %2901 = vmatprep.subr.bf16.mxu0 0
    %2902 = vmatpush1.bf16.msra.mxu0 0
    %2903 = vmatprep.subr.bf16.mxu0 0
    %2904 = vmatpush1.bf16.msra.mxu0 0
    %2905 = vmatprep.mubr.bf16.mxu0 0
    %2906 = vmatmul.mubr.bf16.gmra.mrb[0].mxu0 %v2789
    %v2907 = vpop.f32.mrb[0].mxu0
    %v2908 = vadd.f32 %v2826, %v2907
    %v2909 = vpop.f32.mrb[0].mxu0
    %v2910 = vadd.f32 %v2828, %v2909
    %v2911 = vpop.f32.mrb[0].mxu0
    %v2912 = vpop.f32.mrb[0].mxu0
    %2913 = vdwg.mxu0
    %2914 = vmatprep.subr.bf16.mxu0 %v1257
    %2915 = vmatpush1.bf16.msra.mxu0 %v1256
    %2916 = vmatprep.subr.bf16.mxu0 %v1261
    %2917 = vmatpush1.bf16.msra.mxu0 %v1260
    %2918 = vmatprep.subr.bf16.mxu0 %v1265
    %2919 = vmatpush1.bf16.msra.mxu0 %v1264
    %2920 = vmatprep.subr.bf16.mxu0 %v1269
    %2921 = vmatpush1.bf16.msra.mxu0 %v1268
    %2922 = vmatprep.subr.bf16.mxu0 %v1273
    %2923 = vmatpush1.bf16.msra.mxu0 %v1272
    %2924 = vmatprep.subr.bf16.mxu0 %v1277
    %2925 = vmatpush1.bf16.msra.mxu0 %v1276
    %2926 = vmatprep.subr.bf16.mxu0 %v1281
    %2927 = vmatpush1.bf16.msra.mxu0 %v1280
    %2928 = vmatprep.subr.bf16.mxu0 %v1285
    %2929 = vmatpush1.bf16.msra.mxu0 %v1284
    %2930 = vmatprep.subr.bf16.mxu0 0
    %2931 = vmatpush1.bf16.msra.mxu0 0
    %2932 = vmatprep.subr.bf16.mxu0 0
    %2933 = vmatpush1.bf16.msra.mxu0 0
    %2934 = vmatprep.subr.bf16.mxu0 0
    %2935 = vmatpush1.bf16.msra.mxu0 0
    %2936 = vmatprep.subr.bf16.mxu0 0
    %2937 = vmatpush1.bf16.msra.mxu0 0
    %2938 = vmatprep.subr.bf16.mxu0 0
    %2939 = vmatpush1.bf16.msra.mxu0 0
    %2940 = vmatprep.subr.bf16.mxu0 0
    %2941 = vmatpush1.bf16.msra.mxu0 0
    %2942 = vmatprep.subr.bf16.mxu0 0
    %2943 = vmatpush1.bf16.msra.mxu0 0
    %2944 = vmatprep.subr.bf16.mxu0 0
    %2945 = vmatpush1.bf16.msra.mxu0 0
    %2946 = vmatprep.mubr.bf16.mxu0 0
    %2947 = vmatmul.mubr.bf16.gmra.mrb[0].mxu0 %v2789
    %v2948 = vpop.f32.mrb[0].mxu0
    %v2949 = vadd.f32 %v2867, %v2948
    %v2950 = vpop.f32.mrb[0].mxu0
    %v2951 = vadd.f32 %v2869, %v2950
    %v2952 = vpop.f32.mrb[0].mxu0
    %v2953 = vpop.f32.mrb[0].mxu0
    %2954 = vdwg.mxu0
    %v2955 = vadd.f32 %v2908, %v525
    %v2956 = vadd.f32 %v2910, %v529
    %v2957 = vadd.f32 %v2949, %v533
    %v2958 = vadd.f32 %v2951, %v537
    %v2959 = vxor.u32 %v2955, 2147483648
    %v2960 = vmul.f32 %v2959, 1.442695
    %v2961 = vpow.pop %v2960
    %v2962 = vadd.f32 %v2961, 1.0
    %v2963 = vrcp.pop %v2962
    %v2964 = vmul.f32 1.0, %v2963
    %v2965 = vxor.u32 %v2956, 2147483648
    %v2966 = vmul.f32 %v2965, 1.442695
    %v2967 = vpow.pop %v2966
    %v2968 = vadd.f32 %v2967, 1.0
    %v2969 = vrcp.pop %v2968
    %v2970 = vmul.f32 1.0, %v2969
    %v2971 = vtanh.pop %v2957
    %v2972 = vxor.u32 %v2958, 2147483648
    %v2973 = vmul.f32 %v2972, 1.442695
    %v2974 = vpow.pop %v2973
    %v2975 = vadd.f32 %v2974, 1.0
    %v2976 = vrcp.pop %v2975
    %v2977 = vmul.f32 1.0, %v2976
    %v2978 = vmul.f32 %v2970, %v2669
    %v2979 = vmul.f32 %v2964, %v2971
    %v2980 = vadd.f32 %v2978, %v2979
    %v2981 = vtanh.pop %v2980
    %v2982 = vmul.f32 %v2977, %v2981
    %s2983 = smul.u32 6, 4
    %s2984 = smul.addr %s2983, 8
    %s2985 = scalar_lea.vmem [#allocation2], %s2984
    %v2986 = vld [vmem:[%s2985] sm:$0xff]
    %v2987 = vld [vmem:[%s2985 + $0x8] sm:$0xff]
    %v2988 = vld [vmem:[%s2985 + $0x10] sm:$0xff]
    %v2989 = vld [vmem:[%s2985 + $0x18] sm:$0xff]
    %2990 = vmatprep.subr.bf16.mxu0 %v678
    %2991 = vmatpush1.bf16.msra.mxu0 %v677
    %2992 = vmatprep.subr.bf16.mxu0 %v682
    %2993 = vmatpush1.bf16.msra.mxu0 %v681
    %2994 = vmatprep.subr.bf16.mxu0 %v686
    %2995 = vmatpush1.bf16.msra.mxu0 %v685
    %2996 = vmatprep.subr.bf16.mxu0 %v690
    %2997 = vmatpush1.bf16.msra.mxu0 %v689
    %2998 = vmatprep.subr.bf16.mxu0 %v694
    %2999 = vmatpush1.bf16.msra.mxu0 %v693
    %3000 = vmatprep.subr.bf16.mxu0 %v698
    %3001 = vmatpush1.bf16.msra.mxu0 %v697
    %3002 = vmatprep.subr.bf16.mxu0 %v702
    %3003 = vmatpush1.bf16.msra.mxu0 %v701
    %3004 = vmatprep.subr.bf16.mxu0 %v706
    %3005 = vmatpush1.bf16.msra.mxu0 %v705
    %3006 = vmatprep.subr.bf16.mxu0 0
    %3007 = vmatpush1.bf16.msra.mxu0 0
    %3008 = vmatprep.subr.bf16.mxu0 0
    %3009 = vmatpush1.bf16.msra.mxu0 0
    %3010 = vmatprep.subr.bf16.mxu0 0
    %3011 = vmatpush1.bf16.msra.mxu0 0
    %3012 = vmatprep.subr.bf16.mxu0 0
    %3013 = vmatpush1.bf16.msra.mxu0 0
    %3014 = vmatprep.subr.bf16.mxu0 0
    %3015 = vmatpush1.bf16.msra.mxu0 0
    %3016 = vmatprep.subr.bf16.mxu0 0
    %3017 = vmatpush1.bf16.msra.mxu0 0
    %3018 = vmatprep.subr.bf16.mxu0 0
    %3019 = vmatpush1.bf16.msra.mxu0 0
    %3020 = vmatprep.subr.bf16.mxu0 0
    %3021 = vmatpush1.bf16.msra.mxu0 0
    %3022 = vmatprep.mubr.bf16.mxu0 0
    %3023 = vmatmul.mubr.bf16.gmra.mrb[0].mxu0 %v2789
    %v3024 = vpop.f32.mrb[0].mxu0
    %v3025 = vadd.f32 0.0, %v3024
    %v3026 = vpop.f32.mrb[0].mxu0
    %v3027 = vadd.f32 0.0, %v3026
    %v3028 = vpop.f32.mrb[0].mxu0
    %v3029 = vpop.f32.mrb[0].mxu0
    %3030 = vdwg.mxu0
    %3031 = vmatprep.subr.bf16.mxu0 %v680
    %3032 = vmatpush1.bf16.msra.mxu0 %v679
    %3033 = vmatprep.subr.bf16.mxu0 %v684
    %3034 = vmatpush1.bf16.msra.mxu0 %v683
    %3035 = vmatprep.subr.bf16.mxu0 %v688
    %3036 = vmatpush1.bf16.msra.mxu0 %v687
    %3037 = vmatprep.subr.bf16.mxu0 %v692
    %3038 = vmatpush1.bf16.msra.mxu0 %v691
    %3039 = vmatprep.subr.bf16.mxu0 %v696
    %3040 = vmatpush1.bf16.msra.mxu0 %v695
    %3041 = vmatprep.subr.bf16.mxu0 %v700
    %3042 = vmatpush1.bf16.msra.mxu0 %v699
    %3043 = vmatprep.subr.bf16.mxu0 %v704
    %3044 = vmatpush1.bf16.msra.mxu0 %v703
    %3045 = vmatprep.subr.bf16.mxu0 %v708
    %3046 = vmatpush1.bf16.msra.mxu0 %v707
    %3047 = vmatprep.subr.bf16.mxu0 0
    %3048 = vmatpush1.bf16.msra.mxu0 0
    %3049 = vmatprep.subr.bf16.mxu0 0
    %3050 = vmatpush1.bf16.msra.mxu0 0
    %3051 = vmatprep.subr.bf16.mxu0 0
    %3052 = vmatpush1.bf16.msra.mxu0 0
    %3053 = vmatprep.subr.bf16.mxu0 0
    %3054 = vmatpush1.bf16.msra.mxu0 0
    %3055 = vmatprep.subr.bf16.mxu0 0
    %3056 = vmatpush1.bf16.msra.mxu0 0
    %3057 = vmatprep.subr.bf16.mxu0 0
    %3058 = vmatpush1.bf16.msra.mxu0 0
    %3059 = vmatprep.subr.bf16.mxu0 0
    %3060 = vmatpush1.bf16.msra.mxu0 0
    %3061 = vmatprep.subr.bf16.mxu0 0
    %3062 = vmatpush1.bf16.msra.mxu0 0
    %3063 = vmatprep.mubr.bf16.mxu0 0
    %3064 = vmatmul.mubr.bf16.gmra.mrb[0].mxu0 %v2789
    %v3065 = vpop.f32.mrb[0].mxu0
    %v3066 = vadd.f32 0.0, %v3065
    %v3067 = vpop.f32.mrb[0].mxu0
    %v3068 = vadd.f32 0.0, %v3067
    %v3069 = vpop.f32.mrb[0].mxu0
    %v3070 = vpop.f32.mrb[0].mxu0
    %3071 = vdwg.mxu0
    %v3072 = vadd.f32 %v2986, %v3025
    %v3073 = vadd.f32 %v2987, %v3027
    %v3074 = vadd.f32 %v2988, %v3066
    %v3075 = vadd.f32 %v2989, %v3068
    %v3076 = vxor.u32 %v3072, 2147483648
    %v3077 = vmul.f32 %v3076, 1.442695
    %v3078 = vpow.pop %v3077
    %v3079 = vadd.f32 %v3078, 1.0
    %v3080 = vrcp.pop %v3079
    %v3081 = vmul.f32 1.0, %v3080
    %v3082 = vxor.u32 %v3073, 2147483648
    %v3083 = vmul.f32 %v3082, 1.442695
    %v3084 = vpow.pop %v3083
    %v3085 = vadd.f32 %v3084, 1.0
    %v3086 = vrcp.pop %v3085
    %v3087 = vmul.f32 1.0, %v3086
    %v3088 = vtanh.pop %v3074
    %v3089 = vxor.u32 %v3075, 2147483648
    %v3090 = vmul.f32 %v3089, 1.442695
    %v3091 = vpow.pop %v3090
    %v3092 = vadd.f32 %v3091, 1.0
    %v3093 = vrcp.pop %v3092
    %v3094 = vmul.f32 1.0, %v3093
    %v3095 = vmul.f32 %v3087, %v2786
    %v3096 = vmul.f32 %v3081, %v3088
    %v3097 = vadd.f32 %v3095, %v3096
    %v3098 = vtanh.pop %v3097
    %v3099 = vmul.f32 %v3094, %v3098
    %v3100 = vpack.c.bf16 %v3099, %v3099
    %v3101 = vpack.c.bf16 %v2982, %v2982
    %3102 = vmatprep.subr.bf16.mxu0 %v1013
    %3103 = vmatpush1.bf16.msra.mxu0 %v1012
    %3104 = vmatprep.subr.bf16.mxu0 %v1017
    %3105 = vmatpush1.bf16.msra.mxu0 %v1016
    %3106 = vmatprep.subr.bf16.mxu0 %v1021
    %3107 = vmatpush1.bf16.msra.mxu0 %v1020
    %3108 = vmatprep.subr.bf16.mxu0 %v1025
    %3109 = vmatpush1.bf16.msra.mxu0 %v1024
    %3110 = vmatprep.subr.bf16.mxu0 %v1029
    %3111 = vmatpush1.bf16.msra.mxu0 %v1028
    %3112 = vmatprep.subr.bf16.mxu0 %v1033
    %3113 = vmatpush1.bf16.msra.mxu0 %v1032
    %3114 = vmatprep.subr.bf16.mxu0 %v1037
    %3115 = vmatpush1.bf16.msra.mxu0 %v1036
    %3116 = vmatprep.subr.bf16.mxu0 %v1041
    %3117 = vmatpush1.bf16.msra.mxu0 %v1040
    %3118 = vmatprep.subr.bf16.mxu0 0
    %3119 = vmatpush1.bf16.msra.mxu0 0
    %3120 = vmatprep.subr.bf16.mxu0 0
    %3121 = vmatpush1.bf16.msra.mxu0 0
    %3122 = vmatprep.subr.bf16.mxu0 0
    %3123 = vmatpush1.bf16.msra.mxu0 0
    %3124 = vmatprep.subr.bf16.mxu0 0
    %3125 = vmatpush1.bf16.msra.mxu0 0
    %3126 = vmatprep.subr.bf16.mxu0 0
    %3127 = vmatpush1.bf16.msra.mxu0 0
    %3128 = vmatprep.subr.bf16.mxu0 0
    %3129 = vmatpush1.bf16.msra.mxu0 0
    %3130 = vmatprep.subr.bf16.mxu0 0
    %3131 = vmatpush1.bf16.msra.mxu0 0
    %3132 = vmatprep.subr.bf16.mxu0 0
    %3133 = vmatpush1.bf16.msra.mxu0 0
    %3134 = vmatprep.mubr.bf16.mxu0 0
    %3135 = vmatmul.mubr.bf16.gmra.mrb[0].mxu0 %v3101
    %v3136 = vpop.f32.mrb[0].mxu0
    %v3137 = vadd.f32 0.0, %v3136
    %v3138 = vpop.f32.mrb[0].mxu0
    %v3139 = vadd.f32 0.0, %v3138
    %v3140 = vpop.f32.mrb[0].mxu0
    %v3141 = vpop.f32.mrb[0].mxu0
    %3142 = vdwg.mxu0
    %3143 = vmatprep.subr.bf16.mxu0 %v1015
    %3144 = vmatpush1.bf16.msra.mxu0 %v1014
    %3145 = vmatprep.subr.bf16.mxu0 %v1019
    %3146 = vmatpush1.bf16.msra.mxu0 %v1018
    %3147 = vmatprep.subr.bf16.mxu0 %v1023
    %3148 = vmatpush1.bf16.msra.mxu0 %v1022
    %3149 = vmatprep.subr.bf16.mxu0 %v1027
    %3150 = vmatpush1.bf16.msra.mxu0 %v1026
    %3151 = vmatprep.subr.bf16.mxu0 %v1031
    %3152 = vmatpush1.bf16.msra.mxu0 %v1030
    %3153 = vmatprep.subr.bf16.mxu0 %v1035
    %3154 = vmatpush1.bf16.msra.mxu0 %v1034
    %3155 = vmatprep.subr.bf16.mxu0 %v1039
    %3156 = vmatpush1.bf16.msra.mxu0 %v1038
    %3157 = vmatprep.subr.bf16.mxu0 %v1043
    %3158 = vmatpush1.bf16.msra.mxu0 %v1042
    %3159 = vmatprep.subr.bf16.mxu0 0
    %3160 = vmatpush1.bf16.msra.mxu0 0
    %3161 = vmatprep.subr.bf16.mxu0 0
    %3162 = vmatpush1.bf16.msra.mxu0 0
    %3163 = vmatprep.subr.bf16.mxu0 0
    %3164 = vmatpush1.bf16.msra.mxu0 0
    %3165 = vmatprep.subr.bf16.mxu0 0
    %3166 = vmatpush1.bf16.msra.mxu0 0
    %3167 = vmatprep.subr.bf16.mxu0 0
    %3168 = vmatpush1.bf16.msra.mxu0 0
    %3169 = vmatprep.subr.bf16.mxu0 0
    %3170 = vmatpush1.bf16.msra.mxu0 0
    %3171 = vmatprep.subr.bf16.mxu0 0
    %3172 = vmatpush1.bf16.msra.mxu0 0
    %3173 = vmatprep.subr.bf16.mxu0 0
    %3174 = vmatpush1.bf16.msra.mxu0 0
    %3175 = vmatprep.mubr.bf16.mxu0 0
    %3176 = vmatmul.mubr.bf16.gmra.mrb[0].mxu0 %v3101
    %v3177 = vpop.f32.mrb[0].mxu0
    %v3178 = vadd.f32 0.0, %v3177
    %v3179 = vpop.f32.mrb[0].mxu0
    %v3180 = vadd.f32 0.0, %v3179
    %v3181 = vpop.f32.mrb[0].mxu0
    %v3182 = vpop.f32.mrb[0].mxu0
    %3183 = vdwg.mxu0
    %3184 = vmatprep.subr.bf16.mxu0 %v1255
    %3185 = vmatpush1.bf16.msra.mxu0 %v1254
    %3186 = vmatprep.subr.bf16.mxu0 %v1259
    %3187 = vmatpush1.bf16.msra.mxu0 %v1258
    %3188 = vmatprep.subr.bf16.mxu0 %v1263
    %3189 = vmatpush1.bf16.msra.mxu0 %v1262
    %3190 = vmatprep.subr.bf16.mxu0 %v1267
    %3191 = vmatpush1.bf16.msra.mxu0 %v1266
    %3192 = vmatprep.subr.bf16.mxu0 %v1271
    %3193 = vmatpush1.bf16.msra.mxu0 %v1270
    %3194 = vmatprep.subr.bf16.mxu0 %v1275
    %3195 = vmatpush1.bf16.msra.mxu0 %v1274
    %3196 = vmatprep.subr.bf16.mxu0 %v1279
    %3197 = vmatpush1.bf16.msra.mxu0 %v1278
    %3198 = vmatprep.subr.bf16.mxu0 %v1283
    %3199 = vmatpush1.bf16.msra.mxu0 %v1282
    %3200 = vmatprep.subr.bf16.mxu0 0
    %3201 = vmatpush1.bf16.msra.mxu0 0
    %3202 = vmatprep.subr.bf16.mxu0 0
    %3203 = vmatpush1.bf16.msra.mxu0 0
    %3204 = vmatprep.subr.bf16.mxu0 0
    %3205 = vmatpush1.bf16.msra.mxu0 0
    %3206 = vmatprep.subr.bf16.mxu0 0
    %3207 = vmatpush1.bf16.msra.mxu0 0
    %3208 = vmatprep.subr.bf16.mxu0 0
    %3209 = vmatpush1.bf16.msra.mxu0 0
    %3210 = vmatprep.subr.bf16.mxu0 0
    %3211 = vmatpush1.bf16.msra.mxu0 0
    %3212 = vmatprep.subr.bf16.mxu0 0
    %3213 = vmatpush1.bf16.msra.mxu0 0
    %3214 = vmatprep.subr.bf16.mxu0 0
    %3215 = vmatpush1.bf16.msra.mxu0 0
    %3216 = vmatprep.mubr.bf16.mxu0 0
    %3217 = vmatmul.mubr.bf16.gmra.mrb[0].mxu0 %v3100
    %v3218 = vpop.f32.mrb[0].mxu0
    %v3219 = vadd.f32 %v3137, %v3218
    %v3220 = vpop.f32.mrb[0].mxu0
    %v3221 = vadd.f32 %v3139, %v3220
    %v3222 = vpop.f32.mrb[0].mxu0
    %v3223 = vpop.f32.mrb[0].mxu0
    %3224 = vdwg.mxu0
    %3225 = vmatprep.subr.bf16.mxu0 %v1257
    %3226 = vmatpush1.bf16.msra.mxu0 %v1256
    %3227 = vmatprep.subr.bf16.mxu0 %v1261
    %3228 = vmatpush1.bf16.msra.mxu0 %v1260
    %3229 = vmatprep.subr.bf16.mxu0 %v1265
    %3230 = vmatpush1.bf16.msra.mxu0 %v1264
    %3231 = vmatprep.subr.bf16.mxu0 %v1269
    %3232 = vmatpush1.bf16.msra.mxu0 %v1268
    %3233 = vmatprep.subr.bf16.mxu0 %v1273
    %3234 = vmatpush1.bf16.msra.mxu0 %v1272
    %3235 = vmatprep.subr.bf16.mxu0 %v1277
    %3236 = vmatpush1.bf16.msra.mxu0 %v1276
    %3237 = vmatprep.subr.bf16.mxu0 %v1281
    %3238 = vmatpush1.bf16.msra.mxu0 %v1280
    %3239 = vmatprep.subr.bf16.mxu0 %v1285
    %3240 = vmatpush1.bf16.msra.mxu0 %v1284
    %3241 = vmatprep.subr.bf16.mxu0 0
    %3242 = vmatpush1.bf16.msra.mxu0 0
    %3243 = vmatprep.subr.bf16.mxu0 0
    %3244 = vmatpush1.bf16.msra.mxu0 0
    %3245 = vmatprep.subr.bf16.mxu0 0
    %3246 = vmatpush1.bf16.msra.mxu0 0
    %3247 = vmatprep.subr.bf16.mxu0 0
    %3248 = vmatpush1.bf16.msra.mxu0 0
    %3249 = vmatprep.subr.bf16.mxu0 0
    %3250 = vmatpush1.bf16.msra.mxu0 0
    %3251 = vmatprep.subr.bf16.mxu0 0
    %3252 = vmatpush1.bf16.msra.mxu0 0
    %3253 = vmatprep.subr.bf16.mxu0 0
    %3254 = vmatpush1.bf16.msra.mxu0 0
    %3255 = vmatprep.subr.bf16.mxu0 0
    %3256 = vmatpush1.bf16.msra.mxu0 0
    %3257 = vmatprep.mubr.bf16.mxu0 0
    %3258 = vmatmul.mubr.bf16.gmra.mrb[0].mxu0 %v3100
    %v3259 = vpop.f32.mrb[0].mxu0
    %v3260 = vadd.f32 %v3178, %v3259
    %v3261 = vpop.f32.mrb[0].mxu0
    %v3262 = vadd.f32 %v3180, %v3261
    %v3263 = vpop.f32.mrb[0].mxu0
    %v3264 = vpop.f32.mrb[0].mxu0
    %3265 = vdwg.mxu0
    %v3266 = vadd.f32 %v3219, %v525
    %v3267 = vadd.f32 %v3221, %v529
    %v3268 = vadd.f32 %v3260, %v533
    %v3269 = vadd.f32 %v3262, %v537
    %v3270 = vxor.u32 %v3266, 2147483648
    %v3271 = vmul.f32 %v3270, 1.442695
    %v3272 = vpow.pop %v3271
    %v3273 = vadd.f32 %v3272, 1.0
    %v3274 = vrcp.pop %v3273
    %v3275 = vmul.f32 1.0, %v3274
    %v3276 = vxor.u32 %v3267, 2147483648
    %v3277 = vmul.f32 %v3276, 1.442695
    %v3278 = vpow.pop %v3277
    %v3279 = vadd.f32 %v3278, 1.0
    %v3280 = vrcp.pop %v3279
    %v3281 = vmul.f32 1.0, %v3280
    %v3282 = vtanh.pop %v3268
    %v3283 = vxor.u32 %v3269, 2147483648
    %v3284 = vmul.f32 %v3283, 1.442695
    %v3285 = vpow.pop %v3284
    %v3286 = vadd.f32 %v3285, 1.0
    %v3287 = vrcp.pop %v3286
    %v3288 = vmul.f32 1.0, %v3287
    %v3289 = vmul.f32 %v3281, %v2980
    %v3290 = vmul.f32 %v3275, %v3282
    %v3291 = vadd.f32 %v3289, %v3290
    %v3292 = vtanh.pop %v3291
    %v3293 = vmul.f32 %v3288, %v3292
    %s3294 = smul.u32 7, 4
    %s3295 = smul.addr %s3294, 8
    %s3296 = scalar_lea.vmem [#allocation2], %s3295
    %v3297 = vld [vmem:[%s3296] sm:$0xff]
    %v3298 = vld [vmem:[%s3296 + $0x8] sm:$0xff]
    %v3299 = vld [vmem:[%s3296 + $0x10] sm:$0xff]
    %v3300 = vld [vmem:[%s3296 + $0x18] sm:$0xff]
    %3301 = vmatprep.subr.bf16.mxu0 %v678
    %3302 = vmatpush1.bf16.msra.mxu0 %v677
    %3303 = vmatprep.subr.bf16.mxu0 %v682
    %3304 = vmatpush1.bf16.msra.mxu0 %v681
    %3305 = vmatprep.subr.bf16.mxu0 %v686
    %3306 = vmatpush1.bf16.msra.mxu0 %v685
    %3307 = vmatprep.subr.bf16.mxu0 %v690
    %3308 = vmatpush1.bf16.msra.mxu0 %v689
    %3309 = vmatprep.subr.bf16.mxu0 %v694
    %3310 = vmatpush1.bf16.msra.mxu0 %v693
    %3311 = vmatprep.subr.bf16.mxu0 %v698
    %3312 = vmatpush1.bf16.msra.mxu0 %v697
    %3313 = vmatprep.subr.bf16.mxu0 %v702
    %3314 = vmatpush1.bf16.msra.mxu0 %v701
    %3315 = vmatprep.subr.bf16.mxu0 %v706
    %3316 = vmatpush1.bf16.msra.mxu0 %v705
    %3317 = vmatprep.subr.bf16.mxu0 0
    %3318 = vmatpush1.bf16.msra.mxu0 0
    %3319 = vmatprep.subr.bf16.mxu0 0
    %3320 = vmatpush1.bf16.msra.mxu0 0
    %3321 = vmatprep.subr.bf16.mxu0 0
    %3322 = vmatpush1.bf16.msra.mxu0 0
    %3323 = vmatprep.subr.bf16.mxu0 0
    %3324 = vmatpush1.bf16.msra.mxu0 0
    %3325 = vmatprep.subr.bf16.mxu0 0
    %3326 = vmatpush1.bf16.msra.mxu0 0
    %3327 = vmatprep.subr.bf16.mxu0 0
    %3328 = vmatpush1.bf16.msra.mxu0 0
    %3329 = vmatprep.subr.bf16.mxu0 0
    %3330 = vmatpush1.bf16.msra.mxu0 0
    %3331 = vmatprep.subr.bf16.mxu0 0
    %3332 = vmatpush1.bf16.msra.mxu0 0
    %3333 = vmatprep.mubr.bf16.mxu0 0
    %3334 = vmatmul.mubr.bf16.gmra.mrb[0].mxu0 %v3100
    %v3335 = vpop.f32.mrb[0].mxu0
    %v3336 = vadd.f32 0.0, %v3335
    %v3337 = vpop.f32.mrb[0].mxu0
    %v3338 = vadd.f32 0.0, %v3337
    %v3339 = vpop.f32.mrb[0].mxu0
    %v3340 = vpop.f32.mrb[0].mxu0
    %3341 = vdwg.mxu0
    %3342 = vmatprep.subr.bf16.mxu0 %v680
    %3343 = vmatpush1.bf16.msra.mxu0 %v679
    %3344 = vmatprep.subr.bf16.mxu0 %v684
    %3345 = vmatpush1.bf16.msra.mxu0 %v683
    %3346 = vmatprep.subr.bf16.mxu0 %v688
    %3347 = vmatpush1.bf16.msra.mxu0 %v687
    %3348 = vmatprep.subr.bf16.mxu0 %v692
    %3349 = vmatpush1.bf16.msra.mxu0 %v691
    %3350 = vmatprep.subr.bf16.mxu0 %v696
    %3351 = vmatpush1.bf16.msra.mxu0 %v695
    %3352 = vmatprep.subr.bf16.mxu0 %v700
    %3353 = vmatpush1.bf16.msra.mxu0 %v699
    %3354 = vmatprep.subr.bf16.mxu0 %v704
    %3355 = vmatpush1.bf16.msra.mxu0 %v703
    %3356 = vmatprep.subr.bf16.mxu0 %v708
    %3357 = vmatpush1.bf16.msra.mxu0 %v707
    %3358 = vmatprep.subr.bf16.mxu0 0
    %3359 = vmatpush1.bf16.msra.mxu0 0
    %3360 = vmatprep.subr.bf16.mxu0 0
    %3361 = vmatpush1.bf16.msra.mxu0 0
    %3362 = vmatprep.subr.bf16.mxu0 0
    %3363 = vmatpush1.bf16.msra.mxu0 0
    %3364 = vmatprep.subr.bf16.mxu0 0
    %3365 = vmatpush1.bf16.msra.mxu0 0
    %3366 = vmatprep.subr.bf16.mxu0 0
    %3367 = vmatpush1.bf16.msra.mxu0 0
    %3368 = vmatprep.subr.bf16.mxu0 0
    %3369 = vmatpush1.bf16.msra.mxu0 0
    %3370 = vmatprep.subr.bf16.mxu0 0
    %3371 = vmatpush1.bf16.msra.mxu0 0
    %3372 = vmatprep.subr.bf16.mxu0 0
    %3373 = vmatpush1.bf16.msra.mxu0 0
    %3374 = vmatprep.mubr.bf16.mxu0 0
    %3375 = vmatmul.mubr.bf16.gmra.mrb[0].mxu0 %v3100
    %v3376 = vpop.f32.mrb[0].mxu0
    %v3377 = vadd.f32 0.0, %v3376
    %v3378 = vpop.f32.mrb[0].mxu0
    %v3379 = vadd.f32 0.0, %v3378
    %v3380 = vpop.f32.mrb[0].mxu0
    %v3381 = vpop.f32.mrb[0].mxu0
    %3382 = vdwg.mxu0
    %v3383 = vadd.f32 %v3297, %v3336
    %v3384 = vadd.f32 %v3298, %v3338
    %v3385 = vadd.f32 %v3299, %v3377
    %v3386 = vadd.f32 %v3300, %v3379
    %v3387 = vxor.u32 %v3383, 2147483648
    %v3388 = vmul.f32 %v3387, 1.442695
    %v3389 = vpow.pop %v3388
    %v3390 = vadd.f32 %v3389, 1.0
    %v3391 = vrcp.pop %v3390
    %v3392 = vmul.f32 1.0, %v3391
    %v3393 = vxor.u32 %v3384, 2147483648
    %v3394 = vmul.f32 %v3393, 1.442695
    %v3395 = vpow.pop %v3394
    %v3396 = vadd.f32 %v3395, 1.0
    %v3397 = vrcp.pop %v3396
    %v3398 = vmul.f32 1.0, %v3397
    %v3399 = vtanh.pop %v3385
    %v3400 = vxor.u32 %v3386, 2147483648
    %v3401 = vmul.f32 %v3400, 1.442695
    %v3402 = vpow.pop %v3401
    %v3403 = vadd.f32 %v3402, 1.0
    %v3404 = vrcp.pop %v3403
    %v3405 = vmul.f32 1.0, %v3404
    %v3406 = vmul.f32 %v3398, %v3097
    %v3407 = vmul.f32 %v3392, %v3399
    %v3408 = vadd.f32 %v3406, %v3407
    %v3409 = vtanh.pop %v3408
    %v3410 = vmul.f32 %v3405, %v3409
    %v3411 = vpack.c.bf16 %v3410, %v3410
    %v3412 = vpack.c.bf16 %v3293, %v3293
    %3413 = vmatprep.subr.bf16.mxu0 %v1013
    %3414 = vmatpush1.bf16.msra.mxu0 %v1012
    %3415 = vmatprep.subr.bf16.mxu0 %v1017
    %3416 = vmatpush1.bf16.msra.mxu0 %v1016
    %3417 = vmatprep.subr.bf16.mxu0 %v1021
    %3418 = vmatpush1.bf16.msra.mxu0 %v1020
    %3419 = vmatprep.subr.bf16.mxu0 %v1025
    %3420 = vmatpush1.bf16.msra.mxu0 %v1024
    %3421 = vmatprep.subr.bf16.mxu0 %v1029
    %3422 = vmatpush1.bf16.msra.mxu0 %v1028
    %3423 = vmatprep.subr.bf16.mxu0 %v1033
    %3424 = vmatpush1.bf16.msra.mxu0 %v1032
    %3425 = vmatprep.subr.bf16.mxu0 %v1037
    %3426 = vmatpush1.bf16.msra.mxu0 %v1036
    %3427 = vmatprep.subr.bf16.mxu0 %v1041
    %3428 = vmatpush1.bf16.msra.mxu0 %v1040
    %3429 = vmatprep.subr.bf16.mxu0 0
    %3430 = vmatpush1.bf16.msra.mxu0 0
    %3431 = vmatprep.subr.bf16.mxu0 0
    %3432 = vmatpush1.bf16.msra.mxu0 0
    %3433 = vmatprep.subr.bf16.mxu0 0
    %3434 = vmatpush1.bf16.msra.mxu0 0
    %3435 = vmatprep.subr.bf16.mxu0 0
    %3436 = vmatpush1.bf16.msra.mxu0 0
    %3437 = vmatprep.subr.bf16.mxu0 0
    %3438 = vmatpush1.bf16.msra.mxu0 0
    %3439 = vmatprep.subr.bf16.mxu0 0
    %3440 = vmatpush1.bf16.msra.mxu0 0
    %3441 = vmatprep.subr.bf16.mxu0 0
    %3442 = vmatpush1.bf16.msra.mxu0 0
    %3443 = vmatprep.subr.bf16.mxu0 0
    %3444 = vmatpush1.bf16.msra.mxu0 0
    %3445 = vmatprep.mubr.bf16.mxu0 0
    %3446 = vmatmul.mubr.bf16.gmra.mrb[0].mxu0 %v3412
    %v3447 = vpop.f32.mrb[0].mxu0
    %v3448 = vadd.f32 0.0, %v3447
    %v3449 = vpop.f32.mrb[0].mxu0
    %v3450 = vadd.f32 0.0, %v3449
    %v3451 = vpop.f32.mrb[0].mxu0
    %v3452 = vpop.f32.mrb[0].mxu0
    %3453 = vdwg.mxu0
    %3454 = vmatprep.subr.bf16.mxu0 %v1015
    %3455 = vmatpush1.bf16.msra.mxu0 %v1014
    %3456 = vmatprep.subr.bf16.mxu0 %v1019
    %3457 = vmatpush1.bf16.msra.mxu0 %v1018
    %3458 = vmatprep.subr.bf16.mxu0 %v1023
    %3459 = vmatpush1.bf16.msra.mxu0 %v1022
    %3460 = vmatprep.subr.bf16.mxu0 %v1027
    %3461 = vmatpush1.bf16.msra.mxu0 %v1026
    %3462 = vmatprep.subr.bf16.mxu0 %v1031
    %3463 = vmatpush1.bf16.msra.mxu0 %v1030
    %3464 = vmatprep.subr.bf16.mxu0 %v1035
    %3465 = vmatpush1.bf16.msra.mxu0 %v1034
    %3466 = vmatprep.subr.bf16.mxu0 %v1039
    %3467 = vmatpush1.bf16.msra.mxu0 %v1038
    %3468 = vmatprep.subr.bf16.mxu0 %v1043
    %3469 = vmatpush1.bf16.msra.mxu0 %v1042
    %3470 = vmatprep.subr.bf16.mxu0 0
    %3471 = vmatpush1.bf16.msra.mxu0 0
    %3472 = vmatprep.subr.bf16.mxu0 0
    %3473 = vmatpush1.bf16.msra.mxu0 0
    %3474 = vmatprep.subr.bf16.mxu0 0
    %3475 = vmatpush1.bf16.msra.mxu0 0
    %3476 = vmatprep.subr.bf16.mxu0 0
    %3477 = vmatpush1.bf16.msra.mxu0 0
    %3478 = vmatprep.subr.bf16.mxu0 0
    %3479 = vmatpush1.bf16.msra.mxu0 0
    %3480 = vmatprep.subr.bf16.mxu0 0
    %3481 = vmatpush1.bf16.msra.mxu0 0
    %3482 = vmatprep.subr.bf16.mxu0 0
    %3483 = vmatpush1.bf16.msra.mxu0 0
    %3484 = vmatprep.subr.bf16.mxu0 0
    %3485 = vmatpush1.bf16.msra.mxu0 0
    %3486 = vmatprep.mubr.bf16.mxu0 0
    %3487 = vmatmul.mubr.bf16.gmra.mrb[0].mxu0 %v3412
    %v3488 = vpop.f32.mrb[0].mxu0
    %v3489 = vadd.f32 0.0, %v3488
    %v3490 = vpop.f32.mrb[0].mxu0
    %v3491 = vadd.f32 0.0, %v3490
    %v3492 = vpop.f32.mrb[0].mxu0
    %v3493 = vpop.f32.mrb[0].mxu0
    %3494 = vdwg.mxu0
    %3495 = vmatprep.subr.bf16.mxu0 %v1255
    %3496 = vmatpush1.bf16.msra.mxu0 %v1254
    %3497 = vmatprep.subr.bf16.mxu0 %v1259
    %3498 = vmatpush1.bf16.msra.mxu0 %v1258
    %3499 = vmatprep.subr.bf16.mxu0 %v1263
    %3500 = vmatpush1.bf16.msra.mxu0 %v1262
    %3501 = vmatprep.subr.bf16.mxu0 %v1267
    %3502 = vmatpush1.bf16.msra.mxu0 %v1266
    %3503 = vmatprep.subr.bf16.mxu0 %v1271
    %3504 = vmatpush1.bf16.msra.mxu0 %v1270
    %3505 = vmatprep.subr.bf16.mxu0 %v1275
    %3506 = vmatpush1.bf16.msra.mxu0 %v1274
    %3507 = vmatprep.subr.bf16.mxu0 %v1279
    %3508 = vmatpush1.bf16.msra.mxu0 %v1278
    %3509 = vmatprep.subr.bf16.mxu0 %v1283
    %3510 = vmatpush1.bf16.msra.mxu0 %v1282
    %3511 = vmatprep.subr.bf16.mxu0 0
    %3512 = vmatpush1.bf16.msra.mxu0 0
    %3513 = vmatprep.subr.bf16.mxu0 0
    %3514 = vmatpush1.bf16.msra.mxu0 0
    %3515 = vmatprep.subr.bf16.mxu0 0
    %3516 = vmatpush1.bf16.msra.mxu0 0
    %3517 = vmatprep.subr.bf16.mxu0 0
    %3518 = vmatpush1.bf16.msra.mxu0 0
    %3519 = vmatprep.subr.bf16.mxu0 0
    %3520 = vmatpush1.bf16.msra.mxu0 0
    %3521 = vmatprep.subr.bf16.mxu0 0
    %3522 = vmatpush1.bf16.msra.mxu0 0
    %3523 = vmatprep.subr.bf16.mxu0 0
    %3524 = vmatpush1.bf16.msra.mxu0 0
    %3525 = vmatprep.subr.bf16.mxu0 0
    %3526 = vmatpush1.bf16.msra.mxu0 0
    %3527 = vmatprep.mubr.bf16.mxu0 0
    %3528 = vmatmul.mubr.bf16.gmra.mrb[0].mxu0 %v3411
    %v3529 = vpop.f32.mrb[0].mxu0
    %v3530 = vadd.f32 %v3448, %v3529
    %v3531 = vpop.f32.mrb[0].mxu0
    %v3532 = vadd.f32 %v3450, %v3531
    %v3533 = vpop.f32.mrb[0].mxu0
    %v3534 = vpop.f32.mrb[0].mxu0
    %3535 = vdwg.mxu0
    %3536 = vmatprep.subr.bf16.mxu0 %v1257
    %3537 = vmatpush1.bf16.msra.mxu0 %v1256
    %3538 = vmatprep.subr.bf16.mxu0 %v1261
    %3539 = vmatpush1.bf16.msra.mxu0 %v1260
    %3540 = vmatprep.subr.bf16.mxu0 %v1265
    %3541 = vmatpush1.bf16.msra.mxu0 %v1264
    %3542 = vmatprep.subr.bf16.mxu0 %v1269
    %3543 = vmatpush1.bf16.msra.mxu0 %v1268
    %3544 = vmatprep.subr.bf16.mxu0 %v1273
    %3545 = vmatpush1.bf16.msra.mxu0 %v1272
    %3546 = vmatprep.subr.bf16.mxu0 %v1277
    %3547 = vmatpush1.bf16.msra.mxu0 %v1276
    %3548 = vmatprep.subr.bf16.mxu0 %v1281
    %3549 = vmatpush1.bf16.msra.mxu0 %v1280
    %3550 = vmatprep.subr.bf16.mxu0 %v1285
    %3551 = vmatpush1.bf16.msra.mxu0 %v1284
    %3552 = vmatprep.subr.bf16.mxu0 0
    %3553 = vmatpush1.bf16.msra.mxu0 0
    %3554 = vmatprep.subr.bf16.mxu0 0
    %3555 = vmatpush1.bf16.msra.mxu0 0
    %3556 = vmatprep.subr.bf16.mxu0 0
    %3557 = vmatpush1.bf16.msra.mxu0 0
    %3558 = vmatprep.subr.bf16.mxu0 0
    %3559 = vmatpush1.bf16.msra.mxu0 0
    %3560 = vmatprep.subr.bf16.mxu0 0
    %3561 = vmatpush1.bf16.msra.mxu0 0
    %3562 = vmatprep.subr.bf16.mxu0 0
    %3563 = vmatpush1.bf16.msra.mxu0 0
    %3564 = vmatprep.subr.bf16.mxu0 0
    %3565 = vmatpush1.bf16.msra.mxu0 0
    %3566 = vmatprep.subr.bf16.mxu0 0
    %3567 = vmatpush1.bf16.msra.mxu0 0
    %3568 = vmatprep.mubr.bf16.mxu0 0
    %3569 = vmatmul.mubr.bf16.gmra.mrb[0].mxu0 %v3411
    %v3570 = vpop.f32.mrb[0].mxu0
    %v3571 = vadd.f32 %v3489, %v3570
    %v3572 = vpop.f32.mrb[0].mxu0
    %v3573 = vadd.f32 %v3491, %v3572
    %v3574 = vpop.f32.mrb[0].mxu0
    %v3575 = vpop.f32.mrb[0].mxu0
    %3576 = vdwg.mxu0
    %v3577 = vadd.f32 %v3530, %v525
    %v3578 = vadd.f32 %v3532, %v529
    %v3579 = vadd.f32 %v3571, %v533
    %v3580 = vadd.f32 %v3573, %v537
    %v3581 = vxor.u32 %v3577, 2147483648
    %v3582 = vmul.f32 %v3581, 1.442695
    %v3583 = vpow.pop %v3582
    %v3584 = vadd.f32 %v3583, 1.0
    %v3585 = vrcp.pop %v3584
    %v3586 = vmul.f32 1.0, %v3585
    %v3587 = vxor.u32 %v3578, 2147483648
    %v3588 = vmul.f32 %v3587, 1.442695
    %v3589 = vpow.pop %v3588
    %v3590 = vadd.f32 %v3589, 1.0
    %v3591 = vrcp.pop %v3590
    %v3592 = vmul.f32 1.0, %v3591
    %v3593 = vtanh.pop %v3579
    %v3594 = vxor.u32 %v3580, 2147483648
    %v3595 = vmul.f32 %v3594, 1.442695
    %v3596 = vpow.pop %v3595
    %v3597 = vadd.f32 %v3596, 1.0
    %v3598 = vrcp.pop %v3597
    %v3599 = vmul.f32 1.0, %v3598
    %v3600 = vmul.f32 %v3592, %v3291
    %v3601 = vmul.f32 %v3586, %v3593
    %v3602 = vadd.f32 %v3600, %v3601
    %v3603 = vtanh.pop %v3602
    %v3604 = vmul.f32 %v3599, %v3603
    %v3605 = vpack.c.bf16 %v3604, %v3604
    %3606 = vst [vmem:[#allocation12] sm:$0xf] %v3605
    // Predicated region
    $region50: #{tpu_custom_call.1} parent=1 // pred_check
      _
    $region51: #{tpu_custom_call.1} parent=1 // pred_check_branch
      %3608 = sbr.rel (0) target = $region53
    $region52: #{tpu_custom_call.1} parent=1 // pred_region
      %s3610 = ssub.s32 64, 64
      %3611 = vsyncadd [#allocation5], %s3610
      %s3613 = sshll.u32 [#allocation12], 4
      %s3614 = int_to_ptr.vmem [resolvable:$true] %s3613
      %3616 = dma.vmem_to_hbm [thread:$0]  %s3614, 64, %s7, [#allocation5]
    $region53: #{tpu_custom_call.1} parent=1 // pred_fallthru
      _
    // Predicated region
    $region54: #{tpu_custom_call.1} parent=1 // pred_check
      _
    $region55: #{tpu_custom_call.1} parent=1 // pred_check_branch
      %3618 = sbr.rel (0) target = $region57
    $region56: #{tpu_custom_call.1} parent=1 // pred_region
      %3619 = dma.done [#allocation5], 64
    $region57: #{tpu_custom_call.1} parent=1 // pred_fallthru
      _
    %3620 = vsyncpa [#allocation4], 1
    %3621 = vsyncpa [#allocation7], 1
    %3622 = vsyncpa [#allocation10], 1
    %3623 = vsyncpa [#allocation5], 1

</llo_original>
